<compile_context>
chip_gen: v5e
topology: v5e:2x2
jax: 0.10.0
libtpu: 0.0.40
codegen_flags: <defaults>
</compile_context>

<pallas_src>
import jax
import jax.numpy as jnp
from jax import lax
from jax.experimental import pallas as pl
from jax.experimental.pallas import tpu as pltpu

BN_EPS = 1e-5

_TM = 512                       # row tile for the large late-layer GEMMs
_SINGLE_BLOCK_MAX_M = 1024      # below this, one block (per-step overhead not worth it)
_VMEM_LIMIT = 48 * 1024 * 1024  # > v5e 16MiB default, < v7x 64MiB physical


# --------------------------- small helpers ----------------------------------

def _round_up(x, m):
    return (x + m - 1) // m * m


def _pad_axis(x, axis, target):
    if x.shape[axis] == target:
        return x
    pads = [(0, 0)] * x.ndim
    pads[axis] = (0, target - x.shape[axis])
    return jnp.pad(x, pads)


def _tiling(m):
    """Pick (tile_m, padded_m, grid_m) for an M-row GEMM."""
    if m <= _SINGLE_BLOCK_MAX_M:
        tm = _round_up(m, 16)          # single block; 16 keeps bf16 sublanes tidy
    else:
        tm = _TM
    mp = _round_up(m, tm)
    return tm, mp, mp // tm


# --------------------------- Pallas kernels ---------------------------------

def _gemm_bias_kernel(p_ref, w_ref, b_ref, o_ref):
    acc = jnp.dot(p_ref[...], w_ref[...], preferred_element_type=jnp.float32)
    o_ref[...] = (acc + b_ref[...]).astype(o_ref.dtype)


def _gemm_bias_tanh_kernel(p_ref, w_ref, b_ref, o_ref):
    acc = jnp.dot(p_ref[...], w_ref[...], preferred_element_type=jnp.float32)
    o_ref[...] = jnp.tanh(acc + b_ref[...]).astype(o_ref.dtype)


def _gemm_stats_kernel(p_ref, w_ref, o_ref, sum_ref, sq_ref):
    # Pass 1 of the tiled BatchNorm: conv-as-GEMM tile plus per-tile column
    # sum / sum-of-squares (reduced across tiles in the JAX glue).  Writing
    # per-tile partials (instead of a resident accumulator) keeps the M grid
    # axis fully "parallel" for v7x's two TensorCores.
    acc = jnp.dot(p_ref[...], w_ref[...], preferred_element_type=jnp.float32)
    o_ref[...] = acc
    s1 = jnp.sum(acc, axis=0, keepdims=True)
    s2 = jnp.sum(acc * acc, axis=0, keepdims=True)
    sum_ref[...] = s1.reshape(1, 1, s1.shape[1])
    sq_ref[...] = s2.reshape(1, 1, s2.shape[1])


def _bn_relu_kernel(y_ref, sc_ref, sh_ref, o_ref):
    # Pass 2 of the tiled BatchNorm: y * scale + shift, then ReLU.
    # Output dtype follows o_ref (bf16: only feeds the next bf16 GEMM).
    o_ref[...] = jnp.maximum(y_ref[...] * sc_ref[...] + sh_ref[...],
                             0.0).astype(o_ref.dtype)


# --------------------------- pallas_call wrappers ----------------------------

def _compiler_params():
    return pltpu.CompilerParams(
        dimension_semantics=("parallel",),
        vmem_limit_bytes=_VMEM_LIMIT)


def _gemm_bias_act(p, w, b, *, tanh, out_dtype=jnp.float32):
    """(M,K) x (K,N) + bias [-> tanh], bf16 inputs / f32 accumulation."""
    m, k = p.shape
    n = w.shape[1]
    npad = _round_up(n, 128)
    tm, mp, gm = _tiling(m)
    p16 = _pad_axis(p, 0, mp).astype(jnp.bfloat16)
    w16 = _pad_axis(w, 1, npad).astype(jnp.bfloat16)
    b2 = _pad_axis(b.reshape(1, n).astype(jnp.float32), 1, npad)
    kernel = _gemm_bias_tanh_kernel if tanh else _gemm_bias_kernel
    out = pl.pallas_call(
        kernel,
        out_shape=jax.ShapeDtypeStruct((mp, npad), out_dtype),
        grid=(gm,),
        in_specs=[pl.BlockSpec((tm, k), lambda i: (i, 0)),
                  pl.BlockSpec((k, npad), lambda i: (0, 0)),
                  pl.BlockSpec((1, npad), lambda i: (0, 0))],
        out_specs=pl.BlockSpec((tm, npad), lambda i: (i, 0)),
        compiler_params=_compiler_params(),
    )(p16, w16, b2)
    return out[:m, :n]


def _gemm_stats(p, w):
    """Tiled GEMM that also returns per-column sum and sum-of-squares."""
    m, k = p.shape
    n = w.shape[1]
    npad = _round_up(n, 128)
    tm, mp, gm = _tiling(m)
    p16 = _pad_axis(p, 0, mp).astype(jnp.bfloat16)   # padded rows are zero
    w16 = _pad_axis(w, 1, npad).astype(jnp.bfloat16)
    y, tsum, tsq = pl.pallas_call(
        _gemm_stats_kernel,
        out_shape=(jax.ShapeDtypeStruct((mp, npad), jnp.float32),
                   jax.ShapeDtypeStruct((gm, 1, npad), jnp.float32),
                   jax.ShapeDtypeStruct((gm, 1, npad), jnp.float32)),
        grid=(gm,),
        in_specs=[pl.BlockSpec((tm, k), lambda i: (i, 0)),
                  pl.BlockSpec((k, npad), lambda i: (0, 0))],
        out_specs=(pl.BlockSpec((tm, npad), lambda i: (i, 0)),
                   pl.BlockSpec((1, 1, npad), lambda i: (i, 0, 0)),
                   pl.BlockSpec((1, 1, npad), lambda i: (i, 0, 0))),
        compiler_params=_compiler_params(),
    )(p16, w16)
    col_sum = jnp.sum(tsum, axis=(0, 1))[:n]   # tiny cross-tile reduction
    col_sq = jnp.sum(tsq, axis=(0, 1))[:n]
    return y, col_sum, col_sq


def _bn_relu_apply(y, scale_row, shift_row):
    """Elementwise scale*x+shift -> ReLU, tiled over rows.  bf16 output (it
    only feeds the next layer's bf16 GEMM and is replicated 9x by im2col)."""
    mp, npad = y.shape
    tm, mp2, gm = _tiling(mp)
    assert mp2 == mp
    return pl.pallas_call(
        _bn_relu_kernel,
        out_shape=jax.ShapeDtypeStruct((mp, npad), jnp.bfloat16),
        grid=(gm,),
        in_specs=[pl.BlockSpec((tm, npad), lambda i: (i, 0)),
                  pl.BlockSpec((1, npad), lambda i: (0, 0)),
                  pl.BlockSpec((1, npad), lambda i: (0, 0))],
        out_specs=pl.BlockSpec((tm, npad), lambda i: (i, 0)),
        compiler_params=_compiler_params(),
    )(y, scale_row, shift_row)


# --------------------------- conv glue (plain JAX) ---------------------------

def _im2col3(x):
    """x: (B,H,W,C) NHWC, zero-pad 1 -> patches (B*H*W, 9*C), tap order (dy,dx,c)."""
    B, H, W, C = x.shape
    xp = jnp.pad(x, ((0, 0), (1, 1), (1, 1), (0, 0)))
    taps = [xp[:, dy:dy + H, dx:dx + W, :] for dy in range(3) for dx in range(3)]
    return jnp.concatenate(taps, axis=-1).reshape(B * H * W, 9 * C)


def _convT_as_subpixel_weight(w_t):
    """torch ConvTranspose2d(k=4,s=2,p=1) weight (Cin,Cout,4,4) -> (9*Cin, 4*Cout).

    Equivalent 3x3 stride-1 conv over the (pad=1) un-upsampled input whose
    4*Cout outputs are the (py,px) sub-pixel phases of the 2x upsampled result.
    Tap mapping: ky -> (dy=(ky+1)//2, phase=ky%2), weight value w_t[..,3-ky,3-kx].
    """
    Cin, Cout = w_t.shape[0], w_t.shape[1]
    w3 = jnp.zeros((3, 3, Cin, 2, 2, Cout), w_t.dtype)
    for ky in range(4):
        dy, py = (ky + 1) // 2, ky % 2
        for kx in range(4):
            dx, px = (kx + 1) // 2, kx % 2
            w3 = w3.at[dy, dx, :, py, px, :].set(w_t[:, :, 3 - ky, 3 - kx])
    return w3.reshape(9 * Cin, 4 * Cout)


def _convT_bn_relu(x, w_t, gamma, beta):
    """ConvTranspose2d(4,2,1) [bias dropped: cancels in BN] + BatchNorm2d(train) + ReLU."""
    B, H, W, Cin = x.shape
    Cout = w_t.shape[1]
    m = B * H * W
    n = 4 * Cout

    patches = _im2col3(x)                       # (M, 9*Cin)
    w3 = _convT_as_subpixel_weight(w_t)         # (9*Cin, 4*Cout)

    # Pass 1: tiled GEMM + per-column sum / sumsq.
    y, col_sum, col_sq = _gemm_stats(patches, w3)        # y: (Mp, Npad) f32

    # Pool the 4 sub-pixel phases per channel -> exact batch stats over N*Hout*Wout.
    count = 4.0 * m
    ch_sum = col_sum.reshape(4, Cout).sum(axis=0)
    ch_sq = col_sq.reshape(4, Cout).sum(axis=0)
    mean = ch_sum / count
    var = jnp.maximum(ch_sq / count - mean * mean, 0.0)  # biased var (PyTorch train)
    inv = lax.rsqrt(var + BN_EPS)
    scale_c = gamma * inv
    shift_c = beta - mean * scale_c

    npad = y.shape[1]
    scale_row = _pad_axis(jnp.tile(scale_c, 4).reshape(1, n), 1, npad)
    shift_row = _pad_axis(jnp.tile(shift_c, 4).reshape(1, n), 1, npad)

    # Pass 2: normalize + ReLU (bf16 out), then pixel-shuffle the 4 phases into (2H, 2W).
    a = _bn_relu_apply(y, scale_row, shift_row)
    a = a[:m, :n].reshape(B, H, W, 2, 2, Cout)
    a = a.transpose(0, 1, 3, 2, 4, 5).reshape(B, 2 * H, 2 * W, Cout)
    return a


def _conv3_bias_tanh(x, w, b):
    """Conv2d(k=3,s=1,p=1) + bias + tanh."""
    B, H, W, Cin = x.shape
    Cout = w.shape[0]
    patches = _im2col3(x)
    wf = jnp.transpose(w, (2, 3, 1, 0)).reshape(9 * Cin, Cout)
    y = _gemm_bias_act(patches, wf, b, tanh=True, out_dtype=jnp.float32)
    return y.reshape(B, H, W, Cout)


# --------------------------- Generator ---------------------------------------

def init_generator_params(key, latent_dim, dim, channels):
    keys = jax.random.split(key, 12)

    def nrm(k, shape, scale=0.05):
        return scale * jax.random.normal(k, shape, dtype=jnp.float32)

    params = {
        "lin_w": nrm(keys[0], (4 * 4 * 4 * dim, latent_dim)),  # torch (out, in)
        "lin_b": nrm(keys[1], (4 * 4 * 4 * dim,)),
        "cv_w": nrm(keys[2], (channels, dim, 3, 3)),
        "cv_b": nrm(keys[3], (channels,)),
    }
    cfgs = [(dim * 4, dim * 2), (dim * 2, dim), (dim, dim)]
    for i, (cin, cout) in enumerate(cfgs):
        params[f"ct{i}_w"] = nrm(keys[4 + 2 * i], (cin, cout, 4, 4))
        # ct{i}_b kept for interface parity; unused (cancels exactly in train-mode BN).
        params[f"ct{i}_b"] = nrm(keys[5 + 2 * i], (cout,))
        params[f"bn{i}_g"] = jnp.ones((cout,), jnp.float32)   # torch default
        params[f"bn{i}_b"] = jnp.zeros((cout,), jnp.float32)  # torch default
    return params


def generator_forward(params, z, dim, channels):
    B = z.shape[0]
    # Linear (GEMM + bias in Pallas); bf16 output -- it only feeds the bf16
    # ConvTranspose GEMM, so this just moves the downstream cast into the store.
    h = _gemm_bias_act(z, params["lin_w"].T, params["lin_b"],
                       tanh=False, out_dtype=jnp.bfloat16)                 # (B, 64*dim)
    # View(-1, 4*dim, 4, 4) is NCHW -> convert to NHWC for the conv path
    x = h.reshape(B, 4 * dim, 4, 4).transpose(0, 2, 3, 1)                  # (B,4,4,4*dim)

    for i in range(3):
        x = _convT_bn_relu(x, params[f"ct{i}_w"],
                           params[f"bn{i}_g"], params[f"bn{i}_b"])

    x = _conv3_bias_tanh(x, params["cv_w"], params["cv_b"])
    return x.transpose(0, 3, 1, 2)                                         # back to NCHW


if __name__ == "__main__":
    latent_dim, batch_size, dim, channels = 8, 2, 8, 3
    key = jax.random.PRNGKey(0)
    pkey, zkey = jax.random.split(key)
    params = init_generator_params(pkey, latent_dim, dim, channels)
    z = jax.random.normal(zkey, (batch_size, latent_dim), dtype=jnp.float32)

    fwd = jax.jit(lambda p, zz: generator_forward(p, zz, dim, channels))
    out = fwd(params, z)
    jax.block_until_ready(out)

    assert out.shape == (batch_size, channels, 32, 32), out.shape
    assert bool(jnp.all(jnp.isfinite(out)))
    assert bool(jnp.all(jnp.abs(out) <= 1.0))  # tanh range
    print("KERNEL_OK")
</pallas_src>

<mosaic_0001>
module attributes {stable_mosaic.version = 11 : i64} {
  func.func @_gemm_bias_kernel(%arg0: i32, %arg1: memref<16x8xbf16, #tpu.memory_space<vmem>>, %arg2: memref<8x512xbf16, #tpu.memory_space<vmem>>, %arg3: memref<1x512xf32, #tpu.memory_space<vmem>>, %arg4: memref<16x512xbf16, #tpu.memory_space<vmem>>) attributes {dimension_semantics = [#tpu.dimension_semantics<parallel>], iteration_bounds = array<i64: 1>, scalar_prefetch = 0 : i64, scratch_operands = 0 : i64, tpu.core_type = #tpu.core_type<tc>, window_params = [{transform_indices = @transform_0, window_bounds = array<i64: 16, 8>}, {pipeline_mode = #tpu.pipeline_mode<synchronous>, transform_indices = @transform_1, window_bounds = array<i64: 8, 512>}, {pipeline_mode = #tpu.pipeline_mode<synchronous>, transform_indices = @transform_2, window_bounds = array<i64: 1, 512>}, {transform_indices = @transform_3, window_bounds = array<i64: 16, 512>}]} {
    %c0 = arith.constant 0 : index
    %c0_0 = arith.constant 0 : index
    %0 = vector.load %arg1[%c0, %c0_0] : memref<16x8xbf16, #tpu.memory_space<vmem>>, vector<16x8xbf16>
    %c0_1 = arith.constant 0 : index
    %c0_2 = arith.constant 0 : index
    %1 = vector.load %arg2[%c0_1, %c0_2] : memref<8x512xbf16, #tpu.memory_space<vmem>>, vector<8x512xbf16>
    %cst = arith.constant dense<0.000000e+00> : vector<16x512xf32>
    %2 = tpu.matmul %0, %1, %cst {dimension_numbers = #tpu.dot_dimension_numbers<[1], [0], [0], [1], [0, 0, 1, 1], [], []>} : vector<16x8xbf16>, vector<8x512xbf16>, vector<16x512xf32> -> vector<16x512xf32>
    %c0_3 = arith.constant 0 : index
    %c0_4 = arith.constant 0 : index
    %3 = vector.load %arg3[%c0_3, %c0_4] : memref<1x512xf32, #tpu.memory_space<vmem>>, vector<1x512xf32>
    %4 = vector.broadcast %3 : vector<1x512xf32> to vector<16x512xf32>
    %5 = arith.addf %2, %4 : vector<16x512xf32>
    %6 = arith.truncf %5 : vector<16x512xf32> to vector<16x512xbf16>
    %c0_5 = arith.constant 0 : index
    %c0_6 = arith.constant 0 : index
    %7 = vector.load %arg4[%c0_5, %c0_6] : memref<16x512xbf16, #tpu.memory_space<vmem>>, vector<16x512xbf16>
    tpu.vector_store %arg4[%c0_5, %c0_6], %6 {strides = array<i32>} : memref<16x512xbf16, #tpu.memory_space<vmem>>, vector<16x512xbf16>,
    return
  }
  func.func @transform_0(%arg0: i32) -> (i32, i32) {
    %c0_i32 = arith.constant 0 : i32
    %c0_i32_0 = arith.constant 0 : i32
    return %arg0, %c0_i32 : i32, i32
  }
  func.func @transform_1(%arg0: i32) -> (i32, i32) {
    %c0_i32 = arith.constant 0 : i32
    %c0_i32_0 = arith.constant 0 : i32
    %c0_i32_1 = arith.constant 0 : i32
    return %c0_i32, %c0_i32_0 : i32, i32
  }
  func.func @transform_2(%arg0: i32) -> (i32, i32) {
    %c0_i32 = arith.constant 0 : i32
    %c0_i32_0 = arith.constant 0 : i32
    %c0_i32_1 = arith.constant 0 : i32
    return %c0_i32, %c0_i32_0 : i32, i32
  }
  func.func @transform_3(%arg0: i32) -> (i32, i32) {
    %c0_i32 = arith.constant 0 : i32
    %c0_i32_0 = arith.constant 0 : i32
    return %arg0, %c0_i32 : i32, i32
  }
}

module attributes {stable_mosaic.version = 11 : i64} {
  func.func @_gemm_stats_kernel(%arg0: i32, %arg1: memref<32x288xbf16, #tpu.memory_space<vmem>>, %arg2: memref<288x128xbf16, #tpu.memory_space<vmem>>, %arg3: memref<32x128xf32, #tpu.memory_space<vmem>>, %arg4: memref<1x1x128xf32, #tpu.memory_space<vmem>>, %arg5: memref<1x1x128xf32, #tpu.memory_space<vmem>>) attributes {dimension_semantics = [#tpu.dimension_semantics<parallel>], iteration_bounds = array<i64: 1>, scalar_prefetch = 0 : i64, scratch_operands = 0 : i64, tpu.core_type = #tpu.core_type<tc>, window_params = [{transform_indices = @transform_0, window_bounds = array<i64: 32, 288>}, {pipeline_mode = #tpu.pipeline_mode<synchronous>, transform_indices = @transform_1, window_bounds = array<i64: 288, 128>}, {transform_indices = @transform_2, window_bounds = array<i64: 32, 128>}, {transform_indices = @transform_3, window_bounds = array<i64: 1, 1, 128>}, {transform_indices = @transform_4, window_bounds = array<i64: 1, 1, 128>}]} {
    %c0 = arith.constant 0 : index
    %c0_0 = arith.constant 0 : index
    %0 = vector.load %arg1[%c0, %c0_0] : memref<32x288xbf16, #tpu.memory_space<vmem>>, vector<32x288xbf16>
    %c0_1 = arith.constant 0 : index
    %c0_2 = arith.constant 0 : index
    %1 = vector.load %arg2[%c0_1, %c0_2] : memref<288x128xbf16, #tpu.memory_space<vmem>>, vector<288x128xbf16>
    %cst = arith.constant dense<0.000000e+00> : vector<32x128xf32>
    %2 = tpu.matmul %0, %1, %cst {dimension_numbers = #tpu.dot_dimension_numbers<[1], [0], [0], [1], [0, 0, 1, 1], [], []>} : vector<32x288xbf16>, vector<288x128xbf16>, vector<32x128xf32> -> vector<32x128xf32>
    %c0_3 = arith.constant 0 : index
    %c0_4 = arith.constant 0 : index
    %3 = vector.load %arg3[%c0_3, %c0_4] : memref<32x128xf32, #tpu.memory_space<vmem>>, vector<32x128xf32>
    tpu.vector_store %arg3[%c0_3, %c0_4], %2 {strides = array<i32>} : memref<32x128xf32, #tpu.memory_space<vmem>>, vector<32x128xf32>,
    %cst_5 = arith.constant dense<0.000000e+00> : vector<128xf32>
    %4 = vector.multi_reduction <add>, %2, %cst_5 [0] : vector<32x128xf32> to vector<128xf32>
    %5 = vector.shape_cast %4 : vector<128xf32> to vector<1x128xf32>
    %6 = arith.mulf %2, %2 : vector<32x128xf32>
    %cst_6 = arith.constant dense<0.000000e+00> : vector<128xf32>
    %7 = vector.multi_reduction <add>, %6, %cst_6 [0] : vector<32x128xf32> to vector<128xf32>
    %8 = vector.shape_cast %7 : vector<128xf32> to vector<1x128xf32>
    %9 = vector.shape_cast %5 : vector<1x128xf32> to vector<1x1x128xf32>
    %c0_7 = arith.constant 0 : index
    %c0_8 = arith.constant 0 : index
    %c0_9 = arith.constant 0 : index
    %10 = vector.load %arg4[%c0_7, %c0_8, %c0_9] : memref<1x1x128xf32, #tpu.memory_space<vmem>>, vector<1x1x128xf32>
    tpu.vector_store %arg4[%c0_7, %c0_8, %c0_9], %9 {strides = array<i32>} : memref<1x1x128xf32, #tpu.memory_space<vmem>>, vector<1x1x128xf32>,
    %11 = vector.shape_cast %8 : vector<1x128xf32> to vector<1x1x128xf32>
    %c0_10 = arith.constant 0 : index
    %c0_11 = arith.constant 0 : index
    %c0_12 = arith.constant 0 : index
    %12 = vector.load %arg5[%c0_10, %c0_11, %c0_12] : memref<1x1x128xf32, #tpu.memory_space<vmem>>, vector<1x1x128xf32>
    tpu.vector_store %arg5[%c0_10, %c0_11, %c0_12], %11 {strides = array<i32>} : memref<1x1x128xf32, #tpu.memory_space<vmem>>, vector<1x1x128xf32>,
    return
  }
  func.func @transform_0(%arg0: i32) -> (i32, i32) {
    %c0_i32 = arith.constant 0 : i32
    %c0_i32_0 = arith.constant 0 : i32
    return %arg0, %c0_i32 : i32, i32
  }
  func.func @transform_1(%arg0: i32) -> (i32, i32) {
    %c0_i32 = arith.constant 0 : i32
    %c0_i32_0 = arith.constant 0 : i32
    %c0_i32_1 = arith.constant 0 : i32
    return %c0_i32, %c0_i32_0 : i32, i32
  }
  func.func @transform_2(%arg0: i32) -> (i32, i32) {
    %c0_i32 = arith.constant 0 : i32
    %c0_i32_0 = arith.constant 0 : i32
    return %arg0, %c0_i32 : i32, i32
  }
  func.func @transform_3(%arg0: i32) -> (i32, i32, i32) {
    %c0_i32 = arith.constant 0 : i32
    %c0_i32_0 = arith.constant 0 : i32
    %c0_i32_1 = arith.constant 0 : i32
    return %arg0, %c0_i32, %c0_i32_0 : i32, i32, i32
  }
  func.func @transform_4(%arg0: i32) -> (i32, i32, i32) {
    %c0_i32 = arith.constant 0 : i32
    %c0_i32_0 = arith.constant 0 : i32
    %c0_i32_1 = arith.constant 0 : i32
    return %arg0, %c0_i32, %c0_i32_0 : i32, i32, i32
  }
}

module attributes {stable_mosaic.version = 11 : i64} {
  func.func @_bn_relu_kernel(%arg0: i32, %arg1: memref<32x128xf32, #tpu.memory_space<vmem>>, %arg2: memref<1x128xf32, #tpu.memory_space<vmem>>, %arg3: memref<1x128xf32, #tpu.memory_space<vmem>>, %arg4: memref<32x128xbf16, #tpu.memory_space<vmem>>) attributes {dimension_semantics = [#tpu.dimension_semantics<parallel>], iteration_bounds = array<i64: 1>, scalar_prefetch = 0 : i64, scratch_operands = 0 : i64, tpu.core_type = #tpu.core_type<tc>, window_params = [{transform_indices = @transform_0, window_bounds = array<i64: 32, 128>}, {pipeline_mode = #tpu.pipeline_mode<synchronous>, transform_indices = @transform_1, window_bounds = array<i64: 1, 128>}, {pipeline_mode = #tpu.pipeline_mode<synchronous>, transform_indices = @transform_2, window_bounds = array<i64: 1, 128>}, {transform_indices = @transform_3, window_bounds = array<i64: 32, 128>}]} {
    %c0 = arith.constant 0 : index
    %c0_0 = arith.constant 0 : index
    %0 = vector.load %arg1[%c0, %c0_0] : memref<32x128xf32, #tpu.memory_space<vmem>>, vector<32x128xf32>
    %c0_1 = arith.constant 0 : index
    %c0_2 = arith.constant 0 : index
    %1 = vector.load %arg2[%c0_1, %c0_2] : memref<1x128xf32, #tpu.memory_space<vmem>>, vector<1x128xf32>
    %2 = vector.broadcast %1 : vector<1x128xf32> to vector<32x128xf32>
    %3 = arith.mulf %0, %2 : vector<32x128xf32>
    %c0_3 = arith.constant 0 : index
    %c0_4 = arith.constant 0 : index
    %4 = vector.load %arg3[%c0_3, %c0_4] : memref<1x128xf32, #tpu.memory_space<vmem>>, vector<1x128xf32>
    %5 = vector.broadcast %4 : vector<1x128xf32> to vector<32x128xf32>
    %6 = arith.addf %3, %5 : vector<32x128xf32>
    %cst = arith.constant 0.000000e+00 : f32
    %7 = vector.broadcast %cst : f32 to vector<32x128xf32>
    %8 = arith.maximumf %6, %7 : vector<32x128xf32>
    %9 = arith.truncf %8 : vector<32x128xf32> to vector<32x128xbf16>
    %c0_5 = arith.constant 0 : index
    %c0_6 = arith.constant 0 : index
    %10 = vector.load %arg4[%c0_5, %c0_6] : memref<32x128xbf16, #tpu.memory_space<vmem>>, vector<32x128xbf16>
    tpu.vector_store %arg4[%c0_5, %c0_6], %9 {strides = array<i32>} : memref<32x128xbf16, #tpu.memory_space<vmem>>, vector<32x128xbf16>,
    return
  }
  func.func @transform_0(%arg0: i32) -> (i32, i32) {
    %c0_i32 = arith.constant 0 : i32
    %c0_i32_0 = arith.constant 0 : i32
    return %arg0, %c0_i32 : i32, i32
  }
  func.func @transform_1(%arg0: i32) -> (i32, i32) {
    %c0_i32 = arith.constant 0 : i32
    %c0_i32_0 = arith.constant 0 : i32
    %c0_i32_1 = arith.constant 0 : i32
    return %c0_i32, %c0_i32_0 : i32, i32
  }
  func.func @transform_2(%arg0: i32) -> (i32, i32) {
    %c0_i32 = arith.constant 0 : i32
    %c0_i32_0 = arith.constant 0 : i32
    %c0_i32_1 = arith.constant 0 : i32
    return %c0_i32, %c0_i32_0 : i32, i32
  }
  func.func @transform_3(%arg0: i32) -> (i32, i32) {
    %c0_i32 = arith.constant 0 : i32
    %c0_i32_0 = arith.constant 0 : i32
    return %arg0, %c0_i32 : i32, i32
  }
}

module attributes {stable_mosaic.version = 11 : i64} {
  func.func @_gemm_stats_kernel(%arg0: i32, %arg1: memref<128x144xbf16, #tpu.memory_space<vmem>>, %arg2: memref<144x128xbf16, #tpu.memory_space<vmem>>, %arg3: memref<128x128xf32, #tpu.memory_space<vmem>>, %arg4: memref<1x1x128xf32, #tpu.memory_space<vmem>>, %arg5: memref<1x1x128xf32, #tpu.memory_space<vmem>>) attributes {dimension_semantics = [#tpu.dimension_semantics<parallel>], iteration_bounds = array<i64: 1>, scalar_prefetch = 0 : i64, scratch_operands = 0 : i64, tpu.core_type = #tpu.core_type<tc>, window_params = [{transform_indices = @transform_0, window_bounds = array<i64: 128, 144>}, {pipeline_mode = #tpu.pipeline_mode<synchronous>, transform_indices = @transform_1, window_bounds = array<i64: 144, 128>}, {transform_indices = @transform_2, window_bounds = array<i64: 128, 128>}, {transform_indices = @transform_3, window_bounds = array<i64: 1, 1, 128>}, {transform_indices = @transform_4, window_bounds = array<i64: 1, 1, 128>}]} {
    %c0 = arith.constant 0 : index
    %c0_0 = arith.constant 0 : index
    %0 = vector.load %arg1[%c0, %c0_0] : memref<128x144xbf16, #tpu.memory_space<vmem>>, vector<128x144xbf16>
    %c0_1 = arith.constant 0 : index
    %c0_2 = arith.constant 0 : index
    %1 = vector.load %arg2[%c0_1, %c0_2] : memref<144x128xbf16, #tpu.memory_space<vmem>>, vector<144x128xbf16>
    %cst = arith.constant dense<0.000000e+00> : vector<128x128xf32>
    %2 = tpu.matmul %0, %1, %cst {dimension_numbers = #tpu.dot_dimension_numbers<[1], [0], [0], [1], [0, 0, 1, 1], [], []>} : vector<128x144xbf16>, vector<144x128xbf16>, vector<128x128xf32> -> vector<128x128xf32>
    %c0_3 = arith.constant 0 : index
    %c0_4 = arith.constant 0 : index
    %3 = vector.load %arg3[%c0_3, %c0_4] : memref<128x128xf32, #tpu.memory_space<vmem>>, vector<128x128xf32>
    tpu.vector_store %arg3[%c0_3, %c0_4], %2 {strides = array<i32>} : memref<128x128xf32, #tpu.memory_space<vmem>>, vector<128x128xf32>,
    %cst_5 = arith.constant dense<0.000000e+00> : vector<128xf32>
    %4 = vector.multi_reduction <add>, %2, %cst_5 [0] : vector<128x128xf32> to vector<128xf32>
    %5 = vector.shape_cast %4 : vector<128xf32> to vector<1x128xf32>
    %6 = arith.mulf %2, %2 : vector<128x128xf32>
    %cst_6 = arith.constant dense<0.000000e+00> : vector<128xf32>
    %7 = vector.multi_reduction <add>, %6, %cst_6 [0] : vector<128x128xf32> to vector<128xf32>
    %8 = vector.shape_cast %7 : vector<128xf32> to vector<1x128xf32>
    %9 = vector.shape_cast %5 : vector<1x128xf32> to vector<1x1x128xf32>
    %c0_7 = arith.constant 0 : index
    %c0_8 = arith.constant 0 : index
    %c0_9 = arith.constant 0 : index
    %10 = vector.load %arg4[%c0_7, %c0_8, %c0_9] : memref<1x1x128xf32, #tpu.memory_space<vmem>>, vector<1x1x128xf32>
    tpu.vector_store %arg4[%c0_7, %c0_8, %c0_9], %9 {strides = array<i32>} : memref<1x1x128xf32, #tpu.memory_space<vmem>>, vector<1x1x128xf32>,
    %11 = vector.shape_cast %8 : vector<1x128xf32> to vector<1x1x128xf32>
    %c0_10 = arith.constant 0 : index
    %c0_11 = arith.constant 0 : index
    %c0_12 = arith.constant 0 : index
    %12 = vector.load %arg5[%c0_10, %c0_11, %c0_12] : memref<1x1x128xf32, #tpu.memory_space<vmem>>, vector<1x1x128xf32>
    tpu.vector_store %arg5[%c0_10, %c0_11, %c0_12], %11 {strides = array<i32>} : memref<1x1x128xf32, #tpu.memory_space<vmem>>, vector<1x1x128xf32>,
    return
  }
  func.func @transform_0(%arg0: i32) -> (i32, i32) {
    %c0_i32 = arith.constant 0 : i32
    %c0_i32_0 = arith.constant 0 : i32
    return %arg0, %c0_i32 : i32, i32
  }
  func.func @transform_1(%arg0: i32) -> (i32, i32) {
    %c0_i32 = arith.constant 0 : i32
    %c0_i32_0 = arith.constant 0 : i32
    %c0_i32_1 = arith.constant 0 : i32
    return %c0_i32, %c0_i32_0 : i32, i32
  }
  func.func @transform_2(%arg0: i32) -> (i32, i32) {
    %c0_i32 = arith.constant 0 : i32
    %c0_i32_0 = arith.constant 0 : i32
    return %arg0, %c0_i32 : i32, i32
  }
  func.func @transform_3(%arg0: i32) -> (i32, i32, i32) {
    %c0_i32 = arith.constant 0 : i32
    %c0_i32_0 = arith.constant 0 : i32
    %c0_i32_1 = arith.constant 0 : i32
    return %arg0, %c0_i32, %c0_i32_0 : i32, i32, i32
  }
  func.func @transform_4(%arg0: i32) -> (i32, i32, i32) {
    %c0_i32 = arith.constant 0 : i32
    %c0_i32_0 = arith.constant 0 : i32
    %c0_i32_1 = arith.constant 0 : i32
    return %arg0, %c0_i32, %c0_i32_0 : i32, i32, i32
  }
}

module attributes {stable_mosaic.version = 11 : i64} {
  func.func @_bn_relu_kernel(%arg0: i32, %arg1: memref<128x128xf32, #tpu.memory_space<vmem>>, %arg2: memref<1x128xf32, #tpu.memory_space<vmem>>, %arg3: memref<1x128xf32, #tpu.memory_space<vmem>>, %arg4: memref<128x128xbf16, #tpu.memory_space<vmem>>) attributes {dimension_semantics = [#tpu.dimension_semantics<parallel>], iteration_bounds = array<i64: 1>, scalar_prefetch = 0 : i64, scratch_operands = 0 : i64, tpu.core_type = #tpu.core_type<tc>, window_params = [{transform_indices = @transform_0, window_bounds = array<i64: 128, 128>}, {pipeline_mode = #tpu.pipeline_mode<synchronous>, transform_indices = @transform_1, window_bounds = array<i64: 1, 128>}, {pipeline_mode = #tpu.pipeline_mode<synchronous>, transform_indices = @transform_2, window_bounds = array<i64: 1, 128>}, {transform_indices = @transform_3, window_bounds = array<i64: 128, 128>}]} {
    %c0 = arith.constant 0 : index
    %c0_0 = arith.constant 0 : index
    %0 = vector.load %arg1[%c0, %c0_0] : memref<128x128xf32, #tpu.memory_space<vmem>>, vector<128x128xf32>
    %c0_1 = arith.constant 0 : index
    %c0_2 = arith.constant 0 : index
    %1 = vector.load %arg2[%c0_1, %c0_2] : memref<1x128xf32, #tpu.memory_space<vmem>>, vector<1x128xf32>
    %2 = vector.broadcast %1 : vector<1x128xf32> to vector<128x128xf32>
    %3 = arith.mulf %0, %2 : vector<128x128xf32>
    %c0_3 = arith.constant 0 : index
    %c0_4 = arith.constant 0 : index
    %4 = vector.load %arg3[%c0_3, %c0_4] : memref<1x128xf32, #tpu.memory_space<vmem>>, vector<1x128xf32>
    %5 = vector.broadcast %4 : vector<1x128xf32> to vector<128x128xf32>
    %6 = arith.addf %3, %5 : vector<128x128xf32>
    %cst = arith.constant 0.000000e+00 : f32
    %7 = vector.broadcast %cst : f32 to vector<128x128xf32>
    %8 = arith.maximumf %6, %7 : vector<128x128xf32>
    %9 = arith.truncf %8 : vector<128x128xf32> to vector<128x128xbf16>
    %c0_5 = arith.constant 0 : index
    %c0_6 = arith.constant 0 : index
    %10 = vector.load %arg4[%c0_5, %c0_6] : memref<128x128xbf16, #tpu.memory_space<vmem>>, vector<128x128xbf16>
    tpu.vector_store %arg4[%c0_5, %c0_6], %9 {strides = array<i32>} : memref<128x128xbf16, #tpu.memory_space<vmem>>, vector<128x128xbf16>,
    return
  }
  func.func @transform_0(%arg0: i32) -> (i32, i32) {
    %c0_i32 = arith.constant 0 : i32
    %c0_i32_0 = arith.constant 0 : i32
    return %arg0, %c0_i32 : i32, i32
  }
  func.func @transform_1(%arg0: i32) -> (i32, i32) {
    %c0_i32 = arith.constant 0 : i32
    %c0_i32_0 = arith.constant 0 : i32
    %c0_i32_1 = arith.constant 0 : i32
    return %c0_i32, %c0_i32_0 : i32, i32
  }
  func.func @transform_2(%arg0: i32) -> (i32, i32) {
    %c0_i32 = arith.constant 0 : i32
    %c0_i32_0 = arith.constant 0 : i32
    %c0_i32_1 = arith.constant 0 : i32
    return %c0_i32, %c0_i32_0 : i32, i32
  }
  func.func @transform_3(%arg0: i32) -> (i32, i32) {
    %c0_i32 = arith.constant 0 : i32
    %c0_i32_0 = arith.constant 0 : i32
    return %arg0, %c0_i32 : i32, i32
  }
}

module attributes {stable_mosaic.version = 11 : i64} {
  func.func @_gemm_stats_kernel(%arg0: i32, %arg1: memref<512x72xbf16, #tpu.memory_space<vmem>>, %arg2: memref<72x128xbf16, #tpu.memory_space<vmem>>, %arg3: memref<512x128xf32, #tpu.memory_space<vmem>>, %arg4: memref<1x1x128xf32, #tpu.memory_space<vmem>>, %arg5: memref<1x1x128xf32, #tpu.memory_space<vmem>>) attributes {dimension_semantics = [#tpu.dimension_semantics<parallel>], iteration_bounds = array<i64: 1>, scalar_prefetch = 0 : i64, scratch_operands = 0 : i64, tpu.core_type = #tpu.core_type<tc>, window_params = [{transform_indices = @transform_0, window_bounds = array<i64: 512, 72>}, {pipeline_mode = #tpu.pipeline_mode<synchronous>, transform_indices = @transform_1, window_bounds = array<i64: 72, 128>}, {transform_indices = @transform_2, window_bounds = array<i64: 512, 128>}, {transform_indices = @transform_3, window_bounds = array<i64: 1, 1, 128>}, {transform_indices = @transform_4, window_bounds = array<i64: 1, 1, 128>}]} {
    %c0 = arith.constant 0 : index
    %c0_0 = arith.constant 0 : index
    %0 = vector.load %arg1[%c0, %c0_0] : memref<512x72xbf16, #tpu.memory_space<vmem>>, vector<512x72xbf16>
    %c0_1 = arith.constant 0 : index
    %c0_2 = arith.constant 0 : index
    %1 = vector.load %arg2[%c0_1, %c0_2] : memref<72x128xbf16, #tpu.memory_space<vmem>>, vector<72x128xbf16>
    %cst = arith.constant dense<0.000000e+00> : vector<512x128xf32>
    %2 = tpu.matmul %0, %1, %cst {dimension_numbers = #tpu.dot_dimension_numbers<[1], [0], [0], [1], [0, 0, 1, 1], [], []>} : vector<512x72xbf16>, vector<72x128xbf16>, vector<512x128xf32> -> vector<512x128xf32>
    %c0_3 = arith.constant 0 : index
    %c0_4 = arith.constant 0 : index
    %3 = vector.load %arg3[%c0_3, %c0_4] : memref<512x128xf32, #tpu.memory_space<vmem>>, vector<512x128xf32>
    tpu.vector_store %arg3[%c0_3, %c0_4], %2 {strides = array<i32>} : memref<512x128xf32, #tpu.memory_space<vmem>>, vector<512x128xf32>,
    %cst_5 = arith.constant dense<0.000000e+00> : vector<128xf32>
    %4 = vector.multi_reduction <add>, %2, %cst_5 [0] : vector<512x128xf32> to vector<128xf32>
    %5 = vector.shape_cast %4 : vector<128xf32> to vector<1x128xf32>
    %6 = arith.mulf %2, %2 : vector<512x128xf32>
    %cst_6 = arith.constant dense<0.000000e+00> : vector<128xf32>
    %7 = vector.multi_reduction <add>, %6, %cst_6 [0] : vector<512x128xf32> to vector<128xf32>
    %8 = vector.shape_cast %7 : vector<128xf32> to vector<1x128xf32>
    %9 = vector.shape_cast %5 : vector<1x128xf32> to vector<1x1x128xf32>
    %c0_7 = arith.constant 0 : index
    %c0_8 = arith.constant 0 : index
    %c0_9 = arith.constant 0 : index
    %10 = vector.load %arg4[%c0_7, %c0_8, %c0_9] : memref<1x1x128xf32, #tpu.memory_space<vmem>>, vector<1x1x128xf32>
    tpu.vector_store %arg4[%c0_7, %c0_8, %c0_9], %9 {strides = array<i32>} : memref<1x1x128xf32, #tpu.memory_space<vmem>>, vector<1x1x128xf32>,
    %11 = vector.shape_cast %8 : vector<1x128xf32> to vector<1x1x128xf32>
    %c0_10 = arith.constant 0 : index
    %c0_11 = arith.constant 0 : index
    %c0_12 = arith.constant 0 : index
    %12 = vector.load %arg5[%c0_10, %c0_11, %c0_12] : memref<1x1x128xf32, #tpu.memory_space<vmem>>, vector<1x1x128xf32>
    tpu.vector_store %arg5[%c0_10, %c0_11, %c0_12], %11 {strides = array<i32>} : memref<1x1x128xf32, #tpu.memory_space<vmem>>, vector<1x1x128xf32>,
    return
  }
  func.func @transform_0(%arg0: i32) -> (i32, i32) {
    %c0_i32 = arith.constant 0 : i32
    %c0_i32_0 = arith.constant 0 : i32
    return %arg0, %c0_i32 : i32, i32
  }
  func.func @transform_1(%arg0: i32) -> (i32, i32) {
    %c0_i32 = arith.constant 0 : i32
    %c0_i32_0 = arith.constant 0 : i32
    %c0_i32_1 = arith.constant 0 : i32
    return %c0_i32, %c0_i32_0 : i32, i32
  }
  func.func @transform_2(%arg0: i32) -> (i32, i32) {
    %c0_i32 = arith.constant 0 : i32
    %c0_i32_0 = arith.constant 0 : i32
    return %arg0, %c0_i32 : i32, i32
  }
  func.func @transform_3(%arg0: i32) -> (i32, i32, i32) {
    %c0_i32 = arith.constant 0 : i32
    %c0_i32_0 = arith.constant 0 : i32
    %c0_i32_1 = arith.constant 0 : i32
    return %arg0, %c0_i32, %c0_i32_0 : i32, i32, i32
  }
  func.func @transform_4(%arg0: i32) -> (i32, i32, i32) {
    %c0_i32 = arith.constant 0 : i32
    %c0_i32_0 = arith.constant 0 : i32
    %c0_i32_1 = arith.constant 0 : i32
    return %arg0, %c0_i32, %c0_i32_0 : i32, i32, i32
  }
}

module attributes {stable_mosaic.version = 11 : i64} {
  func.func @_bn_relu_kernel(%arg0: i32, %arg1: memref<512x128xf32, #tpu.memory_space<vmem>>, %arg2: memref<1x128xf32, #tpu.memory_space<vmem>>, %arg3: memref<1x128xf32, #tpu.memory_space<vmem>>, %arg4: memref<512x128xbf16, #tpu.memory_space<vmem>>) attributes {dimension_semantics = [#tpu.dimension_semantics<parallel>], iteration_bounds = array<i64: 1>, scalar_prefetch = 0 : i64, scratch_operands = 0 : i64, tpu.core_type = #tpu.core_type<tc>, window_params = [{transform_indices = @transform_0, window_bounds = array<i64: 512, 128>}, {pipeline_mode = #tpu.pipeline_mode<synchronous>, transform_indices = @transform_1, window_bounds = array<i64: 1, 128>}, {pipeline_mode = #tpu.pipeline_mode<synchronous>, transform_indices = @transform_2, window_bounds = array<i64: 1, 128>}, {transform_indices = @transform_3, window_bounds = array<i64: 512, 128>}]} {
    %c0 = arith.constant 0 : index
    %c0_0 = arith.constant 0 : index
    %0 = vector.load %arg1[%c0, %c0_0] : memref<512x128xf32, #tpu.memory_space<vmem>>, vector<512x128xf32>
    %c0_1 = arith.constant 0 : index
    %c0_2 = arith.constant 0 : index
    %1 = vector.load %arg2[%c0_1, %c0_2] : memref<1x128xf32, #tpu.memory_space<vmem>>, vector<1x128xf32>
    %2 = vector.broadcast %1 : vector<1x128xf32> to vector<512x128xf32>
    %3 = arith.mulf %0, %2 : vector<512x128xf32>
    %c0_3 = arith.constant 0 : index
    %c0_4 = arith.constant 0 : index
    %4 = vector.load %arg3[%c0_3, %c0_4] : memref<1x128xf32, #tpu.memory_space<vmem>>, vector<1x128xf32>
    %5 = vector.broadcast %4 : vector<1x128xf32> to vector<512x128xf32>
    %6 = arith.addf %3, %5 : vector<512x128xf32>
    %cst = arith.constant 0.000000e+00 : f32
    %7 = vector.broadcast %cst : f32 to vector<512x128xf32>
    %8 = arith.maximumf %6, %7 : vector<512x128xf32>
    %9 = arith.truncf %8 : vector<512x128xf32> to vector<512x128xbf16>
    %c0_5 = arith.constant 0 : index
    %c0_6 = arith.constant 0 : index
    %10 = vector.load %arg4[%c0_5, %c0_6] : memref<512x128xbf16, #tpu.memory_space<vmem>>, vector<512x128xbf16>
    tpu.vector_store %arg4[%c0_5, %c0_6], %9 {strides = array<i32>} : memref<512x128xbf16, #tpu.memory_space<vmem>>, vector<512x128xbf16>,
    return
  }
  func.func @transform_0(%arg0: i32) -> (i32, i32) {
    %c0_i32 = arith.constant 0 : i32
    %c0_i32_0 = arith.constant 0 : i32
    return %arg0, %c0_i32 : i32, i32
  }
  func.func @transform_1(%arg0: i32) -> (i32, i32) {
    %c0_i32 = arith.constant 0 : i32
    %c0_i32_0 = arith.constant 0 : i32
    %c0_i32_1 = arith.constant 0 : i32
    return %c0_i32, %c0_i32_0 : i32, i32
  }
  func.func @transform_2(%arg0: i32) -> (i32, i32) {
    %c0_i32 = arith.constant 0 : i32
    %c0_i32_0 = arith.constant 0 : i32
    %c0_i32_1 = arith.constant 0 : i32
    return %c0_i32, %c0_i32_0 : i32, i32
  }
  func.func @transform_3(%arg0: i32) -> (i32, i32) {
    %c0_i32 = arith.constant 0 : i32
    %c0_i32_0 = arith.constant 0 : i32
    return %arg0, %c0_i32 : i32, i32
  }
}

module attributes {stable_mosaic.version = 11 : i64} {
  func.func @_gemm_bias_tanh_kernel(%arg0: i32, %arg1: memref<512x72xbf16, #tpu.memory_space<vmem>>, %arg2: memref<72x128xbf16, #tpu.memory_space<vmem>>, %arg3: memref<1x128xf32, #tpu.memory_space<vmem>>, %arg4: memref<512x128xf32, #tpu.memory_space<vmem>>) attributes {dimension_semantics = [#tpu.dimension_semantics<parallel>], iteration_bounds = array<i64: 4>, scalar_prefetch = 0 : i64, scratch_operands = 0 : i64, tpu.core_type = #tpu.core_type<tc>, window_params = [{transform_indices = @transform_0, window_bounds = array<i64: 512, 72>}, {pipeline_mode = #tpu.pipeline_mode<synchronous>, transform_indices = @transform_1, window_bounds = array<i64: 72, 128>}, {pipeline_mode = #tpu.pipeline_mode<synchronous>, transform_indices = @transform_2, window_bounds = array<i64: 1, 128>}, {transform_indices = @transform_3, window_bounds = array<i64: 512, 128>}]} {
    %c0 = arith.constant 0 : index
    %c0_0 = arith.constant 0 : index
    %0 = vector.load %arg1[%c0, %c0_0] : memref<512x72xbf16, #tpu.memory_space<vmem>>, vector<512x72xbf16>
    %c0_1 = arith.constant 0 : index
    %c0_2 = arith.constant 0 : index
    %1 = vector.load %arg2[%c0_1, %c0_2] : memref<72x128xbf16, #tpu.memory_space<vmem>>, vector<72x128xbf16>
    %cst = arith.constant dense<0.000000e+00> : vector<512x128xf32>
    %2 = tpu.matmul %0, %1, %cst {dimension_numbers = #tpu.dot_dimension_numbers<[1], [0], [0], [1], [0, 0, 1, 1], [], []>} : vector<512x72xbf16>, vector<72x128xbf16>, vector<512x128xf32> -> vector<512x128xf32>
    %c0_3 = arith.constant 0 : index
    %c0_4 = arith.constant 0 : index
    %3 = vector.load %arg3[%c0_3, %c0_4] : memref<1x128xf32, #tpu.memory_space<vmem>>, vector<1x128xf32>
    %4 = vector.broadcast %3 : vector<1x128xf32> to vector<512x128xf32>
    %5 = arith.addf %2, %4 : vector<512x128xf32>
    %6 = math.tanh %5 : vector<512x128xf32>
    %c0_5 = arith.constant 0 : index
    %c0_6 = arith.constant 0 : index
    %7 = vector.load %arg4[%c0_5, %c0_6] : memref<512x128xf32, #tpu.memory_space<vmem>>, vector<512x128xf32>
    tpu.vector_store %arg4[%c0_5, %c0_6], %6 {strides = array<i32>} : memref<512x128xf32, #tpu.memory_space<vmem>>, vector<512x128xf32>,
    return
  }
  func.func @transform_0(%arg0: i32) -> (i32, i32) {
    %c0_i32 = arith.constant 0 : i32
    %c0_i32_0 = arith.constant 0 : i32
    return %arg0, %c0_i32 : i32, i32
  }
  func.func @transform_1(%arg0: i32) -> (i32, i32) {
    %c0_i32 = arith.constant 0 : i32
    %c0_i32_0 = arith.constant 0 : i32
    %c0_i32_1 = arith.constant 0 : i32
    return %c0_i32, %c0_i32_0 : i32, i32
  }
  func.func @transform_2(%arg0: i32) -> (i32, i32) {
    %c0_i32 = arith.constant 0 : i32
    %c0_i32_0 = arith.constant 0 : i32
    %c0_i32_1 = arith.constant 0 : i32
    return %c0_i32, %c0_i32_0 : i32, i32
  }
  func.func @transform_3(%arg0: i32) -> (i32, i32) {
    %c0_i32 = arith.constant 0 : i32
    %c0_i32_0 = arith.constant 0 : i32
    return %arg0, %c0_i32 : i32, i32
  }
}

</mosaic_0001>

<llo_original>
// kernel: _lambda_.8
$region0: #{_lambda_.8}
  #allocation0 [shape = 'u32[]', space=smem, size = 0x4, offset = 0x4, fixed_abs, tag = 'smem constant byte address 0x4 - core index']
  #allocation1 [shape = 'u32[72,128]{1,0:T(1,128)}', space=vmem, size = 0x9000, scoped, tag = 'internal scratch']
  %s0 = inlined_call_operand.vmem [shape: bf16[16,8], index: 0, kind: input, shape index: {}]
  %s1 = inlined_call_operand.vmem [shape: bf16[8,512], index: 1, kind: input, shape index: {}]
  %s2 = inlined_call_operand.vmem [shape: f32[1,512], index: 2, kind: input, shape index: {}]
  %s3 = inlined_call_operand.vmem [shape: bf16[16,512], index: 3, kind: output, shape index: {}]
  %s4 = sld [smem:[#allocation0]]
  $region22: #{_lambda_.8} parent=0
    _
  %s6 = ssub.s32 1, %s4
  %s7 = scalar_select 0, %s6, %s4
  // Predicated region
  $region2: #{_lambda_.8} parent=0 // pred_check
    _
  $region3: #{_lambda_.8} parent=0 // pred_check_branch
    %9 = sbr.rel (0) target = $region5
  $region4: #{_lambda_.8} parent=0 // pred_region
    _
  $region5: #{_lambda_.8} parent=0 // pred_fallthru
    _
  // Predicated region
  $region6: #{_lambda_.8} parent=0 // pred_check
    _
  $region7: #{_lambda_.8} parent=0 // pred_check_branch
    %11 = sbr.rel (0) target = $region9
  $region8: #{_lambda_.8} parent=0 // pred_region
    _
  $region9: #{_lambda_.8} parent=0 // pred_fallthru
    _
  // Predicated region
  $region10: #{_lambda_.8} parent=0 // pred_check
    _
  $region11: #{_lambda_.8} parent=0 // pred_check_branch
    %13 = sbr.rel (0) target = $region13
  $region12: #{_lambda_.8} parent=0 // pred_region
    _
  $region13: #{_lambda_.8} parent=0 // pred_fallthru
    _
  %v15 = vld [vmem:[%s0] sm:$0xf]
  %v16 = vld [vmem:[%s0 + $0x4] sm:$0xf]
  %v17 = vld [vmem:[%s1] sm:$0xff]
  %v18 = vld [vmem:[%s1 + $0x8] sm:$0xff]
  %v19 = vld [vmem:[%s2] sm:$0xf]
  %v21 = vperm.slane %v19, 0
  %v22 = vperm.slane %v19, 1
  %v23 = vperm.slane %v19, 2
  %v24 = vperm.slane %v19, 3
  %v31 = vunpack.c.l.b16 %v15
  %v32 = vunpack.c.l.b16 %v16
  %v33 = vpack.c.b16 %v32, %v31
  %v36 = vunpack.c.l.b16 %v17
  %v37 = vunpack.c.h.b16 %v17
  %v38 = vunpack.c.l.b16 %v18
  %v39 = vunpack.c.h.b16 %v18
  %v40 = vpack.c.b16 %v36, %v36
  %v41 = vpack.c.b16 %v37, %v37
  %v42 = vpack.c.b16 %v38, %v38
  %v43 = vpack.c.b16 %v39, %v39
  %vm44 = vcmask 64512
  %v46 = vsel %vm44, %v33, 0
  %vm48 = vcmask 1043456
  %v50 = vsel %vm48, %v40, 0
  %v53 = vsel %vm48, %v41, 0
  %v56 = vsel %vm48, %v42, 0
  %v59 = vsel %vm48, %v43, 0
  %61 = vmatpush.bf16.msra.mxu0 0
  %62 = vmatpush.bf16.msra.mxu0 0
  %63 = vmatpush.bf16.msra.mxu0 0
  %64 = vmatpush.bf16.msra.mxu0 0
  %65 = vmatpush.bf16.msra.mxu0 0
  %66 = vmatpush.bf16.msra.mxu0 0
  %67 = vmatpush.bf16.msra.mxu0 0
  %68 = vmatpush.bf16.msra.mxu0 %v50
  %69 = vmatmul.bf16.gmra.mxu0 %v46
  %v70 = vpop.f32.mrf.mxu0
  %v71 = vadd.f32 %v21, %v70
  %v72 = vpop.f32.mrf.mxu0
  %v73 = vadd.f32 %v21, %v72
  %74 = vdwg.mxu0
  %75 = vmatpush.bf16.msra.mxu0 0
  %76 = vmatpush.bf16.msra.mxu0 0
  %77 = vmatpush.bf16.msra.mxu0 0
  %78 = vmatpush.bf16.msra.mxu0 0
  %79 = vmatpush.bf16.msra.mxu0 0
  %80 = vmatpush.bf16.msra.mxu0 0
  %81 = vmatpush.bf16.msra.mxu0 0
  %82 = vmatpush.bf16.msra.mxu0 %v53
  %83 = vmatmul.bf16.gmra.mxu0 %v46
  %v84 = vpop.f32.mrf.mxu0
  %v85 = vadd.f32 %v22, %v84
  %v86 = vpop.f32.mrf.mxu0
  %v87 = vadd.f32 %v22, %v86
  %88 = vdwg.mxu0
  %89 = vmatpush.bf16.msra.mxu0 0
  %90 = vmatpush.bf16.msra.mxu0 0
  %91 = vmatpush.bf16.msra.mxu0 0
  %92 = vmatpush.bf16.msra.mxu0 0
  %93 = vmatpush.bf16.msra.mxu0 0
  %94 = vmatpush.bf16.msra.mxu0 0
  %95 = vmatpush.bf16.msra.mxu0 0
  %96 = vmatpush.bf16.msra.mxu0 %v56
  %97 = vmatmul.bf16.gmra.mxu0 %v46
  %v98 = vpop.f32.mrf.mxu0
  %v99 = vadd.f32 %v23, %v98
  %v100 = vpop.f32.mrf.mxu0
  %v101 = vadd.f32 %v23, %v100
  %102 = vdwg.mxu0
  %103 = vmatpush.bf16.msra.mxu0 0
  %104 = vmatpush.bf16.msra.mxu0 0
  %105 = vmatpush.bf16.msra.mxu0 0
  %106 = vmatpush.bf16.msra.mxu0 0
  %107 = vmatpush.bf16.msra.mxu0 0
  %108 = vmatpush.bf16.msra.mxu0 0
  %109 = vmatpush.bf16.msra.mxu0 0
  %110 = vmatpush.bf16.msra.mxu0 %v59
  %111 = vmatmul.bf16.gmra.mxu0 %v46
  %v112 = vpop.f32.mrf.mxu0
  %v113 = vadd.f32 %v24, %v112
  %v114 = vpop.f32.mrf.mxu0
  %v115 = vadd.f32 %v24, %v114
  %116 = vdwg.mxu0
  %v117 = vpack.c.bf16 %v85, %v71
  %v118 = vpack.c.bf16 %v113, %v99
  %v119 = vpack.c.bf16 %v87, %v73
  %v120 = vpack.c.bf16 %v115, %v101
  %121 = vst [vmem:[%s3] sm:$0xff] %v117
  %122 = vst [vmem:[%s3 + $0x8] sm:$0xff] %v118
  %123 = vst [vmem:[%s3 + $0x10] sm:$0xff] %v119
  %124 = vst [vmem:[%s3 + $0x18] sm:$0xff] %v120
  // Predicated region
  $region14: #{_lambda_.8} parent=0 // pred_check
    _
  $region15: #{_lambda_.8} parent=0 // pred_check_branch
    %126 = sbr.rel (0) target = $region17
  $region16: #{_lambda_.8} parent=0 // pred_region
    _
  $region17: #{_lambda_.8} parent=0 // pred_fallthru
    _
  // Predicated region
  $region18: #{_lambda_.8} parent=0 // pred_check
    _
  $region19: #{_lambda_.8} parent=0 // pred_check_branch
    %128 = sbr.rel (0) target = $region21
  $region20: #{_lambda_.8} parent=0 // pred_region
    _
  $region21: #{_lambda_.8} parent=0 // pred_fallthru
    _

// kernel: tile.33
$region0: #{tile.33}
  #allocation0 [shape = 's32[1]{0}', space=sflag, size = 0x4, scoped, tag = 'scoped memory for tile.33']
  %s0 = inlined_call_operand.vmem [shape: f32[16], index: 0, kind: input, shape index: {}]
  %s1 = inlined_call_operand.vmem [shape: f32[4,16], index: 1, kind: output, shape index: {}]
  // Predicated region
  $region2: #{tile.33} parent=0 // pred_check
    _
  $region3: #{tile.33} parent=0 // pred_check_branch
    %3 = sbr.rel (0) target = $region5
  $region4: #{tile.33} parent=0 // pred_region
    _
  $region5: #{tile.33} parent=0 // pred_fallthru
    _
  %v4 = vld [vmem:[%s0] ss:$0 sm:$0xff]
  %5 = vst [vmem:[%s1] sm:$0xf] %v4

// kernel: tile.34
$region0: #{tile.34}
  %s0 = inlined_call_operand.vmem [shape: f32[4,16], index: 0, kind: input, shape index: {}]
  %s1 = inlined_call_operand.vmem [shape: f32[1,64], index: 1, kind: output, shape index: {}]
  $region1: #{tile.34} parent=0
    #allocation0 [shape = 'u8[4096]{0}', space=vmem, size = 0x1000, scoped, tag = 'scoped mem for output reshape']
    #allocation1 [shape = 'u8[4096]{0}', space=vmem, size = 0x1000, scoped, tag = 'scoped mem for input reshape']
    %s3 = ssub.s32 16, 1
    %v4 = vld [vmem:[%s0] sm:%s3]
    %5 = vst [vmem:[#allocation1] sm:%s3] %v4
    %v6 = vld [vmem:[#allocation1] sm:$0x1]
    %vm7 = vcmask 130048
    %8 = vst.msk [vmem:[#allocation0] sm:$0x1] %vm7, %v6
    %s9 = scalar_lea.vmem [#allocation1], 3
    %v10 = vld [vmem:[%s9] sm:$0x1]
    %11 = vrot.lane.b32.xlu0 %v10, 48
    %v12 = vpop.permute.xlu0 %11
    %vm13 = vcmask 523648
    %14 = vst.msk [vmem:[#allocation0] sm:$0x1] %vm13, %v12
    %s15 = scalar_lea.vmem [#allocation1], 2
    %v16 = vld [vmem:[%s15] sm:$0x1]
    %17 = vrot.lane.b32.xlu0 %v16, 32
    %v18 = vpop.permute.xlu0 %17
    %vm19 = vcmask 392448
    %20 = vst.msk [vmem:[#allocation0] sm:$0x1] %vm19, %v18
    %s21 = scalar_lea.vmem [#allocation1], 1
    %v22 = vld [vmem:[%s21] sm:$0x1]
    %23 = vrot.lane.b32.xlu0 %v22, 16
    %v24 = vpop.permute.xlu0 %23
    %vm25 = vcmask 261248
    %26 = vst.msk [vmem:[#allocation0] sm:$0x1] %vm25, %v24
    %s28 = ssub.s32 2, 1
    %v29 = vld [vmem:[#allocation0] sm:%s28]
    %s31 = ssub.s32 2, 1
    %32 = vst [vmem:[%s1] sm:%s31] %v29

// kernel: _lambda_.9
$region0: #{_lambda_.9}
  #allocation0 [shape = 'u32[]', space=smem, size = 0x4, offset = 0x4, fixed_abs, tag = 'smem constant byte address 0x4 - core index']
  #allocation1 [shape = 'u32[72,128]{1,0:T(1,128)}', space=vmem, size = 0x9000, scoped, tag = 'internal scratch']
  %s0 = inlined_call_operand.vmem [shape: bf16[32,288], index: 0, kind: input, shape index: {}]
  %s1 = inlined_call_operand.vmem [shape: bf16[288,128], index: 1, kind: input, shape index: {}]
  %s2 = inlined_call_operand.vmem [shape: f32[32,128], index: 2, kind: output, shape index: {0}]
  %s3 = inlined_call_operand.vmem [shape: f32[1,1,128], index: 3, kind: output, shape index: {1}]
  %s4 = inlined_call_operand.vmem [shape: f32[1,1,128], index: 4, kind: output, shape index: {2}]
  %5 = xla_tuple %s2, %s3, %s4
  %s6 = sld [smem:[#allocation0]]
  $region34: #{_lambda_.9} parent=0
    _
  %s8 = ssub.s32 1, %s6
  %s9 = scalar_select 0, %s8, %s6
  // Predicated region
  $region2: #{_lambda_.9} parent=0 // pred_check
    _
  $region3: #{_lambda_.9} parent=0 // pred_check_branch
    %11 = sbr.rel (0) target = $region5
  $region4: #{_lambda_.9} parent=0 // pred_region
    _
  $region5: #{_lambda_.9} parent=0 // pred_fallthru
    _
  // Predicated region
  $region6: #{_lambda_.9} parent=0 // pred_check
    _
  $region7: #{_lambda_.9} parent=0 // pred_check_branch
    %13 = sbr.rel (0) target = $region9
  $region8: #{_lambda_.9} parent=0 // pred_region
    _
  $region9: #{_lambda_.9} parent=0 // pred_fallthru
    _
  %v15 = vld [vmem:[%s0] sm:$0xff]
  %v16 = vld [vmem:[%s0 + $0x8] sm:$0xf]
  %v17 = vld [vmem:[%s0 + $0xc] sm:$0xff]
  %v18 = vld [vmem:[%s0 + $0x14] sm:$0xf]
  %v19 = vld [vmem:[%s0 + $0x18] sm:$0xff]
  %v20 = vld [vmem:[%s0 + $0x20] sm:$0xf]
  %v21 = vld [vmem:[%s0 + $0x24] sm:$0xff]
  %v22 = vld [vmem:[%s0 + $0x2c] sm:$0xf]
  %v23 = vld [vmem:[%s1] sm:$0xf]
  %v24 = vld [vmem:[%s1 + $0x4] sm:$0xf]
  %v25 = vld [vmem:[%s1 + $0x8] sm:$0xf]
  %v26 = vld [vmem:[%s1 + $0xc] sm:$0xf]
  %v27 = vld [vmem:[%s1 + $0x10] sm:$0xf]
  %v28 = vld [vmem:[%s1 + $0x14] sm:$0xf]
  %v29 = vld [vmem:[%s1 + $0x18] sm:$0xf]
  %v30 = vld [vmem:[%s1 + $0x1c] sm:$0xf]
  %v31 = vld [vmem:[%s1 + $0x20] sm:$0xf]
  %v32 = vld [vmem:[%s1 + $0x24] sm:$0xf]
  %v33 = vld [vmem:[%s1 + $0x28] sm:$0xf]
  %v34 = vld [vmem:[%s1 + $0x2c] sm:$0xf]
  %v35 = vld [vmem:[%s1 + $0x30] sm:$0xf]
  %v36 = vld [vmem:[%s1 + $0x34] sm:$0xf]
  %v37 = vld [vmem:[%s1 + $0x38] sm:$0xf]
  %v38 = vld [vmem:[%s1 + $0x3c] sm:$0xf]
  %v39 = vld [vmem:[%s1 + $0x40] sm:$0xf]
  %v40 = vld [vmem:[%s1 + $0x44] sm:$0xf]
  %v41 = vld [vmem:[%s1 + $0x48] sm:$0xf]
  %v42 = vld [vmem:[%s1 + $0x4c] sm:$0xf]
  %v43 = vld [vmem:[%s1 + $0x50] sm:$0xf]
  %v44 = vld [vmem:[%s1 + $0x54] sm:$0xf]
  %v45 = vld [vmem:[%s1 + $0x58] sm:$0xf]
  %v46 = vld [vmem:[%s1 + $0x5c] sm:$0xf]
  %v47 = vld [vmem:[%s1 + $0x60] sm:$0xf]
  %v48 = vld [vmem:[%s1 + $0x64] sm:$0xf]
  %v49 = vld [vmem:[%s1 + $0x68] sm:$0xf]
  %v50 = vld [vmem:[%s1 + $0x6c] sm:$0xf]
  %v51 = vld [vmem:[%s1 + $0x70] sm:$0xf]
  %v52 = vld [vmem:[%s1 + $0x74] sm:$0xf]
  %v53 = vld [vmem:[%s1 + $0x78] sm:$0xf]
  %v54 = vld [vmem:[%s1 + $0x7c] sm:$0xf]
  %v55 = vld [vmem:[%s1 + $0x80] sm:$0xf]
  %v56 = vld [vmem:[%s1 + $0x84] sm:$0xf]
  %v57 = vld [vmem:[%s1 + $0x88] sm:$0xf]
  %v58 = vld [vmem:[%s1 + $0x8c] sm:$0xf]
  %v67 = vunpack.c.l.b16 %v15
  %v68 = vunpack.c.h.b16 %v15
  %v69 = vunpack.c.l.b16 %v16
  %v70 = vunpack.c.l.b16 %v17
  %v71 = vunpack.c.h.b16 %v17
  %v72 = vunpack.c.l.b16 %v18
  %v73 = vunpack.c.l.b16 %v19
  %v74 = vunpack.c.h.b16 %v19
  %v75 = vunpack.c.l.b16 %v20
  %v76 = vunpack.c.l.b16 %v21
  %v77 = vunpack.c.h.b16 %v21
  %v78 = vunpack.c.l.b16 %v22
  %v79 = vpack.c.b16 %v70, %v67
  %v80 = vpack.c.b16 %v71, %v68
  %v81 = vpack.c.b16 %v72, %v69
  %v82 = vpack.c.b16 %v76, %v73
  %v83 = vpack.c.b16 %v77, %v74
  %v84 = vpack.c.b16 %v78, %v75
  %v125 = vunpack.c.l.b16 %v23
  %v126 = vunpack.c.l.b16 %v24
  %v127 = vunpack.c.l.b16 %v25
  %v128 = vunpack.c.l.b16 %v26
  %v129 = vunpack.c.l.b16 %v27
  %v130 = vunpack.c.l.b16 %v28
  %v131 = vunpack.c.l.b16 %v29
  %v132 = vunpack.c.l.b16 %v30
  %v133 = vunpack.c.l.b16 %v31
  %v134 = vunpack.c.l.b16 %v32
  %v135 = vunpack.c.l.b16 %v33
  %v136 = vunpack.c.l.b16 %v34
  %v137 = vunpack.c.l.b16 %v35
  %v138 = vunpack.c.l.b16 %v36
  %v139 = vunpack.c.l.b16 %v37
  %v140 = vunpack.c.l.b16 %v38
  %v141 = vunpack.c.l.b16 %v39
  %v142 = vunpack.c.l.b16 %v40
  %v143 = vunpack.c.l.b16 %v41
  %v144 = vunpack.c.l.b16 %v42
  %v145 = vunpack.c.l.b16 %v43
  %v146 = vunpack.c.l.b16 %v44
  %v147 = vunpack.c.l.b16 %v45
  %v148 = vunpack.c.l.b16 %v46
  %v149 = vunpack.c.l.b16 %v47
  %v150 = vunpack.c.l.b16 %v48
  %v151 = vunpack.c.l.b16 %v49
  %v152 = vunpack.c.l.b16 %v50
  %v153 = vunpack.c.l.b16 %v51
  %v154 = vunpack.c.l.b16 %v52
  %v155 = vunpack.c.l.b16 %v53
  %v156 = vunpack.c.l.b16 %v54
  %v157 = vunpack.c.l.b16 %v55
  %v158 = vunpack.c.l.b16 %v56
  %v159 = vunpack.c.l.b16 %v57
  %v160 = vunpack.c.l.b16 %v58
  %v161 = vpack.c.b16 %v126, %v125
  %v162 = vpack.c.b16 %v128, %v127
  %v163 = vpack.c.b16 %v130, %v129
  %v164 = vpack.c.b16 %v132, %v131
  %v165 = vpack.c.b16 %v134, %v133
  %v166 = vpack.c.b16 %v136, %v135
  %v167 = vpack.c.b16 %v138, %v137
  %v168 = vpack.c.b16 %v140, %v139
  %v169 = vpack.c.b16 %v142, %v141
  %v170 = vpack.c.b16 %v144, %v143
  %v171 = vpack.c.b16 %v146, %v145
  %v172 = vpack.c.b16 %v148, %v147
  %v173 = vpack.c.b16 %v150, %v149
  %v174 = vpack.c.b16 %v152, %v151
  %v175 = vpack.c.b16 %v154, %v153
  %v176 = vpack.c.b16 %v156, %v155
  %v177 = vpack.c.b16 %v158, %v157
  %v178 = vpack.c.b16 %v160, %v159
  %vm197 = vcmask 261120
  %v199 = vsel %vm197, %v81, 0
  %v202 = vsel %vm197, %v84, 0
  %204 = vmatpush.bf16.msra.mxu0 %v168
  %205 = vmatpush.bf16.msra.mxu0 %v167
  %206 = vmatpush.bf16.msra.mxu0 %v166
  %207 = vmatpush.bf16.msra.mxu0 %v165
  %208 = vmatpush.bf16.msra.mxu0 %v164
  %209 = vmatpush.bf16.msra.mxu0 %v163
  %210 = vmatpush.bf16.msra.mxu0 %v162
  %211 = vmatpush.bf16.msra.mxu0 %v161
  %212 = vmatmul.bf16.gmra.mxu0 %v79
  %v213 = vpop.f32.mrf.mxu0
  %v214 = vadd.f32 0.0, %v213
  %v215 = vpop.f32.mrf.mxu0
  %v216 = vadd.f32 0.0, %v215
  %217 = vmatmul.bf16.gmra.mxu0 %v82
  %v218 = vpop.f32.mrf.mxu0
  %v219 = vadd.f32 0.0, %v218
  %v220 = vpop.f32.mrf.mxu0
  %v221 = vadd.f32 0.0, %v220
  %222 = vdwg.mxu0
  %223 = vmatpush.bf16.msra.mxu0 %v176
  %224 = vmatpush.bf16.msra.mxu0 %v175
  %225 = vmatpush.bf16.msra.mxu0 %v174
  %226 = vmatpush.bf16.msra.mxu0 %v173
  %227 = vmatpush.bf16.msra.mxu0 %v172
  %228 = vmatpush.bf16.msra.mxu0 %v171
  %229 = vmatpush.bf16.msra.mxu0 %v170
  %230 = vmatpush.bf16.msra.mxu0 %v169
  %231 = vmatmul.bf16.gmra.mxu0 %v80
  %v232 = vpop.f32.mrf.mxu0
  %v233 = vadd.f32 %v214, %v232
  %v234 = vpop.f32.mrf.mxu0
  %v235 = vadd.f32 %v216, %v234
  %236 = vmatmul.bf16.gmra.mxu0 %v83
  %v237 = vpop.f32.mrf.mxu0
  %v238 = vadd.f32 %v219, %v237
  %v239 = vpop.f32.mrf.mxu0
  %v240 = vadd.f32 %v221, %v239
  %241 = vdwg.mxu0
  %242 = vmatpush.bf16.msra.mxu0 0
  %243 = vmatpush.bf16.msra.mxu0 0
  %244 = vmatpush.bf16.msra.mxu0 0
  %245 = vmatpush.bf16.msra.mxu0 0
  %246 = vmatpush.bf16.msra.mxu0 0
  %247 = vmatpush.bf16.msra.mxu0 0
  %248 = vmatpush.bf16.msra.mxu0 %v178
  %249 = vmatpush.bf16.msra.mxu0 %v177
  %250 = vmatmul.bf16.gmra.mxu0 %v199
  %v251 = vpop.f32.mrf.mxu0
  %v252 = vadd.f32 %v233, %v251
  %v253 = vpop.f32.mrf.mxu0
  %v254 = vadd.f32 %v235, %v253
  %255 = vmatmul.bf16.gmra.mxu0 %v202
  %v256 = vpop.f32.mrf.mxu0
  %v257 = vadd.f32 %v238, %v256
  %v258 = vpop.f32.mrf.mxu0
  %v259 = vadd.f32 %v240, %v258
  %260 = vdwg.mxu0
  %261 = vst [vmem:[%s2] sm:$0xff] %v252
  %262 = vst [vmem:[%s2 + $0x8] sm:$0xff] %v254
  %263 = vst [vmem:[%s2 + $0x10] sm:$0xff] %v257
  %264 = vst [vmem:[%s2 + $0x18] sm:$0xff] %v259
  %v265 = vadd.f32 %v252, %v254
  %v266 = vadd.f32 %v265, %v257
  %v267 = vadd.f32 %v266, %v259
  %v268 = vrot.slane %v267, 4
  %v269 = vadd.f32 %v267, %v268
  %v270 = vrot.slane %v269, 2
  %v271 = vadd.f32 %v269, %v270
  %v272 = vrot.slane %v271, 1
  %v273 = vadd.f32 %v271, %v272
  %v274 = vmul.f32 %v252, %v252
  %v275 = vmul.f32 %v254, %v254
  %v276 = vmul.f32 %v257, %v257
  %v277 = vmul.f32 %v259, %v259
  %v278 = vadd.f32 %v274, %v275
  %v279 = vadd.f32 %v278, %v276
  %v280 = vadd.f32 %v279, %v277
  %v281 = vrot.slane %v280, 4
  %v282 = vadd.f32 %v280, %v281
  %v283 = vrot.slane %v282, 2
  %v284 = vadd.f32 %v282, %v283
  %v285 = vrot.slane %v284, 1
  %v286 = vadd.f32 %v284, %v285
  %287 = vst [vmem:[%s3] sm:$0x1] %v273
  %288 = vst [vmem:[%s4] sm:$0x1] %v286
  // Predicated region
  $region10: #{_lambda_.9} parent=0 // pred_check
    _
  $region11: #{_lambda_.9} parent=0 // pred_check_branch
    %290 = sbr.rel (0) target = $region13
  $region12: #{_lambda_.9} parent=0 // pred_region
    _
  $region13: #{_lambda_.9} parent=0 // pred_fallthru
    _
  // Predicated region
  $region14: #{_lambda_.9} parent=0 // pred_check
    _
  $region15: #{_lambda_.9} parent=0 // pred_check_branch
    %292 = sbr.rel (0) target = $region17
  $region16: #{_lambda_.9} parent=0 // pred_region
    _
  $region17: #{_lambda_.9} parent=0 // pred_fallthru
    _
  // Predicated region
  $region18: #{_lambda_.9} parent=0 // pred_check
    _
  $region19: #{_lambda_.9} parent=0 // pred_check_branch
    %294 = sbr.rel (0) target = $region21
  $region20: #{_lambda_.9} parent=0 // pred_region
    _
  $region21: #{_lambda_.9} parent=0 // pred_fallthru
    _
  // Predicated region
  $region22: #{_lambda_.9} parent=0 // pred_check
    _
  $region23: #{_lambda_.9} parent=0 // pred_check_branch
    %296 = sbr.rel (0) target = $region25
  $region24: #{_lambda_.9} parent=0 // pred_region
    _
  $region25: #{_lambda_.9} parent=0 // pred_fallthru
    _
  // Predicated region
  $region26: #{_lambda_.9} parent=0 // pred_check
    _
  $region27: #{_lambda_.9} parent=0 // pred_check_branch
    %298 = sbr.rel (0) target = $region29
  $region28: #{_lambda_.9} parent=0 // pred_region
    _
  $region29: #{_lambda_.9} parent=0 // pred_fallthru
    _
  // Predicated region
  $region30: #{_lambda_.9} parent=0 // pred_check
    _
  $region31: #{_lambda_.9} parent=0 // pred_check_branch
    %300 = sbr.rel (0) target = $region33
  $region32: #{_lambda_.9} parent=0 // pred_region
    _
  $region33: #{_lambda_.9} parent=0 // pred_fallthru
    _

// kernel: _lambda_.10
$region0: #{_lambda_.10}
  #allocation0 [shape = 'u32[]', space=smem, size = 0x4, offset = 0x4, fixed_abs, tag = 'smem constant byte address 0x4 - core index']
  #allocation1 [shape = 'u32[72,128]{1,0:T(1,128)}', space=vmem, size = 0x9000, scoped, tag = 'internal scratch']
  %s0 = inlined_call_operand.vmem [shape: f32[32,128], index: 0, kind: input, shape index: {}]
  %s1 = inlined_call_operand.vmem [shape: f32[1,128], index: 1, kind: input, shape index: {}]
  %s2 = inlined_call_operand.vmem [shape: f32[1,128], index: 2, kind: input, shape index: {}]
  %s3 = inlined_call_operand.vmem [shape: bf16[32,128], index: 3, kind: output, shape index: {}]
  %s4 = sld [smem:[#allocation0]]
  $region22: #{_lambda_.10} parent=0
    _
  %s6 = ssub.s32 1, %s4
  %s7 = scalar_select 0, %s6, %s4
  // Predicated region
  $region2: #{_lambda_.10} parent=0 // pred_check
    _
  $region3: #{_lambda_.10} parent=0 // pred_check_branch
    %9 = sbr.rel (0) target = $region5
  $region4: #{_lambda_.10} parent=0 // pred_region
    _
  $region5: #{_lambda_.10} parent=0 // pred_fallthru
    _
  // Predicated region
  $region6: #{_lambda_.10} parent=0 // pred_check
    _
  $region7: #{_lambda_.10} parent=0 // pred_check_branch
    %11 = sbr.rel (0) target = $region9
  $region8: #{_lambda_.10} parent=0 // pred_region
    _
  $region9: #{_lambda_.10} parent=0 // pred_fallthru
    _
  // Predicated region
  $region10: #{_lambda_.10} parent=0 // pred_check
    _
  $region11: #{_lambda_.10} parent=0 // pred_check_branch
    %13 = sbr.rel (0) target = $region13
  $region12: #{_lambda_.10} parent=0 // pred_region
    _
  $region13: #{_lambda_.10} parent=0 // pred_fallthru
    _
  %v14 = vld [vmem:[%s0] sm:$0xff]
  %v15 = vld [vmem:[%s0 + $0x8] sm:$0xff]
  %v16 = vld [vmem:[%s0 + $0x10] sm:$0xff]
  %v17 = vld [vmem:[%s0 + $0x18] sm:$0xff]
  %v18 = vld [vmem:[%s1] sm:$0x1]
  %v20 = vperm.slane %v18, 0
  %v22 = vmul.f32 %v14, %v20
  %v23 = vmul.f32 %v15, %v20
  %v24 = vmul.f32 %v16, %v20
  %v25 = vmul.f32 %v17, %v20
  %v26 = vld [vmem:[%s2] sm:$0x1]
  %v28 = vperm.slane %v26, 0
  %v30 = vadd.f32 %v22, %v28
  %v31 = vadd.f32 %v23, %v28
  %v32 = vadd.f32 %v24, %v28
  %v33 = vadd.f32 %v25, %v28
  %v34 = vmax.f32 %v30, 0.0
  %v35 = vmax.f32 %v31, 0.0
  %v36 = vmax.f32 %v32, 0.0
  %v37 = vmax.f32 %v33, 0.0
  %v38 = vpack.c.bf16 %v34, %v34
  %v39 = vpack.c.bf16 %v35, %v35
  %v40 = vpack.c.bf16 %v36, %v36
  %v41 = vpack.c.bf16 %v37, %v37
  %42 = vst [vmem:[%s3] sm:$0xf] %v38
  %43 = vst [vmem:[%s3 + $0x4] sm:$0xf] %v39
  %44 = vst [vmem:[%s3 + $0x8] sm:$0xf] %v40
  %45 = vst [vmem:[%s3 + $0xc] sm:$0xf] %v41
  // Predicated region
  $region14: #{_lambda_.10} parent=0 // pred_check
    _
  $region15: #{_lambda_.10} parent=0 // pred_check_branch
    %47 = sbr.rel (0) target = $region17
  $region16: #{_lambda_.10} parent=0 // pred_region
    _
  $region17: #{_lambda_.10} parent=0 // pred_fallthru
    _
  // Predicated region
  $region18: #{_lambda_.10} parent=0 // pred_check
    _
  $region19: #{_lambda_.10} parent=0 // pred_check_branch
    %49 = sbr.rel (0) target = $region21
  $region20: #{_lambda_.10} parent=0 // pred_region
    _
  $region21: #{_lambda_.10} parent=0 // pred_fallthru
    _

// kernel: tile.43
$region0: #{tile.43}
  #allocation0 [shape = 's32[1]{0}', space=sflag, size = 0x4, scoped, tag = 'scoped memory for tile.43']
  %s0 = inlined_call_operand.vmem [shape: f32[8], index: 0, kind: input, shape index: {}]
  %s1 = inlined_call_operand.vmem [shape: f32[4,8], index: 1, kind: output, shape index: {}]
  // Predicated region
  $region2: #{tile.43} parent=0 // pred_check
    _
  $region3: #{tile.43} parent=0 // pred_check_branch
    %3 = sbr.rel (0) target = $region5
  $region4: #{tile.43} parent=0 // pred_region
    _
  $region5: #{tile.43} parent=0 // pred_fallthru
    _
  %v4 = vld [vmem:[%s0] ss:$0 sm:$0xff]
  %5 = vst [vmem:[%s1] sm:$0xf] %v4

// kernel: tile.44
$region0: #{tile.44}
  %s0 = inlined_call_operand.vmem [shape: f32[4,8], index: 0, kind: input, shape index: {}]
  %s1 = inlined_call_operand.vmem [shape: f32[1,32], index: 1, kind: output, shape index: {}]
  $region1: #{tile.44} parent=0
    #allocation0 [shape = 'u8[4096]{0}', space=vmem, size = 0x1000, scoped, tag = 'scoped mem for output reshape']
    #allocation1 [shape = 'u8[4096]{0}', space=vmem, size = 0x1000, scoped, tag = 'scoped mem for input reshape']
    %s3 = ssub.s32 16, 1
    %v4 = vld [vmem:[%s0] sm:%s3]
    %5 = vst [vmem:[#allocation1] sm:%s3] %v4
    %v6 = vld [vmem:[#allocation1] sm:$0x1]
    %vm7 = vcmask 64512
    %8 = vst.msk [vmem:[#allocation0] sm:$0x1] %vm7, %v6
    %s9 = scalar_lea.vmem [#allocation1], 3
    %v10 = vld [vmem:[%s9] sm:$0x1]
    %11 = vrot.lane.b32.xlu0 %v10, 24
    %v12 = vpop.permute.xlu0 %11
    %vm13 = vcmask 261312
    %14 = vst.msk [vmem:[#allocation0] sm:$0x1] %vm13, %v12
    %s15 = scalar_lea.vmem [#allocation1], 2
    %v16 = vld [vmem:[%s15] sm:$0x1]
    %17 = vrot.lane.b32.xlu0 %v16, 16
    %v18 = vpop.permute.xlu0 %17
    %vm19 = vcmask 195712
    %20 = vst.msk [vmem:[#allocation0] sm:$0x1] %vm19, %v18
    %s21 = scalar_lea.vmem [#allocation1], 1
    %v22 = vld [vmem:[%s21] sm:$0x1]
    %23 = vrot.lane.b32.xlu0 %v22, 8
    %v24 = vpop.permute.xlu0 %23
    %vm25 = vcmask 130112
    %26 = vst.msk [vmem:[#allocation0] sm:$0x1] %vm25, %v24
    %s28 = ssub.s32 2, 1
    %v29 = vld [vmem:[#allocation0] sm:%s28]
    %s31 = ssub.s32 2, 1
    %32 = vst [vmem:[%s1] sm:%s31] %v29

// kernel: _lambda_.11
$region0: #{_lambda_.11}
  #allocation0 [shape = 'u32[]', space=smem, size = 0x4, offset = 0x4, fixed_abs, tag = 'smem constant byte address 0x4 - core index']
  #allocation1 [shape = 'u32[72,128]{1,0:T(1,128)}', space=vmem, size = 0x9000, scoped, tag = 'internal scratch']
  %s0 = inlined_call_operand.vmem [shape: bf16[128,144], index: 0, kind: input, shape index: {}]
  %s1 = inlined_call_operand.vmem [shape: bf16[144,128], index: 1, kind: input, shape index: {}]
  %s2 = inlined_call_operand.vmem [shape: f32[128,128], index: 2, kind: output, shape index: {0}]
  %s3 = inlined_call_operand.vmem [shape: f32[1,1,128], index: 3, kind: output, shape index: {1}]
  %s4 = inlined_call_operand.vmem [shape: f32[1,1,128], index: 4, kind: output, shape index: {2}]
  %5 = xla_tuple %s2, %s3, %s4
  %s6 = sld [smem:[#allocation0]]
  $region34: #{_lambda_.11} parent=0
    _
  %s8 = ssub.s32 1, %s6
  %s9 = scalar_select 0, %s8, %s6
  // Predicated region
  $region2: #{_lambda_.11} parent=0 // pred_check
    _
  $region3: #{_lambda_.11} parent=0 // pred_check_branch
    %11 = sbr.rel (0) target = $region5
  $region4: #{_lambda_.11} parent=0 // pred_region
    _
  $region5: #{_lambda_.11} parent=0 // pred_fallthru
    _
  // Predicated region
  $region6: #{_lambda_.11} parent=0 // pred_check
    _
  $region7: #{_lambda_.11} parent=0 // pred_check_branch
    %13 = sbr.rel (0) target = $region9
  $region8: #{_lambda_.11} parent=0 // pred_region
    _
  $region9: #{_lambda_.11} parent=0 // pred_fallthru
    _
  %v15 = vld [vmem:[%s0] sm:$0xff]
  %v16 = vld [vmem:[%s0 + $0x8] sm:$0xff]
  %v17 = vld [vmem:[%s0 + $0x10] sm:$0xff]
  %v18 = vld [vmem:[%s0 + $0x18] sm:$0xff]
  %v19 = vld [vmem:[%s0 + $0x20] sm:$0xff]
  %v20 = vld [vmem:[%s0 + $0x28] sm:$0xff]
  %v21 = vld [vmem:[%s0 + $0x30] sm:$0xff]
  %v22 = vld [vmem:[%s0 + $0x38] sm:$0xff]
  %v23 = vld [vmem:[%s0 + $0x40] sm:$0xff]
  %v24 = vld [vmem:[%s0 + $0x48] sm:$0xff]
  %v25 = vld [vmem:[%s0 + $0x50] sm:$0xff]
  %v26 = vld [vmem:[%s0 + $0x58] sm:$0xff]
  %v27 = vld [vmem:[%s0 + $0x60] sm:$0xff]
  %v28 = vld [vmem:[%s0 + $0x68] sm:$0xff]
  %v29 = vld [vmem:[%s0 + $0x70] sm:$0xff]
  %v30 = vld [vmem:[%s0 + $0x78] sm:$0xff]
  %v31 = vld [vmem:[%s1] sm:$0xf]
  %v32 = vld [vmem:[%s1 + $0x4] sm:$0xf]
  %v33 = vld [vmem:[%s1 + $0x8] sm:$0xf]
  %v34 = vld [vmem:[%s1 + $0xc] sm:$0xf]
  %v35 = vld [vmem:[%s1 + $0x10] sm:$0xf]
  %v36 = vld [vmem:[%s1 + $0x14] sm:$0xf]
  %v37 = vld [vmem:[%s1 + $0x18] sm:$0xf]
  %v38 = vld [vmem:[%s1 + $0x1c] sm:$0xf]
  %v39 = vld [vmem:[%s1 + $0x20] sm:$0xf]
  %v40 = vld [vmem:[%s1 + $0x24] sm:$0xf]
  %v41 = vld [vmem:[%s1 + $0x28] sm:$0xf]
  %v42 = vld [vmem:[%s1 + $0x2c] sm:$0xf]
  %v43 = vld [vmem:[%s1 + $0x30] sm:$0xf]
  %v44 = vld [vmem:[%s1 + $0x34] sm:$0xf]
  %v45 = vld [vmem:[%s1 + $0x38] sm:$0xf]
  %v46 = vld [vmem:[%s1 + $0x3c] sm:$0xf]
  %v47 = vld [vmem:[%s1 + $0x40] sm:$0xf]
  %v48 = vld [vmem:[%s1 + $0x44] sm:$0xf]
  %v65 = vunpack.c.l.b16 %v15
  %v66 = vunpack.c.h.b16 %v15
  %v67 = vunpack.c.l.b16 %v16
  %v68 = vunpack.c.h.b16 %v16
  %v69 = vunpack.c.l.b16 %v17
  %v70 = vunpack.c.h.b16 %v17
  %v71 = vunpack.c.l.b16 %v18
  %v72 = vunpack.c.h.b16 %v18
  %v73 = vunpack.c.l.b16 %v19
  %v74 = vunpack.c.h.b16 %v19
  %v75 = vunpack.c.l.b16 %v20
  %v76 = vunpack.c.h.b16 %v20
  %v77 = vunpack.c.l.b16 %v21
  %v78 = vunpack.c.h.b16 %v21
  %v79 = vunpack.c.l.b16 %v22
  %v80 = vunpack.c.h.b16 %v22
  %v81 = vunpack.c.l.b16 %v23
  %v82 = vunpack.c.h.b16 %v23
  %v83 = vunpack.c.l.b16 %v24
  %v84 = vunpack.c.h.b16 %v24
  %v85 = vunpack.c.l.b16 %v25
  %v86 = vunpack.c.h.b16 %v25
  %v87 = vunpack.c.l.b16 %v26
  %v88 = vunpack.c.h.b16 %v26
  %v89 = vunpack.c.l.b16 %v27
  %v90 = vunpack.c.h.b16 %v27
  %v91 = vunpack.c.l.b16 %v28
  %v92 = vunpack.c.h.b16 %v28
  %v93 = vunpack.c.l.b16 %v29
  %v94 = vunpack.c.h.b16 %v29
  %v95 = vunpack.c.l.b16 %v30
  %v96 = vunpack.c.h.b16 %v30
  %v97 = vpack.c.b16 %v67, %v65
  %v98 = vpack.c.b16 %v68, %v66
  %v99 = vpack.c.b16 %v71, %v69
  %v100 = vpack.c.b16 %v72, %v70
  %v101 = vpack.c.b16 %v75, %v73
  %v102 = vpack.c.b16 %v76, %v74
  %v103 = vpack.c.b16 %v79, %v77
  %v104 = vpack.c.b16 %v80, %v78
  %v105 = vpack.c.b16 %v83, %v81
  %v106 = vpack.c.b16 %v84, %v82
  %v107 = vpack.c.b16 %v87, %v85
  %v108 = vpack.c.b16 %v88, %v86
  %v109 = vpack.c.b16 %v91, %v89
  %v110 = vpack.c.b16 %v92, %v90
  %v111 = vpack.c.b16 %v95, %v93
  %v112 = vpack.c.b16 %v96, %v94
  %v139 = vunpack.c.l.b16 %v31
  %v140 = vunpack.c.l.b16 %v32
  %v141 = vunpack.c.l.b16 %v33
  %v142 = vunpack.c.l.b16 %v34
  %v143 = vunpack.c.l.b16 %v35
  %v144 = vunpack.c.l.b16 %v36
  %v145 = vunpack.c.l.b16 %v37
  %v146 = vunpack.c.l.b16 %v38
  %v147 = vunpack.c.l.b16 %v39
  %v148 = vunpack.c.l.b16 %v40
  %v149 = vunpack.c.l.b16 %v41
  %v150 = vunpack.c.l.b16 %v42
  %v151 = vunpack.c.l.b16 %v43
  %v152 = vunpack.c.l.b16 %v44
  %v153 = vunpack.c.l.b16 %v45
  %v154 = vunpack.c.l.b16 %v46
  %v155 = vunpack.c.l.b16 %v47
  %v156 = vunpack.c.l.b16 %v48
  %v157 = vpack.c.b16 %v140, %v139
  %v158 = vpack.c.b16 %v142, %v141
  %v159 = vpack.c.b16 %v144, %v143
  %v160 = vpack.c.b16 %v146, %v145
  %v161 = vpack.c.b16 %v148, %v147
  %v162 = vpack.c.b16 %v150, %v149
  %v163 = vpack.c.b16 %v152, %v151
  %v164 = vpack.c.b16 %v154, %v153
  %v165 = vpack.c.b16 %v156, %v155
  %vm175 = vcmask 130048
  %v177 = vsel %vm175, %v98, 0
  %v180 = vsel %vm175, %v100, 0
  %v183 = vsel %vm175, %v102, 0
  %v186 = vsel %vm175, %v104, 0
  %v189 = vsel %vm175, %v106, 0
  %v192 = vsel %vm175, %v108, 0
  %v195 = vsel %vm175, %v110, 0
  %v198 = vsel %vm175, %v112, 0
  %200 = vmatpush.bf16.msra.mxu0 %v164
  %201 = vmatpush.bf16.msra.mxu0 %v163
  %202 = vmatpush.bf16.msra.mxu0 %v162
  %203 = vmatpush.bf16.msra.mxu0 %v161
  %204 = vmatpush.bf16.msra.mxu0 %v160
  %205 = vmatpush.bf16.msra.mxu0 %v159
  %206 = vmatpush.bf16.msra.mxu0 %v158
  %207 = vmatpush.bf16.msra.mxu0 %v157
  %208 = vmatmul.bf16.gmra.mxu0 %v97
  %v209 = vpop.f32.mrf.mxu0
  %v210 = vadd.f32 0.0, %v209
  %v211 = vpop.f32.mrf.mxu0
  %v212 = vadd.f32 0.0, %v211
  %213 = vmatmul.bf16.gmra.mxu0 %v99
  %v214 = vpop.f32.mrf.mxu0
  %v215 = vadd.f32 0.0, %v214
  %v216 = vpop.f32.mrf.mxu0
  %v217 = vadd.f32 0.0, %v216
  %218 = vmatmul.bf16.gmra.mxu0 %v101
  %v219 = vpop.f32.mrf.mxu0
  %v220 = vadd.f32 0.0, %v219
  %v221 = vpop.f32.mrf.mxu0
  %v222 = vadd.f32 0.0, %v221
  %223 = vmatmul.bf16.gmra.mxu0 %v103
  %v224 = vpop.f32.mrf.mxu0
  %v225 = vadd.f32 0.0, %v224
  %v226 = vpop.f32.mrf.mxu0
  %v227 = vadd.f32 0.0, %v226
  %228 = vmatmul.bf16.gmra.mxu0 %v105
  %v229 = vpop.f32.mrf.mxu0
  %v230 = vadd.f32 0.0, %v229
  %v231 = vpop.f32.mrf.mxu0
  %v232 = vadd.f32 0.0, %v231
  %233 = vmatmul.bf16.gmra.mxu0 %v107
  %v234 = vpop.f32.mrf.mxu0
  %v235 = vadd.f32 0.0, %v234
  %v236 = vpop.f32.mrf.mxu0
  %v237 = vadd.f32 0.0, %v236
  %238 = vmatmul.bf16.gmra.mxu0 %v109
  %v239 = vpop.f32.mrf.mxu0
  %v240 = vadd.f32 0.0, %v239
  %v241 = vpop.f32.mrf.mxu0
  %v242 = vadd.f32 0.0, %v241
  %243 = vmatmul.bf16.gmra.mxu0 %v111
  %v244 = vpop.f32.mrf.mxu0
  %v245 = vadd.f32 0.0, %v244
  %v246 = vpop.f32.mrf.mxu0
  %v247 = vadd.f32 0.0, %v246
  %248 = vdwg.mxu0
  %249 = vmatpush.bf16.msra.mxu0 0
  %250 = vmatpush.bf16.msra.mxu0 0
  %251 = vmatpush.bf16.msra.mxu0 0
  %252 = vmatpush.bf16.msra.mxu0 0
  %253 = vmatpush.bf16.msra.mxu0 0
  %254 = vmatpush.bf16.msra.mxu0 0
  %255 = vmatpush.bf16.msra.mxu0 0
  %256 = vmatpush.bf16.msra.mxu0 %v165
  %257 = vmatmul.bf16.gmra.mxu0 %v177
  %v258 = vpop.f32.mrf.mxu0
  %v259 = vadd.f32 %v210, %v258
  %v260 = vpop.f32.mrf.mxu0
  %v261 = vadd.f32 %v212, %v260
  %262 = vmatmul.bf16.gmra.mxu0 %v180
  %v263 = vpop.f32.mrf.mxu0
  %v264 = vadd.f32 %v215, %v263
  %v265 = vpop.f32.mrf.mxu0
  %v266 = vadd.f32 %v217, %v265
  %267 = vmatmul.bf16.gmra.mxu0 %v183
  %v268 = vpop.f32.mrf.mxu0
  %v269 = vadd.f32 %v220, %v268
  %v270 = vpop.f32.mrf.mxu0
  %v271 = vadd.f32 %v222, %v270
  %272 = vmatmul.bf16.gmra.mxu0 %v186
  %v273 = vpop.f32.mrf.mxu0
  %v274 = vadd.f32 %v225, %v273
  %v275 = vpop.f32.mrf.mxu0
  %v276 = vadd.f32 %v227, %v275
  %277 = vmatmul.bf16.gmra.mxu0 %v189
  %v278 = vpop.f32.mrf.mxu0
  %v279 = vadd.f32 %v230, %v278
  %v280 = vpop.f32.mrf.mxu0
  %v281 = vadd.f32 %v232, %v280
  %282 = vmatmul.bf16.gmra.mxu0 %v192
  %v283 = vpop.f32.mrf.mxu0
  %v284 = vadd.f32 %v235, %v283
  %v285 = vpop.f32.mrf.mxu0
  %v286 = vadd.f32 %v237, %v285
  %287 = vmatmul.bf16.gmra.mxu0 %v195
  %v288 = vpop.f32.mrf.mxu0
  %v289 = vadd.f32 %v240, %v288
  %v290 = vpop.f32.mrf.mxu0
  %v291 = vadd.f32 %v242, %v290
  %292 = vmatmul.bf16.gmra.mxu0 %v198
  %v293 = vpop.f32.mrf.mxu0
  %v294 = vadd.f32 %v245, %v293
  %v295 = vpop.f32.mrf.mxu0
  %v296 = vadd.f32 %v247, %v295
  %297 = vdwg.mxu0
  %298 = vst [vmem:[%s2] sm:$0xff] %v259
  %299 = vst [vmem:[%s2 + $0x8] sm:$0xff] %v261
  %300 = vst [vmem:[%s2 + $0x10] sm:$0xff] %v264
  %301 = vst [vmem:[%s2 + $0x18] sm:$0xff] %v266
  %302 = vst [vmem:[%s2 + $0x20] sm:$0xff] %v269
  %303 = vst [vmem:[%s2 + $0x28] sm:$0xff] %v271
  %304 = vst [vmem:[%s2 + $0x30] sm:$0xff] %v274
  %305 = vst [vmem:[%s2 + $0x38] sm:$0xff] %v276
  %306 = vst [vmem:[%s2 + $0x40] sm:$0xff] %v279
  %307 = vst [vmem:[%s2 + $0x48] sm:$0xff] %v281
  %308 = vst [vmem:[%s2 + $0x50] sm:$0xff] %v284
  %309 = vst [vmem:[%s2 + $0x58] sm:$0xff] %v286
  %310 = vst [vmem:[%s2 + $0x60] sm:$0xff] %v289
  %311 = vst [vmem:[%s2 + $0x68] sm:$0xff] %v291
  %312 = vst [vmem:[%s2 + $0x70] sm:$0xff] %v294
  %313 = vst [vmem:[%s2 + $0x78] sm:$0xff] %v296
  %v314 = vadd.f32 %v259, %v261
  %v315 = vadd.f32 %v314, %v264
  %v316 = vadd.f32 %v315, %v266
  %v317 = vadd.f32 %v316, %v269
  %v318 = vadd.f32 %v317, %v271
  %v319 = vadd.f32 %v318, %v274
  %v320 = vadd.f32 %v319, %v276
  %v321 = vadd.f32 %v320, %v279
  %v322 = vadd.f32 %v321, %v281
  %v323 = vadd.f32 %v322, %v284
  %v324 = vadd.f32 %v323, %v286
  %v325 = vadd.f32 %v324, %v289
  %v326 = vadd.f32 %v325, %v291
  %v327 = vadd.f32 %v326, %v294
  %v328 = vadd.f32 %v327, %v296
  %v329 = vrot.slane %v328, 4
  %v330 = vadd.f32 %v328, %v329
  %v331 = vrot.slane %v330, 2
  %v332 = vadd.f32 %v330, %v331
  %v333 = vrot.slane %v332, 1
  %v334 = vadd.f32 %v332, %v333
  %v335 = vmul.f32 %v259, %v259
  %v336 = vmul.f32 %v261, %v261
  %v337 = vmul.f32 %v264, %v264
  %v338 = vmul.f32 %v266, %v266
  %v339 = vmul.f32 %v269, %v269
  %v340 = vmul.f32 %v271, %v271
  %v341 = vmul.f32 %v274, %v274
  %v342 = vmul.f32 %v276, %v276
  %v343 = vmul.f32 %v279, %v279
  %v344 = vmul.f32 %v281, %v281
  %v345 = vmul.f32 %v284, %v284
  %v346 = vmul.f32 %v286, %v286
  %v347 = vmul.f32 %v289, %v289
  %v348 = vmul.f32 %v291, %v291
  %v349 = vmul.f32 %v294, %v294
  %v350 = vmul.f32 %v296, %v296
  %v351 = vadd.f32 %v335, %v336
  %v352 = vadd.f32 %v351, %v337
  %v353 = vadd.f32 %v352, %v338
  %v354 = vadd.f32 %v353, %v339
  %v355 = vadd.f32 %v354, %v340
  %v356 = vadd.f32 %v355, %v341
  %v357 = vadd.f32 %v356, %v342
  %v358 = vadd.f32 %v357, %v343
  %v359 = vadd.f32 %v358, %v344
  %v360 = vadd.f32 %v359, %v345
  %v361 = vadd.f32 %v360, %v346
  %v362 = vadd.f32 %v361, %v347
  %v363 = vadd.f32 %v362, %v348
  %v364 = vadd.f32 %v363, %v349
  %v365 = vadd.f32 %v364, %v350
  %v366 = vrot.slane %v365, 4
  %v367 = vadd.f32 %v365, %v366
  %v368 = vrot.slane %v367, 2
  %v369 = vadd.f32 %v367, %v368
  %v370 = vrot.slane %v369, 1
  %v371 = vadd.f32 %v369, %v370
  %372 = vst [vmem:[%s3] sm:$0x1] %v334
  %373 = vst [vmem:[%s4] sm:$0x1] %v371
  // Predicated region
  $region10: #{_lambda_.11} parent=0 // pred_check
    _
  $region11: #{_lambda_.11} parent=0 // pred_check_branch
    %375 = sbr.rel (0) target = $region13
  $region12: #{_lambda_.11} parent=0 // pred_region
    _
  $region13: #{_lambda_.11} parent=0 // pred_fallthru
    _
  // Predicated region
  $region14: #{_lambda_.11} parent=0 // pred_check
    _
  $region15: #{_lambda_.11} parent=0 // pred_check_branch
    %377 = sbr.rel (0) target = $region17
  $region16: #{_lambda_.11} parent=0 // pred_region
    _
  $region17: #{_lambda_.11} parent=0 // pred_fallthru
    _
  // Predicated region
  $region18: #{_lambda_.11} parent=0 // pred_check
    _
  $region19: #{_lambda_.11} parent=0 // pred_check_branch
    %379 = sbr.rel (0) target = $region21
  $region20: #{_lambda_.11} parent=0 // pred_region
    _
  $region21: #{_lambda_.11} parent=0 // pred_fallthru
    _
  // Predicated region
  $region22: #{_lambda_.11} parent=0 // pred_check
    _
  $region23: #{_lambda_.11} parent=0 // pred_check_branch
    %381 = sbr.rel (0) target = $region25
  $region24: #{_lambda_.11} parent=0 // pred_region
    _
  $region25: #{_lambda_.11} parent=0 // pred_fallthru
    _
  // Predicated region
  $region26: #{_lambda_.11} parent=0 // pred_check
    _
  $region27: #{_lambda_.11} parent=0 // pred_check_branch
    %383 = sbr.rel (0) target = $region29
  $region28: #{_lambda_.11} parent=0 // pred_region
    _
  $region29: #{_lambda_.11} parent=0 // pred_fallthru
    _
  // Predicated region
  $region30: #{_lambda_.11} parent=0 // pred_check
    _
  $region31: #{_lambda_.11} parent=0 // pred_check_branch
    %385 = sbr.rel (0) target = $region33
  $region32: #{_lambda_.11} parent=0 // pred_region
    _
  $region33: #{_lambda_.11} parent=0 // pred_fallthru
    _

// kernel: _lambda_.12
$region0: #{_lambda_.12}
  #allocation0 [shape = 'u32[]', space=smem, size = 0x4, offset = 0x4, fixed_abs, tag = 'smem constant byte address 0x4 - core index']
  #allocation1 [shape = 'u32[72,128]{1,0:T(1,128)}', space=vmem, size = 0x9000, scoped, tag = 'internal scratch']
  %s0 = inlined_call_operand.vmem [shape: f32[128,128], index: 0, kind: input, shape index: {}]
  %s1 = inlined_call_operand.vmem [shape: f32[1,128], index: 1, kind: input, shape index: {}]
  %s2 = inlined_call_operand.vmem [shape: f32[1,128], index: 2, kind: input, shape index: {}]
  %s3 = inlined_call_operand.vmem [shape: bf16[128,128], index: 3, kind: output, shape index: {}]
  %s4 = sld [smem:[#allocation0]]
  $region22: #{_lambda_.12} parent=0
    _
  %s6 = ssub.s32 1, %s4
  %s7 = scalar_select 0, %s6, %s4
  // Predicated region
  $region2: #{_lambda_.12} parent=0 // pred_check
    _
  $region3: #{_lambda_.12} parent=0 // pred_check_branch
    %9 = sbr.rel (0) target = $region5
  $region4: #{_lambda_.12} parent=0 // pred_region
    _
  $region5: #{_lambda_.12} parent=0 // pred_fallthru
    _
  // Predicated region
  $region6: #{_lambda_.12} parent=0 // pred_check
    _
  $region7: #{_lambda_.12} parent=0 // pred_check_branch
    %11 = sbr.rel (0) target = $region9
  $region8: #{_lambda_.12} parent=0 // pred_region
    _
  $region9: #{_lambda_.12} parent=0 // pred_fallthru
    _
  // Predicated region
  $region10: #{_lambda_.12} parent=0 // pred_check
    _
  $region11: #{_lambda_.12} parent=0 // pred_check_branch
    %13 = sbr.rel (0) target = $region13
  $region12: #{_lambda_.12} parent=0 // pred_region
    _
  $region13: #{_lambda_.12} parent=0 // pred_fallthru
    _
  %v14 = vld [vmem:[%s0] sm:$0xff]
  %v15 = vld [vmem:[%s0 + $0x8] sm:$0xff]
  %v16 = vld [vmem:[%s0 + $0x10] sm:$0xff]
  %v17 = vld [vmem:[%s0 + $0x18] sm:$0xff]
  %v18 = vld [vmem:[%s0 + $0x20] sm:$0xff]
  %v19 = vld [vmem:[%s0 + $0x28] sm:$0xff]
  %v20 = vld [vmem:[%s0 + $0x30] sm:$0xff]
  %v21 = vld [vmem:[%s0 + $0x38] sm:$0xff]
  %v22 = vld [vmem:[%s0 + $0x40] sm:$0xff]
  %v23 = vld [vmem:[%s0 + $0x48] sm:$0xff]
  %v24 = vld [vmem:[%s0 + $0x50] sm:$0xff]
  %v25 = vld [vmem:[%s0 + $0x58] sm:$0xff]
  %v26 = vld [vmem:[%s0 + $0x60] sm:$0xff]
  %v27 = vld [vmem:[%s0 + $0x68] sm:$0xff]
  %v28 = vld [vmem:[%s0 + $0x70] sm:$0xff]
  %v29 = vld [vmem:[%s0 + $0x78] sm:$0xff]
  %v30 = vld [vmem:[%s1] sm:$0x1]
  %v32 = vperm.slane %v30, 0
  %v34 = vmul.f32 %v14, %v32
  %v35 = vmul.f32 %v15, %v32
  %v36 = vmul.f32 %v16, %v32
  %v37 = vmul.f32 %v17, %v32
  %v38 = vmul.f32 %v18, %v32
  %v39 = vmul.f32 %v19, %v32
  %v40 = vmul.f32 %v20, %v32
  %v41 = vmul.f32 %v21, %v32
  %v42 = vmul.f32 %v22, %v32
  %v43 = vmul.f32 %v23, %v32
  %v44 = vmul.f32 %v24, %v32
  %v45 = vmul.f32 %v25, %v32
  %v46 = vmul.f32 %v26, %v32
  %v47 = vmul.f32 %v27, %v32
  %v48 = vmul.f32 %v28, %v32
  %v49 = vmul.f32 %v29, %v32
  %v50 = vld [vmem:[%s2] sm:$0x1]
  %v52 = vperm.slane %v50, 0
  %v54 = vadd.f32 %v34, %v52
  %v55 = vadd.f32 %v35, %v52
  %v56 = vadd.f32 %v36, %v52
  %v57 = vadd.f32 %v37, %v52
  %v58 = vadd.f32 %v38, %v52
  %v59 = vadd.f32 %v39, %v52
  %v60 = vadd.f32 %v40, %v52
  %v61 = vadd.f32 %v41, %v52
  %v62 = vadd.f32 %v42, %v52
  %v63 = vadd.f32 %v43, %v52
  %v64 = vadd.f32 %v44, %v52
  %v65 = vadd.f32 %v45, %v52
  %v66 = vadd.f32 %v46, %v52
  %v67 = vadd.f32 %v47, %v52
  %v68 = vadd.f32 %v48, %v52
  %v69 = vadd.f32 %v49, %v52
  %v70 = vmax.f32 %v54, 0.0
  %v71 = vmax.f32 %v55, 0.0
  %v72 = vmax.f32 %v56, 0.0
  %v73 = vmax.f32 %v57, 0.0
  %v74 = vmax.f32 %v58, 0.0
  %v75 = vmax.f32 %v59, 0.0
  %v76 = vmax.f32 %v60, 0.0
  %v77 = vmax.f32 %v61, 0.0
  %v78 = vmax.f32 %v62, 0.0
  %v79 = vmax.f32 %v63, 0.0
  %v80 = vmax.f32 %v64, 0.0
  %v81 = vmax.f32 %v65, 0.0
  %v82 = vmax.f32 %v66, 0.0
  %v83 = vmax.f32 %v67, 0.0
  %v84 = vmax.f32 %v68, 0.0
  %v85 = vmax.f32 %v69, 0.0
  %v86 = vpack.c.bf16 %v70, %v70
  %v87 = vpack.c.bf16 %v71, %v71
  %v88 = vpack.c.bf16 %v72, %v72
  %v89 = vpack.c.bf16 %v73, %v73
  %v90 = vpack.c.bf16 %v74, %v74
  %v91 = vpack.c.bf16 %v75, %v75
  %v92 = vpack.c.bf16 %v76, %v76
  %v93 = vpack.c.bf16 %v77, %v77
  %v94 = vpack.c.bf16 %v78, %v78
  %v95 = vpack.c.bf16 %v79, %v79
  %v96 = vpack.c.bf16 %v80, %v80
  %v97 = vpack.c.bf16 %v81, %v81
  %v98 = vpack.c.bf16 %v82, %v82
  %v99 = vpack.c.bf16 %v83, %v83
  %v100 = vpack.c.bf16 %v84, %v84
  %v101 = vpack.c.bf16 %v85, %v85
  %102 = vst [vmem:[%s3] sm:$0xf] %v86
  %103 = vst [vmem:[%s3 + $0x4] sm:$0xf] %v87
  %104 = vst [vmem:[%s3 + $0x8] sm:$0xf] %v88
  %105 = vst [vmem:[%s3 + $0xc] sm:$0xf] %v89
  %106 = vst [vmem:[%s3 + $0x10] sm:$0xf] %v90
  %107 = vst [vmem:[%s3 + $0x14] sm:$0xf] %v91
  %108 = vst [vmem:[%s3 + $0x18] sm:$0xf] %v92
  %109 = vst [vmem:[%s3 + $0x1c] sm:$0xf] %v93
  %110 = vst [vmem:[%s3 + $0x20] sm:$0xf] %v94
  %111 = vst [vmem:[%s3 + $0x24] sm:$0xf] %v95
  %112 = vst [vmem:[%s3 + $0x28] sm:$0xf] %v96
  %113 = vst [vmem:[%s3 + $0x2c] sm:$0xf] %v97
  %114 = vst [vmem:[%s3 + $0x30] sm:$0xf] %v98
  %115 = vst [vmem:[%s3 + $0x34] sm:$0xf] %v99
  %116 = vst [vmem:[%s3 + $0x38] sm:$0xf] %v100
  %117 = vst [vmem:[%s3 + $0x3c] sm:$0xf] %v101
  // Predicated region
  $region14: #{_lambda_.12} parent=0 // pred_check
    _
  $region15: #{_lambda_.12} parent=0 // pred_check_branch
    %119 = sbr.rel (0) target = $region17
  $region16: #{_lambda_.12} parent=0 // pred_region
    _
  $region17: #{_lambda_.12} parent=0 // pred_fallthru
    _
  // Predicated region
  $region18: #{_lambda_.12} parent=0 // pred_check
    _
  $region19: #{_lambda_.12} parent=0 // pred_check_branch
    %121 = sbr.rel (0) target = $region21
  $region20: #{_lambda_.12} parent=0 // pred_region
    _
  $region21: #{_lambda_.12} parent=0 // pred_fallthru
    _

// kernel: _lambda_.13
$region0: #{_lambda_.13}
  #allocation0 [shape = 'u32[]', space=smem, size = 0x4, offset = 0x4, fixed_abs, tag = 'smem constant byte address 0x4 - core index']
  #allocation1 [shape = 'u32[72,128]{1,0:T(1,128)}', space=vmem, size = 0x9000, scoped, tag = 'internal scratch']
  %s0 = inlined_call_operand.vmem [shape: bf16[512,72], index: 0, kind: input, shape index: {}]
  %s1 = inlined_call_operand.vmem [shape: bf16[72,128], index: 1, kind: input, shape index: {}]
  %s2 = inlined_call_operand.vmem [shape: f32[512,128], index: 2, kind: output, shape index: {0}]
  %s3 = inlined_call_operand.vmem [shape: f32[1,1,128], index: 3, kind: output, shape index: {1}]
  %s4 = inlined_call_operand.vmem [shape: f32[1,1,128], index: 4, kind: output, shape index: {2}]
  %5 = xla_tuple %s2, %s3, %s4
  %s6 = sld [smem:[#allocation0]]
  $region34: #{_lambda_.13} parent=0
    _
  %s8 = ssub.s32 1, %s6
  %s9 = scalar_select 0, %s8, %s6
  // Predicated region
  $region2: #{_lambda_.13} parent=0 // pred_check
    _
  $region3: #{_lambda_.13} parent=0 // pred_check_branch
    %11 = sbr.rel (0) target = $region5
  $region4: #{_lambda_.13} parent=0 // pred_region
    _
  $region5: #{_lambda_.13} parent=0 // pred_fallthru
    _
  // Predicated region
  $region6: #{_lambda_.13} parent=0 // pred_check
    _
  $region7: #{_lambda_.13} parent=0 // pred_check_branch
    %13 = sbr.rel (0) target = $region9
  $region8: #{_lambda_.13} parent=0 // pred_region
    _
  $region9: #{_lambda_.13} parent=0 // pred_fallthru
    _
  %v15 = vld [vmem:[%s0] sm:$0xf]
  %v16 = vld [vmem:[%s0 + $0x4] sm:$0xf]
  %v17 = vld [vmem:[%s0 + $0x8] sm:$0xf]
  %v18 = vld [vmem:[%s0 + $0xc] sm:$0xf]
  %v19 = vld [vmem:[%s0 + $0x10] sm:$0xf]
  %v20 = vld [vmem:[%s0 + $0x14] sm:$0xf]
  %v21 = vld [vmem:[%s0 + $0x18] sm:$0xf]
  %v22 = vld [vmem:[%s0 + $0x1c] sm:$0xf]
  %v23 = vld [vmem:[%s0 + $0x20] sm:$0xf]
  %v24 = vld [vmem:[%s0 + $0x24] sm:$0xf]
  %v25 = vld [vmem:[%s0 + $0x28] sm:$0xf]
  %v26 = vld [vmem:[%s0 + $0x2c] sm:$0xf]
  %v27 = vld [vmem:[%s0 + $0x30] sm:$0xf]
  %v28 = vld [vmem:[%s0 + $0x34] sm:$0xf]
  %v29 = vld [vmem:[%s0 + $0x38] sm:$0xf]
  %v30 = vld [vmem:[%s0 + $0x3c] sm:$0xf]
  %v31 = vld [vmem:[%s0 + $0x40] sm:$0xf]
  %v32 = vld [vmem:[%s0 + $0x44] sm:$0xf]
  %v33 = vld [vmem:[%s0 + $0x48] sm:$0xf]
  %v34 = vld [vmem:[%s0 + $0x4c] sm:$0xf]
  %v35 = vld [vmem:[%s0 + $0x50] sm:$0xf]
  %v36 = vld [vmem:[%s0 + $0x54] sm:$0xf]
  %v37 = vld [vmem:[%s0 + $0x58] sm:$0xf]
  %v38 = vld [vmem:[%s0 + $0x5c] sm:$0xf]
  %v39 = vld [vmem:[%s0 + $0x60] sm:$0xf]
  %v40 = vld [vmem:[%s0 + $0x64] sm:$0xf]
  %v41 = vld [vmem:[%s0 + $0x68] sm:$0xf]
  %v42 = vld [vmem:[%s0 + $0x6c] sm:$0xf]
  %v43 = vld [vmem:[%s0 + $0x70] sm:$0xf]
  %v44 = vld [vmem:[%s0 + $0x74] sm:$0xf]
  %v45 = vld [vmem:[%s0 + $0x78] sm:$0xf]
  %v46 = vld [vmem:[%s0 + $0x7c] sm:$0xf]
  %v47 = vld [vmem:[%s0 + $0x80] sm:$0xf]
  %v48 = vld [vmem:[%s0 + $0x84] sm:$0xf]
  %v49 = vld [vmem:[%s0 + $0x88] sm:$0xf]
  %v50 = vld [vmem:[%s0 + $0x8c] sm:$0xf]
  %v51 = vld [vmem:[%s0 + $0x90] sm:$0xf]
  %v52 = vld [vmem:[%s0 + $0x94] sm:$0xf]
  %v53 = vld [vmem:[%s0 + $0x98] sm:$0xf]
  %v54 = vld [vmem:[%s0 + $0x9c] sm:$0xf]
  %v55 = vld [vmem:[%s0 + $0xa0] sm:$0xf]
  %v56 = vld [vmem:[%s0 + $0xa4] sm:$0xf]
  %v57 = vld [vmem:[%s0 + $0xa8] sm:$0xf]
  %v58 = vld [vmem:[%s0 + $0xac] sm:$0xf]
  %v59 = vld [vmem:[%s0 + $0xb0] sm:$0xf]
  %v60 = vld [vmem:[%s0 + $0xb4] sm:$0xf]
  %v61 = vld [vmem:[%s0 + $0xb8] sm:$0xf]
  %v62 = vld [vmem:[%s0 + $0xbc] sm:$0xf]
  %v63 = vld [vmem:[%s0 + $0xc0] sm:$0xf]
  %v64 = vld [vmem:[%s0 + $0xc4] sm:$0xf]
  %v65 = vld [vmem:[%s0 + $0xc8] sm:$0xf]
  %v66 = vld [vmem:[%s0 + $0xcc] sm:$0xf]
  %v67 = vld [vmem:[%s0 + $0xd0] sm:$0xf]
  %v68 = vld [vmem:[%s0 + $0xd4] sm:$0xf]
  %v69 = vld [vmem:[%s0 + $0xd8] sm:$0xf]
  %v70 = vld [vmem:[%s0 + $0xdc] sm:$0xf]
  %v71 = vld [vmem:[%s0 + $0xe0] sm:$0xf]
  %v72 = vld [vmem:[%s0 + $0xe4] sm:$0xf]
  %v73 = vld [vmem:[%s0 + $0xe8] sm:$0xf]
  %v74 = vld [vmem:[%s0 + $0xec] sm:$0xf]
  %v75 = vld [vmem:[%s0 + $0xf0] sm:$0xf]
  %v76 = vld [vmem:[%s0 + $0xf4] sm:$0xf]
  %v77 = vld [vmem:[%s0 + $0xf8] sm:$0xf]
  %v78 = vld [vmem:[%s0 + $0xfc] sm:$0xf]
  %v79 = vld [vmem:[%s1] sm:$0xf]
  %v80 = vld [vmem:[%s1 + $0x4] sm:$0xf]
  %v81 = vld [vmem:[%s1 + $0x8] sm:$0xf]
  %v82 = vld [vmem:[%s1 + $0xc] sm:$0xf]
  %v83 = vld [vmem:[%s1 + $0x10] sm:$0xf]
  %v84 = vld [vmem:[%s1 + $0x14] sm:$0xf]
  %v85 = vld [vmem:[%s1 + $0x18] sm:$0xf]
  %v86 = vld [vmem:[%s1 + $0x1c] sm:$0xf]
  %v87 = vld [vmem:[%s1 + $0x20] sm:$0xf]
  %v152 = vunpack.c.l.b16 %v15
  %v153 = vunpack.c.l.b16 %v16
  %v154 = vunpack.c.l.b16 %v17
  %v155 = vunpack.c.l.b16 %v18
  %v156 = vunpack.c.l.b16 %v19
  %v157 = vunpack.c.l.b16 %v20
  %v158 = vunpack.c.l.b16 %v21
  %v159 = vunpack.c.l.b16 %v22
  %v160 = vunpack.c.l.b16 %v23
  %v161 = vunpack.c.l.b16 %v24
  %v162 = vunpack.c.l.b16 %v25
  %v163 = vunpack.c.l.b16 %v26
  %v164 = vunpack.c.l.b16 %v27
  %v165 = vunpack.c.l.b16 %v28
  %v166 = vunpack.c.l.b16 %v29
  %v167 = vunpack.c.l.b16 %v30
  %v168 = vunpack.c.l.b16 %v31
  %v169 = vunpack.c.l.b16 %v32
  %v170 = vunpack.c.l.b16 %v33
  %v171 = vunpack.c.l.b16 %v34
  %v172 = vunpack.c.l.b16 %v35
  %v173 = vunpack.c.l.b16 %v36
  %v174 = vunpack.c.l.b16 %v37
  %v175 = vunpack.c.l.b16 %v38
  %v176 = vunpack.c.l.b16 %v39
  %v177 = vunpack.c.l.b16 %v40
  %v178 = vunpack.c.l.b16 %v41
  %v179 = vunpack.c.l.b16 %v42
  %v180 = vunpack.c.l.b16 %v43
  %v181 = vunpack.c.l.b16 %v44
  %v182 = vunpack.c.l.b16 %v45
  %v183 = vunpack.c.l.b16 %v46
  %v184 = vunpack.c.l.b16 %v47
  %v185 = vunpack.c.l.b16 %v48
  %v186 = vunpack.c.l.b16 %v49
  %v187 = vunpack.c.l.b16 %v50
  %v188 = vunpack.c.l.b16 %v51
  %v189 = vunpack.c.l.b16 %v52
  %v190 = vunpack.c.l.b16 %v53
  %v191 = vunpack.c.l.b16 %v54
  %v192 = vunpack.c.l.b16 %v55
  %v193 = vunpack.c.l.b16 %v56
  %v194 = vunpack.c.l.b16 %v57
  %v195 = vunpack.c.l.b16 %v58
  %v196 = vunpack.c.l.b16 %v59
  %v197 = vunpack.c.l.b16 %v60
  %v198 = vunpack.c.l.b16 %v61
  %v199 = vunpack.c.l.b16 %v62
  %v200 = vunpack.c.l.b16 %v63
  %v201 = vunpack.c.l.b16 %v64
  %v202 = vunpack.c.l.b16 %v65
  %v203 = vunpack.c.l.b16 %v66
  %v204 = vunpack.c.l.b16 %v67
  %v205 = vunpack.c.l.b16 %v68
  %v206 = vunpack.c.l.b16 %v69
  %v207 = vunpack.c.l.b16 %v70
  %v208 = vunpack.c.l.b16 %v71
  %v209 = vunpack.c.l.b16 %v72
  %v210 = vunpack.c.l.b16 %v73
  %v211 = vunpack.c.l.b16 %v74
  %v212 = vunpack.c.l.b16 %v75
  %v213 = vunpack.c.l.b16 %v76
  %v214 = vunpack.c.l.b16 %v77
  %v215 = vunpack.c.l.b16 %v78
  %v216 = vpack.c.b16 %v153, %v152
  %v217 = vpack.c.b16 %v155, %v154
  %v218 = vpack.c.b16 %v157, %v156
  %v219 = vpack.c.b16 %v159, %v158
  %v220 = vpack.c.b16 %v161, %v160
  %v221 = vpack.c.b16 %v163, %v162
  %v222 = vpack.c.b16 %v165, %v164
  %v223 = vpack.c.b16 %v167, %v166
  %v224 = vpack.c.b16 %v169, %v168
  %v225 = vpack.c.b16 %v171, %v170
  %v226 = vpack.c.b16 %v173, %v172
  %v227 = vpack.c.b16 %v175, %v174
  %v228 = vpack.c.b16 %v177, %v176
  %v229 = vpack.c.b16 %v179, %v178
  %v230 = vpack.c.b16 %v181, %v180
  %v231 = vpack.c.b16 %v183, %v182
  %v232 = vpack.c.b16 %v185, %v184
  %v233 = vpack.c.b16 %v187, %v186
  %v234 = vpack.c.b16 %v189, %v188
  %v235 = vpack.c.b16 %v191, %v190
  %v236 = vpack.c.b16 %v193, %v192
  %v237 = vpack.c.b16 %v195, %v194
  %v238 = vpack.c.b16 %v197, %v196
  %v239 = vpack.c.b16 %v199, %v198
  %v240 = vpack.c.b16 %v201, %v200
  %v241 = vpack.c.b16 %v203, %v202
  %v242 = vpack.c.b16 %v205, %v204
  %v243 = vpack.c.b16 %v207, %v206
  %v244 = vpack.c.b16 %v209, %v208
  %v245 = vpack.c.b16 %v211, %v210
  %v246 = vpack.c.b16 %v213, %v212
  %v247 = vpack.c.b16 %v215, %v214
  %v257 = vunpack.c.l.b16 %v79
  %v258 = vunpack.c.l.b16 %v80
  %v259 = vunpack.c.l.b16 %v81
  %v260 = vunpack.c.l.b16 %v82
  %v261 = vunpack.c.l.b16 %v83
  %v262 = vunpack.c.l.b16 %v84
  %v263 = vunpack.c.l.b16 %v85
  %v264 = vunpack.c.l.b16 %v86
  %v265 = vunpack.c.l.b16 %v87
  %v266 = vpack.c.b16 %v258, %v257
  %v267 = vpack.c.b16 %v260, %v259
  %v268 = vpack.c.b16 %v262, %v261
  %v269 = vpack.c.b16 %v264, %v263
  %v270 = vpack.c.b16 %v265, %v265
  %vm275 = vcmask 588800
  %v277 = vsel %vm275, %v216, 0
  %v280 = vsel %vm275, %v217, 0
  %v283 = vsel %vm275, %v218, 0
  %v286 = vsel %vm275, %v219, 0
  %v289 = vsel %vm275, %v220, 0
  %v292 = vsel %vm275, %v221, 0
  %v295 = vsel %vm275, %v222, 0
  %v298 = vsel %vm275, %v223, 0
  %v301 = vsel %vm275, %v224, 0
  %v304 = vsel %vm275, %v225, 0
  %v307 = vsel %vm275, %v226, 0
  %v310 = vsel %vm275, %v227, 0
  %v313 = vsel %vm275, %v228, 0
  %v316 = vsel %vm275, %v229, 0
  %v319 = vsel %vm275, %v230, 0
  %v322 = vsel %vm275, %v231, 0
  %v325 = vsel %vm275, %v232, 0
  %v328 = vsel %vm275, %v233, 0
  %v331 = vsel %vm275, %v234, 0
  %v334 = vsel %vm275, %v235, 0
  %v337 = vsel %vm275, %v236, 0
  %v340 = vsel %vm275, %v237, 0
  %v343 = vsel %vm275, %v238, 0
  %v346 = vsel %vm275, %v239, 0
  %v349 = vsel %vm275, %v240, 0
  %v352 = vsel %vm275, %v241, 0
  %v355 = vsel %vm275, %v242, 0
  %v358 = vsel %vm275, %v243, 0
  %v361 = vsel %vm275, %v244, 0
  %v364 = vsel %vm275, %v245, 0
  %v367 = vsel %vm275, %v246, 0
  %v370 = vsel %vm275, %v247, 0
  %vm372 = vcmask 1043456
  %v374 = vsel %vm372, %v270, 0
  %376 = vmatpush.bf16.msra.mxu0 0
  %377 = vmatpush.bf16.msra.mxu0 0
  %378 = vmatpush.bf16.msra.mxu0 0
  %379 = vmatpush.bf16.msra.mxu0 %v374
  %380 = vmatpush.bf16.msra.mxu0 %v269
  %381 = vmatpush.bf16.msra.mxu0 %v268
  %382 = vmatpush.bf16.msra.mxu0 %v267
  %383 = vmatpush.bf16.msra.mxu0 %v266
  %384 = vmatmul.bf16.gmra.mxu0 %v277
  %v385 = vpop.f32.mrf.mxu0
  %v386 = vadd.f32 0.0, %v385
  %v387 = vpop.f32.mrf.mxu0
  %v388 = vadd.f32 0.0, %v387
  %389 = vmatmul.bf16.gmra.mxu0 %v280
  %v390 = vpop.f32.mrf.mxu0
  %v391 = vadd.f32 0.0, %v390
  %v392 = vpop.f32.mrf.mxu0
  %v393 = vadd.f32 0.0, %v392
  %394 = vmatmul.bf16.gmra.mxu0 %v283
  %v395 = vpop.f32.mrf.mxu0
  %v396 = vadd.f32 0.0, %v395
  %v397 = vpop.f32.mrf.mxu0
  %v398 = vadd.f32 0.0, %v397
  %399 = vmatmul.bf16.gmra.mxu0 %v286
  %v400 = vpop.f32.mrf.mxu0
  %v401 = vadd.f32 0.0, %v400
  %v402 = vpop.f32.mrf.mxu0
  %v403 = vadd.f32 0.0, %v402
  %404 = vmatmul.bf16.gmra.mxu0 %v289
  %v405 = vpop.f32.mrf.mxu0
  %v406 = vadd.f32 0.0, %v405
  %v407 = vpop.f32.mrf.mxu0
  %v408 = vadd.f32 0.0, %v407
  %409 = vmatmul.bf16.gmra.mxu0 %v292
  %v410 = vpop.f32.mrf.mxu0
  %v411 = vadd.f32 0.0, %v410
  %v412 = vpop.f32.mrf.mxu0
  %v413 = vadd.f32 0.0, %v412
  %414 = vmatmul.bf16.gmra.mxu0 %v295
  %v415 = vpop.f32.mrf.mxu0
  %v416 = vadd.f32 0.0, %v415
  %v417 = vpop.f32.mrf.mxu0
  %v418 = vadd.f32 0.0, %v417
  %419 = vmatmul.bf16.gmra.mxu0 %v298
  %v420 = vpop.f32.mrf.mxu0
  %v421 = vadd.f32 0.0, %v420
  %v422 = vpop.f32.mrf.mxu0
  %v423 = vadd.f32 0.0, %v422
  %424 = vmatmul.bf16.gmra.mxu0 %v301
  %v425 = vpop.f32.mrf.mxu0
  %v426 = vadd.f32 0.0, %v425
  %v427 = vpop.f32.mrf.mxu0
  %v428 = vadd.f32 0.0, %v427
  %429 = vmatmul.bf16.gmra.mxu0 %v304
  %v430 = vpop.f32.mrf.mxu0
  %v431 = vadd.f32 0.0, %v430
  %v432 = vpop.f32.mrf.mxu0
  %v433 = vadd.f32 0.0, %v432
  %434 = vmatmul.bf16.gmra.mxu0 %v307
  %v435 = vpop.f32.mrf.mxu0
  %v436 = vadd.f32 0.0, %v435
  %v437 = vpop.f32.mrf.mxu0
  %v438 = vadd.f32 0.0, %v437
  %439 = vmatmul.bf16.gmra.mxu0 %v310
  %v440 = vpop.f32.mrf.mxu0
  %v441 = vadd.f32 0.0, %v440
  %v442 = vpop.f32.mrf.mxu0
  %v443 = vadd.f32 0.0, %v442
  %444 = vmatmul.bf16.gmra.mxu0 %v313
  %v445 = vpop.f32.mrf.mxu0
  %v446 = vadd.f32 0.0, %v445
  %v447 = vpop.f32.mrf.mxu0
  %v448 = vadd.f32 0.0, %v447
  %449 = vmatmul.bf16.gmra.mxu0 %v316
  %v450 = vpop.f32.mrf.mxu0
  %v451 = vadd.f32 0.0, %v450
  %v452 = vpop.f32.mrf.mxu0
  %v453 = vadd.f32 0.0, %v452
  %454 = vmatmul.bf16.gmra.mxu0 %v319
  %v455 = vpop.f32.mrf.mxu0
  %v456 = vadd.f32 0.0, %v455
  %v457 = vpop.f32.mrf.mxu0
  %v458 = vadd.f32 0.0, %v457
  %459 = vmatmul.bf16.gmra.mxu0 %v322
  %v460 = vpop.f32.mrf.mxu0
  %v461 = vadd.f32 0.0, %v460
  %v462 = vpop.f32.mrf.mxu0
  %v463 = vadd.f32 0.0, %v462
  %464 = vmatmul.bf16.gmra.mxu0 %v325
  %v465 = vpop.f32.mrf.mxu0
  %v466 = vadd.f32 0.0, %v465
  %v467 = vpop.f32.mrf.mxu0
  %v468 = vadd.f32 0.0, %v467
  %469 = vmatmul.bf16.gmra.mxu0 %v328
  %v470 = vpop.f32.mrf.mxu0
  %v471 = vadd.f32 0.0, %v470
  %v472 = vpop.f32.mrf.mxu0
  %v473 = vadd.f32 0.0, %v472
  %474 = vmatmul.bf16.gmra.mxu0 %v331
  %v475 = vpop.f32.mrf.mxu0
  %v476 = vadd.f32 0.0, %v475
  %v477 = vpop.f32.mrf.mxu0
  %v478 = vadd.f32 0.0, %v477
  %479 = vmatmul.bf16.gmra.mxu0 %v334
  %v480 = vpop.f32.mrf.mxu0
  %v481 = vadd.f32 0.0, %v480
  %v482 = vpop.f32.mrf.mxu0
  %v483 = vadd.f32 0.0, %v482
  %484 = vmatmul.bf16.gmra.mxu0 %v337
  %v485 = vpop.f32.mrf.mxu0
  %v486 = vadd.f32 0.0, %v485
  %v487 = vpop.f32.mrf.mxu0
  %v488 = vadd.f32 0.0, %v487
  %489 = vmatmul.bf16.gmra.mxu0 %v340
  %v490 = vpop.f32.mrf.mxu0
  %v491 = vadd.f32 0.0, %v490
  %v492 = vpop.f32.mrf.mxu0
  %v493 = vadd.f32 0.0, %v492
  %494 = vmatmul.bf16.gmra.mxu0 %v343
  %v495 = vpop.f32.mrf.mxu0
  %v496 = vadd.f32 0.0, %v495
  %v497 = vpop.f32.mrf.mxu0
  %v498 = vadd.f32 0.0, %v497
  %499 = vmatmul.bf16.gmra.mxu0 %v346
  %v500 = vpop.f32.mrf.mxu0
  %v501 = vadd.f32 0.0, %v500
  %v502 = vpop.f32.mrf.mxu0
  %v503 = vadd.f32 0.0, %v502
  %504 = vmatmul.bf16.gmra.mxu0 %v349
  %v505 = vpop.f32.mrf.mxu0
  %v506 = vadd.f32 0.0, %v505
  %v507 = vpop.f32.mrf.mxu0
  %v508 = vadd.f32 0.0, %v507
  %509 = vmatmul.bf16.gmra.mxu0 %v352
  %v510 = vpop.f32.mrf.mxu0
  %v511 = vadd.f32 0.0, %v510
  %v512 = vpop.f32.mrf.mxu0
  %v513 = vadd.f32 0.0, %v512
  %514 = vmatmul.bf16.gmra.mxu0 %v355
  %v515 = vpop.f32.mrf.mxu0
  %v516 = vadd.f32 0.0, %v515
  %v517 = vpop.f32.mrf.mxu0
  %v518 = vadd.f32 0.0, %v517
  %519 = vmatmul.bf16.gmra.mxu0 %v358
  %v520 = vpop.f32.mrf.mxu0
  %v521 = vadd.f32 0.0, %v520
  %v522 = vpop.f32.mrf.mxu0
  %v523 = vadd.f32 0.0, %v522
  %524 = vmatmul.bf16.gmra.mxu0 %v361
  %v525 = vpop.f32.mrf.mxu0
  %v526 = vadd.f32 0.0, %v525
  %v527 = vpop.f32.mrf.mxu0
  %v528 = vadd.f32 0.0, %v527
  %529 = vmatmul.bf16.gmra.mxu0 %v364
  %v530 = vpop.f32.mrf.mxu0
  %v531 = vadd.f32 0.0, %v530
  %v532 = vpop.f32.mrf.mxu0
  %v533 = vadd.f32 0.0, %v532
  %534 = vmatmul.bf16.gmra.mxu0 %v367
  %v535 = vpop.f32.mrf.mxu0
  %v536 = vadd.f32 0.0, %v535
  %v537 = vpop.f32.mrf.mxu0
  %v538 = vadd.f32 0.0, %v537
  %539 = vmatmul.bf16.gmra.mxu0 %v370
  %v540 = vpop.f32.mrf.mxu0
  %v541 = vadd.f32 0.0, %v540
  %v542 = vpop.f32.mrf.mxu0
  %v543 = vadd.f32 0.0, %v542
  %544 = vdwg.mxu0
  %545 = vst [vmem:[%s2] sm:$0xff] %v386
  %546 = vst [vmem:[%s2 + $0x8] sm:$0xff] %v388
  %547 = vst [vmem:[%s2 + $0x10] sm:$0xff] %v391
  %548 = vst [vmem:[%s2 + $0x18] sm:$0xff] %v393
  %549 = vst [vmem:[%s2 + $0x20] sm:$0xff] %v396
  %550 = vst [vmem:[%s2 + $0x28] sm:$0xff] %v398
  %551 = vst [vmem:[%s2 + $0x30] sm:$0xff] %v401
  %552 = vst [vmem:[%s2 + $0x38] sm:$0xff] %v403
  %553 = vst [vmem:[%s2 + $0x40] sm:$0xff] %v406
  %554 = vst [vmem:[%s2 + $0x48] sm:$0xff] %v408
  %555 = vst [vmem:[%s2 + $0x50] sm:$0xff] %v411
  %556 = vst [vmem:[%s2 + $0x58] sm:$0xff] %v413
  %557 = vst [vmem:[%s2 + $0x60] sm:$0xff] %v416
  %558 = vst [vmem:[%s2 + $0x68] sm:$0xff] %v418
  %559 = vst [vmem:[%s2 + $0x70] sm:$0xff] %v421
  %560 = vst [vmem:[%s2 + $0x78] sm:$0xff] %v423
  %561 = vst [vmem:[%s2 + $0x80] sm:$0xff] %v426
  %562 = vst [vmem:[%s2 + $0x88] sm:$0xff] %v428
  %563 = vst [vmem:[%s2 + $0x90] sm:$0xff] %v431
  %564 = vst [vmem:[%s2 + $0x98] sm:$0xff] %v433
  %565 = vst [vmem:[%s2 + $0xa0] sm:$0xff] %v436
  %566 = vst [vmem:[%s2 + $0xa8] sm:$0xff] %v438
  %567 = vst [vmem:[%s2 + $0xb0] sm:$0xff] %v441
  %568 = vst [vmem:[%s2 + $0xb8] sm:$0xff] %v443
  %569 = vst [vmem:[%s2 + $0xc0] sm:$0xff] %v446
  %570 = vst [vmem:[%s2 + $0xc8] sm:$0xff] %v448
  %571 = vst [vmem:[%s2 + $0xd0] sm:$0xff] %v451
  %572 = vst [vmem:[%s2 + $0xd8] sm:$0xff] %v453
  %573 = vst [vmem:[%s2 + $0xe0] sm:$0xff] %v456
  %574 = vst [vmem:[%s2 + $0xe8] sm:$0xff] %v458
  %575 = vst [vmem:[%s2 + $0xf0] sm:$0xff] %v461
  %576 = vst [vmem:[%s2 + $0xf8] sm:$0xff] %v463
  %577 = vst [vmem:[%s2 + $0x100] sm:$0xff] %v466
  %578 = vst [vmem:[%s2 + $0x108] sm:$0xff] %v468
  %579 = vst [vmem:[%s2 + $0x110] sm:$0xff] %v471
  %580 = vst [vmem:[%s2 + $0x118] sm:$0xff] %v473
  %581 = vst [vmem:[%s2 + $0x120] sm:$0xff] %v476
  %582 = vst [vmem:[%s2 + $0x128] sm:$0xff] %v478
  %583 = vst [vmem:[%s2 + $0x130] sm:$0xff] %v481
  %584 = vst [vmem:[%s2 + $0x138] sm:$0xff] %v483
  %585 = vst [vmem:[%s2 + $0x140] sm:$0xff] %v486
  %586 = vst [vmem:[%s2 + $0x148] sm:$0xff] %v488
  %587 = vst [vmem:[%s2 + $0x150] sm:$0xff] %v491
  %588 = vst [vmem:[%s2 + $0x158] sm:$0xff] %v493
  %589 = vst [vmem:[%s2 + $0x160] sm:$0xff] %v496
  %590 = vst [vmem:[%s2 + $0x168] sm:$0xff] %v498
  %591 = vst [vmem:[%s2 + $0x170] sm:$0xff] %v501
  %592 = vst [vmem:[%s2 + $0x178] sm:$0xff] %v503
  %593 = vst [vmem:[%s2 + $0x180] sm:$0xff] %v506
  %594 = vst [vmem:[%s2 + $0x188] sm:$0xff] %v508
  %595 = vst [vmem:[%s2 + $0x190] sm:$0xff] %v511
  %596 = vst [vmem:[%s2 + $0x198] sm:$0xff] %v513
  %597 = vst [vmem:[%s2 + $0x1a0] sm:$0xff] %v516
  %598 = vst [vmem:[%s2 + $0x1a8] sm:$0xff] %v518
  %599 = vst [vmem:[%s2 + $0x1b0] sm:$0xff] %v521
  %600 = vst [vmem:[%s2 + $0x1b8] sm:$0xff] %v523
  %601 = vst [vmem:[%s2 + $0x1c0] sm:$0xff] %v526
  %602 = vst [vmem:[%s2 + $0x1c8] sm:$0xff] %v528
  %603 = vst [vmem:[%s2 + $0x1d0] sm:$0xff] %v531
  %604 = vst [vmem:[%s2 + $0x1d8] sm:$0xff] %v533
  %605 = vst [vmem:[%s2 + $0x1e0] sm:$0xff] %v536
  %606 = vst [vmem:[%s2 + $0x1e8] sm:$0xff] %v538
  %607 = vst [vmem:[%s2 + $0x1f0] sm:$0xff] %v541
  %608 = vst [vmem:[%s2 + $0x1f8] sm:$0xff] %v543
  %v609 = vadd.f32 %v386, %v388
  %v610 = vadd.f32 %v609, %v391
  %v611 = vadd.f32 %v610, %v393
  %v612 = vadd.f32 %v611, %v396
  %v613 = vadd.f32 %v612, %v398
  %v614 = vadd.f32 %v613, %v401
  %v615 = vadd.f32 %v614, %v403
  %v616 = vadd.f32 %v615, %v406
  %v617 = vadd.f32 %v616, %v408
  %v618 = vadd.f32 %v617, %v411
  %v619 = vadd.f32 %v618, %v413
  %v620 = vadd.f32 %v619, %v416
  %v621 = vadd.f32 %v620, %v418
  %v622 = vadd.f32 %v621, %v421
  %v623 = vadd.f32 %v622, %v423
  %v624 = vadd.f32 %v623, %v426
  %v625 = vadd.f32 %v624, %v428
  %v626 = vadd.f32 %v625, %v431
  %v627 = vadd.f32 %v626, %v433
  %v628 = vadd.f32 %v627, %v436
  %v629 = vadd.f32 %v628, %v438
  %v630 = vadd.f32 %v629, %v441
  %v631 = vadd.f32 %v630, %v443
  %v632 = vadd.f32 %v631, %v446
  %v633 = vadd.f32 %v632, %v448
  %v634 = vadd.f32 %v633, %v451
  %v635 = vadd.f32 %v634, %v453
  %v636 = vadd.f32 %v635, %v456
  %v637 = vadd.f32 %v636, %v458
  %v638 = vadd.f32 %v637, %v461
  %v639 = vadd.f32 %v638, %v463
  %v640 = vadd.f32 %v639, %v466
  %v641 = vadd.f32 %v640, %v468
  %v642 = vadd.f32 %v641, %v471
  %v643 = vadd.f32 %v642, %v473
  %v644 = vadd.f32 %v643, %v476
  %v645 = vadd.f32 %v644, %v478
  %v646 = vadd.f32 %v645, %v481
  %v647 = vadd.f32 %v646, %v483
  %v648 = vadd.f32 %v647, %v486
  %v649 = vadd.f32 %v648, %v488
  %v650 = vadd.f32 %v649, %v491
  %v651 = vadd.f32 %v650, %v493
  %v652 = vadd.f32 %v651, %v496
  %v653 = vadd.f32 %v652, %v498
  %v654 = vadd.f32 %v653, %v501
  %v655 = vadd.f32 %v654, %v503
  %v656 = vadd.f32 %v655, %v506
  %v657 = vadd.f32 %v656, %v508
  %v658 = vadd.f32 %v657, %v511
  %v659 = vadd.f32 %v658, %v513
  %v660 = vadd.f32 %v659, %v516
  %v661 = vadd.f32 %v660, %v518
  %v662 = vadd.f32 %v661, %v521
  %v663 = vadd.f32 %v662, %v523
  %v664 = vadd.f32 %v663, %v526
  %v665 = vadd.f32 %v664, %v528
  %v666 = vadd.f32 %v665, %v531
  %v667 = vadd.f32 %v666, %v533
  %v668 = vadd.f32 %v667, %v536
  %v669 = vadd.f32 %v668, %v538
  %v670 = vadd.f32 %v669, %v541
  %v671 = vadd.f32 %v670, %v543
  %v672 = vrot.slane %v671, 4
  %v673 = vadd.f32 %v671, %v672
  %v674 = vrot.slane %v673, 2
  %v675 = vadd.f32 %v673, %v674
  %v676 = vrot.slane %v675, 1
  %v677 = vadd.f32 %v675, %v676
  %v678 = vmul.f32 %v386, %v386
  %v679 = vmul.f32 %v388, %v388
  %v680 = vmul.f32 %v391, %v391
  %v681 = vmul.f32 %v393, %v393
  %v682 = vmul.f32 %v396, %v396
  %v683 = vmul.f32 %v398, %v398
  %v684 = vmul.f32 %v401, %v401
  %v685 = vmul.f32 %v403, %v403
  %v686 = vmul.f32 %v406, %v406
  %v687 = vmul.f32 %v408, %v408
  %v688 = vmul.f32 %v411, %v411
  %v689 = vmul.f32 %v413, %v413
  %v690 = vmul.f32 %v416, %v416
  %v691 = vmul.f32 %v418, %v418
  %v692 = vmul.f32 %v421, %v421
  %v693 = vmul.f32 %v423, %v423
  %v694 = vmul.f32 %v426, %v426
  %v695 = vmul.f32 %v428, %v428
  %v696 = vmul.f32 %v431, %v431
  %v697 = vmul.f32 %v433, %v433
  %v698 = vmul.f32 %v436, %v436
  %v699 = vmul.f32 %v438, %v438
  %v700 = vmul.f32 %v441, %v441
  %v701 = vmul.f32 %v443, %v443
  %v702 = vmul.f32 %v446, %v446
  %v703 = vmul.f32 %v448, %v448
  %v704 = vmul.f32 %v451, %v451
  %v705 = vmul.f32 %v453, %v453
  %v706 = vmul.f32 %v456, %v456
  %v707 = vmul.f32 %v458, %v458
  %v708 = vmul.f32 %v461, %v461
  %v709 = vmul.f32 %v463, %v463
  %v710 = vmul.f32 %v466, %v466
  %v711 = vmul.f32 %v468, %v468
  %v712 = vmul.f32 %v471, %v471
  %v713 = vmul.f32 %v473, %v473
  %v714 = vmul.f32 %v476, %v476
  %v715 = vmul.f32 %v478, %v478
  %v716 = vmul.f32 %v481, %v481
  %v717 = vmul.f32 %v483, %v483
  %v718 = vmul.f32 %v486, %v486
  %v719 = vmul.f32 %v488, %v488
  %v720 = vmul.f32 %v491, %v491
  %v721 = vmul.f32 %v493, %v493
  %v722 = vmul.f32 %v496, %v496
  %v723 = vmul.f32 %v498, %v498
  %v724 = vmul.f32 %v501, %v501
  %v725 = vmul.f32 %v503, %v503
  %v726 = vmul.f32 %v506, %v506
  %v727 = vmul.f32 %v508, %v508
  %v728 = vmul.f32 %v511, %v511
  %v729 = vmul.f32 %v513, %v513
  %v730 = vmul.f32 %v516, %v516
  %v731 = vmul.f32 %v518, %v518
  %v732 = vmul.f32 %v521, %v521
  %v733 = vmul.f32 %v523, %v523
  %v734 = vmul.f32 %v526, %v526
  %v735 = vmul.f32 %v528, %v528
  %v736 = vmul.f32 %v531, %v531
  %v737 = vmul.f32 %v533, %v533
  %v738 = vmul.f32 %v536, %v536
  %v739 = vmul.f32 %v538, %v538
  %v740 = vmul.f32 %v541, %v541
  %v741 = vmul.f32 %v543, %v543
  %v742 = vadd.f32 %v678, %v679
  %v743 = vadd.f32 %v742, %v680
  %v744 = vadd.f32 %v743, %v681
  %v745 = vadd.f32 %v744, %v682
  %v746 = vadd.f32 %v745, %v683
  %v747 = vadd.f32 %v746, %v684
  %v748 = vadd.f32 %v747, %v685
  %v749 = vadd.f32 %v748, %v686
  %v750 = vadd.f32 %v749, %v687
  %v751 = vadd.f32 %v750, %v688
  %v752 = vadd.f32 %v751, %v689
  %v753 = vadd.f32 %v752, %v690
  %v754 = vadd.f32 %v753, %v691
  %v755 = vadd.f32 %v754, %v692
  %v756 = vadd.f32 %v755, %v693
  %v757 = vadd.f32 %v756, %v694
  %v758 = vadd.f32 %v757, %v695
  %v759 = vadd.f32 %v758, %v696
  %v760 = vadd.f32 %v759, %v697
  %v761 = vadd.f32 %v760, %v698
  %v762 = vadd.f32 %v761, %v699
  %v763 = vadd.f32 %v762, %v700
  %v764 = vadd.f32 %v763, %v701
  %v765 = vadd.f32 %v764, %v702
  %v766 = vadd.f32 %v765, %v703
  %v767 = vadd.f32 %v766, %v704
  %v768 = vadd.f32 %v767, %v705
  %v769 = vadd.f32 %v768, %v706
  %v770 = vadd.f32 %v769, %v707
  %v771 = vadd.f32 %v770, %v708
  %v772 = vadd.f32 %v771, %v709
  %v773 = vadd.f32 %v772, %v710
  %v774 = vadd.f32 %v773, %v711
  %v775 = vadd.f32 %v774, %v712
  %v776 = vadd.f32 %v775, %v713
  %v777 = vadd.f32 %v776, %v714
  %v778 = vadd.f32 %v777, %v715
  %v779 = vadd.f32 %v778, %v716
  %v780 = vadd.f32 %v779, %v717
  %v781 = vadd.f32 %v780, %v718
  %v782 = vadd.f32 %v781, %v719
  %v783 = vadd.f32 %v782, %v720
  %v784 = vadd.f32 %v783, %v721
  %v785 = vadd.f32 %v784, %v722
  %v786 = vadd.f32 %v785, %v723
  %v787 = vadd.f32 %v786, %v724
  %v788 = vadd.f32 %v787, %v725
  %v789 = vadd.f32 %v788, %v726
  %v790 = vadd.f32 %v789, %v727
  %v791 = vadd.f32 %v790, %v728
  %v792 = vadd.f32 %v791, %v729
  %v793 = vadd.f32 %v792, %v730
  %v794 = vadd.f32 %v793, %v731
  %v795 = vadd.f32 %v794, %v732
  %v796 = vadd.f32 %v795, %v733
  %v797 = vadd.f32 %v796, %v734
  %v798 = vadd.f32 %v797, %v735
  %v799 = vadd.f32 %v798, %v736
  %v800 = vadd.f32 %v799, %v737
  %v801 = vadd.f32 %v800, %v738
  %v802 = vadd.f32 %v801, %v739
  %v803 = vadd.f32 %v802, %v740
  %v804 = vadd.f32 %v803, %v741
  %v805 = vrot.slane %v804, 4
  %v806 = vadd.f32 %v804, %v805
  %v807 = vrot.slane %v806, 2
  %v808 = vadd.f32 %v806, %v807
  %v809 = vrot.slane %v808, 1
  %v810 = vadd.f32 %v808, %v809
  %811 = vst [vmem:[%s3] sm:$0x1] %v677
  %812 = vst [vmem:[%s4] sm:$0x1] %v810
  // Predicated region
  $region10: #{_lambda_.13} parent=0 // pred_check
    _
  $region11: #{_lambda_.13} parent=0 // pred_check_branch
    %814 = sbr.rel (0) target = $region13
  $region12: #{_lambda_.13} parent=0 // pred_region
    _
  $region13: #{_lambda_.13} parent=0 // pred_fallthru
    _
  // Predicated region
  $region14: #{_lambda_.13} parent=0 // pred_check
    _
  $region15: #{_lambda_.13} parent=0 // pred_check_branch
    %816 = sbr.rel (0) target = $region17
  $region16: #{_lambda_.13} parent=0 // pred_region
    _
  $region17: #{_lambda_.13} parent=0 // pred_fallthru
    _
  // Predicated region
  $region18: #{_lambda_.13} parent=0 // pred_check
    _
  $region19: #{_lambda_.13} parent=0 // pred_check_branch
    %818 = sbr.rel (0) target = $region21
  $region20: #{_lambda_.13} parent=0 // pred_region
    _
  $region21: #{_lambda_.13} parent=0 // pred_fallthru
    _
  // Predicated region
  $region22: #{_lambda_.13} parent=0 // pred_check
    _
  $region23: #{_lambda_.13} parent=0 // pred_check_branch
    %820 = sbr.rel (0) target = $region25
  $region24: #{_lambda_.13} parent=0 // pred_region
    _
  $region25: #{_lambda_.13} parent=0 // pred_fallthru
    _
  // Predicated region
  $region26: #{_lambda_.13} parent=0 // pred_check
    _
  $region27: #{_lambda_.13} parent=0 // pred_check_branch
    %822 = sbr.rel (0) target = $region29
  $region28: #{_lambda_.13} parent=0 // pred_region
    _
  $region29: #{_lambda_.13} parent=0 // pred_fallthru
    _
  // Predicated region
  $region30: #{_lambda_.13} parent=0 // pred_check
    _
  $region31: #{_lambda_.13} parent=0 // pred_check_branch
    %824 = sbr.rel (0) target = $region33
  $region32: #{_lambda_.13} parent=0 // pred_region
    _
  $region33: #{_lambda_.13} parent=0 // pred_fallthru
    _

// kernel: _lambda_.14
$region0: #{_lambda_.14}
  #allocation0 [shape = 'u32[]', space=smem, size = 0x4, offset = 0x4, fixed_abs, tag = 'smem constant byte address 0x4 - core index']
  #allocation1 [shape = 'u32[72,128]{1,0:T(1,128)}', space=vmem, size = 0x9000, scoped, tag = 'internal scratch']
  %s0 = inlined_call_operand.vmem [shape: f32[512,128], index: 0, kind: input, shape index: {}]
  %s1 = inlined_call_operand.vmem [shape: f32[1,128], index: 1, kind: input, shape index: {}]
  %s2 = inlined_call_operand.vmem [shape: f32[1,128], index: 2, kind: input, shape index: {}]
  %s3 = inlined_call_operand.vmem [shape: bf16[512,128], index: 3, kind: output, shape index: {}]
  %s4 = sld [smem:[#allocation0]]
  $region22: #{_lambda_.14} parent=0
    _
  %s6 = ssub.s32 1, %s4
  %s7 = scalar_select 0, %s6, %s4
  // Predicated region
  $region2: #{_lambda_.14} parent=0 // pred_check
    _
  $region3: #{_lambda_.14} parent=0 // pred_check_branch
    %9 = sbr.rel (0) target = $region5
  $region4: #{_lambda_.14} parent=0 // pred_region
    _
  $region5: #{_lambda_.14} parent=0 // pred_fallthru
    _
  // Predicated region
  $region6: #{_lambda_.14} parent=0 // pred_check
    _
  $region7: #{_lambda_.14} parent=0 // pred_check_branch
    %11 = sbr.rel (0) target = $region9
  $region8: #{_lambda_.14} parent=0 // pred_region
    _
  $region9: #{_lambda_.14} parent=0 // pred_fallthru
    _
  // Predicated region
  $region10: #{_lambda_.14} parent=0 // pred_check
    _
  $region11: #{_lambda_.14} parent=0 // pred_check_branch
    %13 = sbr.rel (0) target = $region13
  $region12: #{_lambda_.14} parent=0 // pred_region
    _
  $region13: #{_lambda_.14} parent=0 // pred_fallthru
    _
  %v14 = vld [vmem:[%s0] sm:$0xff]
  %v15 = vld [vmem:[%s0 + $0x8] sm:$0xff]
  %v16 = vld [vmem:[%s0 + $0x10] sm:$0xff]
  %v17 = vld [vmem:[%s0 + $0x18] sm:$0xff]
  %v18 = vld [vmem:[%s0 + $0x20] sm:$0xff]
  %v19 = vld [vmem:[%s0 + $0x28] sm:$0xff]
  %v20 = vld [vmem:[%s0 + $0x30] sm:$0xff]
  %v21 = vld [vmem:[%s0 + $0x38] sm:$0xff]
  %v22 = vld [vmem:[%s0 + $0x40] sm:$0xff]
  %v23 = vld [vmem:[%s0 + $0x48] sm:$0xff]
  %v24 = vld [vmem:[%s0 + $0x50] sm:$0xff]
  %v25 = vld [vmem:[%s0 + $0x58] sm:$0xff]
  %v26 = vld [vmem:[%s0 + $0x60] sm:$0xff]
  %v27 = vld [vmem:[%s0 + $0x68] sm:$0xff]
  %v28 = vld [vmem:[%s0 + $0x70] sm:$0xff]
  %v29 = vld [vmem:[%s0 + $0x78] sm:$0xff]
  %v30 = vld [vmem:[%s0 + $0x80] sm:$0xff]
  %v31 = vld [vmem:[%s0 + $0x88] sm:$0xff]
  %v32 = vld [vmem:[%s0 + $0x90] sm:$0xff]
  %v33 = vld [vmem:[%s0 + $0x98] sm:$0xff]
  %v34 = vld [vmem:[%s0 + $0xa0] sm:$0xff]
  %v35 = vld [vmem:[%s0 + $0xa8] sm:$0xff]
  %v36 = vld [vmem:[%s0 + $0xb0] sm:$0xff]
  %v37 = vld [vmem:[%s0 + $0xb8] sm:$0xff]
  %v38 = vld [vmem:[%s0 + $0xc0] sm:$0xff]
  %v39 = vld [vmem:[%s0 + $0xc8] sm:$0xff]
  %v40 = vld [vmem:[%s0 + $0xd0] sm:$0xff]
  %v41 = vld [vmem:[%s0 + $0xd8] sm:$0xff]
  %v42 = vld [vmem:[%s0 + $0xe0] sm:$0xff]
  %v43 = vld [vmem:[%s0 + $0xe8] sm:$0xff]
  %v44 = vld [vmem:[%s0 + $0xf0] sm:$0xff]
  %v45 = vld [vmem:[%s0 + $0xf8] sm:$0xff]
  %v46 = vld [vmem:[%s0 + $0x100] sm:$0xff]
  %v47 = vld [vmem:[%s0 + $0x108] sm:$0xff]
  %v48 = vld [vmem:[%s0 + $0x110] sm:$0xff]
  %v49 = vld [vmem:[%s0 + $0x118] sm:$0xff]
  %v50 = vld [vmem:[%s0 + $0x120] sm:$0xff]
  %v51 = vld [vmem:[%s0 + $0x128] sm:$0xff]
  %v52 = vld [vmem:[%s0 + $0x130] sm:$0xff]
  %v53 = vld [vmem:[%s0 + $0x138] sm:$0xff]
  %v54 = vld [vmem:[%s0 + $0x140] sm:$0xff]
  %v55 = vld [vmem:[%s0 + $0x148] sm:$0xff]
  %v56 = vld [vmem:[%s0 + $0x150] sm:$0xff]
  %v57 = vld [vmem:[%s0 + $0x158] sm:$0xff]
  %v58 = vld [vmem:[%s0 + $0x160] sm:$0xff]
  %v59 = vld [vmem:[%s0 + $0x168] sm:$0xff]
  %v60 = vld [vmem:[%s0 + $0x170] sm:$0xff]
  %v61 = vld [vmem:[%s0 + $0x178] sm:$0xff]
  %v62 = vld [vmem:[%s0 + $0x180] sm:$0xff]
  %v63 = vld [vmem:[%s0 + $0x188] sm:$0xff]
  %v64 = vld [vmem:[%s0 + $0x190] sm:$0xff]
  %v65 = vld [vmem:[%s0 + $0x198] sm:$0xff]
  %v66 = vld [vmem:[%s0 + $0x1a0] sm:$0xff]
  %v67 = vld [vmem:[%s0 + $0x1a8] sm:$0xff]
  %v68 = vld [vmem:[%s0 + $0x1b0] sm:$0xff]
  %v69 = vld [vmem:[%s0 + $0x1b8] sm:$0xff]
  %v70 = vld [vmem:[%s0 + $0x1c0] sm:$0xff]
  %v71 = vld [vmem:[%s0 + $0x1c8] sm:$0xff]
  %v72 = vld [vmem:[%s0 + $0x1d0] sm:$0xff]
  %v73 = vld [vmem:[%s0 + $0x1d8] sm:$0xff]
  %v74 = vld [vmem:[%s0 + $0x1e0] sm:$0xff]
  %v75 = vld [vmem:[%s0 + $0x1e8] sm:$0xff]
  %v76 = vld [vmem:[%s0 + $0x1f0] sm:$0xff]
  %v77 = vld [vmem:[%s0 + $0x1f8] sm:$0xff]
  %v78 = vld [vmem:[%s1] sm:$0x1]
  %v80 = vperm.slane %v78, 0
  %v82 = vmul.f32 %v14, %v80
  %v83 = vmul.f32 %v15, %v80
  %v84 = vmul.f32 %v16, %v80
  %v85 = vmul.f32 %v17, %v80
  %v86 = vmul.f32 %v18, %v80
  %v87 = vmul.f32 %v19, %v80
  %v88 = vmul.f32 %v20, %v80
  %v89 = vmul.f32 %v21, %v80
  %v90 = vmul.f32 %v22, %v80
  %v91 = vmul.f32 %v23, %v80
  %v92 = vmul.f32 %v24, %v80
  %v93 = vmul.f32 %v25, %v80
  %v94 = vmul.f32 %v26, %v80
  %v95 = vmul.f32 %v27, %v80
  %v96 = vmul.f32 %v28, %v80
  %v97 = vmul.f32 %v29, %v80
  %v98 = vmul.f32 %v30, %v80
  %v99 = vmul.f32 %v31, %v80
  %v100 = vmul.f32 %v32, %v80
  %v101 = vmul.f32 %v33, %v80
  %v102 = vmul.f32 %v34, %v80
  %v103 = vmul.f32 %v35, %v80
  %v104 = vmul.f32 %v36, %v80
  %v105 = vmul.f32 %v37, %v80
  %v106 = vmul.f32 %v38, %v80
  %v107 = vmul.f32 %v39, %v80
  %v108 = vmul.f32 %v40, %v80
  %v109 = vmul.f32 %v41, %v80
  %v110 = vmul.f32 %v42, %v80
  %v111 = vmul.f32 %v43, %v80
  %v112 = vmul.f32 %v44, %v80
  %v113 = vmul.f32 %v45, %v80
  %v114 = vmul.f32 %v46, %v80
  %v115 = vmul.f32 %v47, %v80
  %v116 = vmul.f32 %v48, %v80
  %v117 = vmul.f32 %v49, %v80
  %v118 = vmul.f32 %v50, %v80
  %v119 = vmul.f32 %v51, %v80
  %v120 = vmul.f32 %v52, %v80
  %v121 = vmul.f32 %v53, %v80
  %v122 = vmul.f32 %v54, %v80
  %v123 = vmul.f32 %v55, %v80
  %v124 = vmul.f32 %v56, %v80
  %v125 = vmul.f32 %v57, %v80
  %v126 = vmul.f32 %v58, %v80
  %v127 = vmul.f32 %v59, %v80
  %v128 = vmul.f32 %v60, %v80
  %v129 = vmul.f32 %v61, %v80
  %v130 = vmul.f32 %v62, %v80
  %v131 = vmul.f32 %v63, %v80
  %v132 = vmul.f32 %v64, %v80
  %v133 = vmul.f32 %v65, %v80
  %v134 = vmul.f32 %v66, %v80
  %v135 = vmul.f32 %v67, %v80
  %v136 = vmul.f32 %v68, %v80
  %v137 = vmul.f32 %v69, %v80
  %v138 = vmul.f32 %v70, %v80
  %v139 = vmul.f32 %v71, %v80
  %v140 = vmul.f32 %v72, %v80
  %v141 = vmul.f32 %v73, %v80
  %v142 = vmul.f32 %v74, %v80
  %v143 = vmul.f32 %v75, %v80
  %v144 = vmul.f32 %v76, %v80
  %v145 = vmul.f32 %v77, %v80
  %v146 = vld [vmem:[%s2] sm:$0x1]
  %v148 = vperm.slane %v146, 0
  %v150 = vadd.f32 %v82, %v148
  %v151 = vadd.f32 %v83, %v148
  %v152 = vadd.f32 %v84, %v148
  %v153 = vadd.f32 %v85, %v148
  %v154 = vadd.f32 %v86, %v148
  %v155 = vadd.f32 %v87, %v148
  %v156 = vadd.f32 %v88, %v148
  %v157 = vadd.f32 %v89, %v148
  %v158 = vadd.f32 %v90, %v148
  %v159 = vadd.f32 %v91, %v148
  %v160 = vadd.f32 %v92, %v148
  %v161 = vadd.f32 %v93, %v148
  %v162 = vadd.f32 %v94, %v148
  %v163 = vadd.f32 %v95, %v148
  %v164 = vadd.f32 %v96, %v148
  %v165 = vadd.f32 %v97, %v148
  %v166 = vadd.f32 %v98, %v148
  %v167 = vadd.f32 %v99, %v148
  %v168 = vadd.f32 %v100, %v148
  %v169 = vadd.f32 %v101, %v148
  %v170 = vadd.f32 %v102, %v148
  %v171 = vadd.f32 %v103, %v148
  %v172 = vadd.f32 %v104, %v148
  %v173 = vadd.f32 %v105, %v148
  %v174 = vadd.f32 %v106, %v148
  %v175 = vadd.f32 %v107, %v148
  %v176 = vadd.f32 %v108, %v148
  %v177 = vadd.f32 %v109, %v148
  %v178 = vadd.f32 %v110, %v148
  %v179 = vadd.f32 %v111, %v148
  %v180 = vadd.f32 %v112, %v148
  %v181 = vadd.f32 %v113, %v148
  %v182 = vadd.f32 %v114, %v148
  %v183 = vadd.f32 %v115, %v148
  %v184 = vadd.f32 %v116, %v148
  %v185 = vadd.f32 %v117, %v148
  %v186 = vadd.f32 %v118, %v148
  %v187 = vadd.f32 %v119, %v148
  %v188 = vadd.f32 %v120, %v148
  %v189 = vadd.f32 %v121, %v148
  %v190 = vadd.f32 %v122, %v148
  %v191 = vadd.f32 %v123, %v148
  %v192 = vadd.f32 %v124, %v148
  %v193 = vadd.f32 %v125, %v148
  %v194 = vadd.f32 %v126, %v148
  %v195 = vadd.f32 %v127, %v148
  %v196 = vadd.f32 %v128, %v148
  %v197 = vadd.f32 %v129, %v148
  %v198 = vadd.f32 %v130, %v148
  %v199 = vadd.f32 %v131, %v148
  %v200 = vadd.f32 %v132, %v148
  %v201 = vadd.f32 %v133, %v148
  %v202 = vadd.f32 %v134, %v148
  %v203 = vadd.f32 %v135, %v148
  %v204 = vadd.f32 %v136, %v148
  %v205 = vadd.f32 %v137, %v148
  %v206 = vadd.f32 %v138, %v148
  %v207 = vadd.f32 %v139, %v148
  %v208 = vadd.f32 %v140, %v148
  %v209 = vadd.f32 %v141, %v148
  %v210 = vadd.f32 %v142, %v148
  %v211 = vadd.f32 %v143, %v148
  %v212 = vadd.f32 %v144, %v148
  %v213 = vadd.f32 %v145, %v148
  %v214 = vmax.f32 %v150, 0.0
  %v215 = vmax.f32 %v151, 0.0
  %v216 = vmax.f32 %v152, 0.0
  %v217 = vmax.f32 %v153, 0.0
  %v218 = vmax.f32 %v154, 0.0
  %v219 = vmax.f32 %v155, 0.0
  %v220 = vmax.f32 %v156, 0.0
  %v221 = vmax.f32 %v157, 0.0
  %v222 = vmax.f32 %v158, 0.0
  %v223 = vmax.f32 %v159, 0.0
  %v224 = vmax.f32 %v160, 0.0
  %v225 = vmax.f32 %v161, 0.0
  %v226 = vmax.f32 %v162, 0.0
  %v227 = vmax.f32 %v163, 0.0
  %v228 = vmax.f32 %v164, 0.0
  %v229 = vmax.f32 %v165, 0.0
  %v230 = vmax.f32 %v166, 0.0
  %v231 = vmax.f32 %v167, 0.0
  %v232 = vmax.f32 %v168, 0.0
  %v233 = vmax.f32 %v169, 0.0
  %v234 = vmax.f32 %v170, 0.0
  %v235 = vmax.f32 %v171, 0.0
  %v236 = vmax.f32 %v172, 0.0
  %v237 = vmax.f32 %v173, 0.0
  %v238 = vmax.f32 %v174, 0.0
  %v239 = vmax.f32 %v175, 0.0
  %v240 = vmax.f32 %v176, 0.0
  %v241 = vmax.f32 %v177, 0.0
  %v242 = vmax.f32 %v178, 0.0
  %v243 = vmax.f32 %v179, 0.0
  %v244 = vmax.f32 %v180, 0.0
  %v245 = vmax.f32 %v181, 0.0
  %v246 = vmax.f32 %v182, 0.0
  %v247 = vmax.f32 %v183, 0.0
  %v248 = vmax.f32 %v184, 0.0
  %v249 = vmax.f32 %v185, 0.0
  %v250 = vmax.f32 %v186, 0.0
  %v251 = vmax.f32 %v187, 0.0
  %v252 = vmax.f32 %v188, 0.0
  %v253 = vmax.f32 %v189, 0.0
  %v254 = vmax.f32 %v190, 0.0
  %v255 = vmax.f32 %v191, 0.0
  %v256 = vmax.f32 %v192, 0.0
  %v257 = vmax.f32 %v193, 0.0
  %v258 = vmax.f32 %v194, 0.0
  %v259 = vmax.f32 %v195, 0.0
  %v260 = vmax.f32 %v196, 0.0
  %v261 = vmax.f32 %v197, 0.0
  %v262 = vmax.f32 %v198, 0.0
  %v263 = vmax.f32 %v199, 0.0
  %v264 = vmax.f32 %v200, 0.0
  %v265 = vmax.f32 %v201, 0.0
  %v266 = vmax.f32 %v202, 0.0
  %v267 = vmax.f32 %v203, 0.0
  %v268 = vmax.f32 %v204, 0.0
  %v269 = vmax.f32 %v205, 0.0
  %v270 = vmax.f32 %v206, 0.0
  %v271 = vmax.f32 %v207, 0.0
  %v272 = vmax.f32 %v208, 0.0
  %v273 = vmax.f32 %v209, 0.0
  %v274 = vmax.f32 %v210, 0.0
  %v275 = vmax.f32 %v211, 0.0
  %v276 = vmax.f32 %v212, 0.0
  %v277 = vmax.f32 %v213, 0.0
  %v278 = vpack.c.bf16 %v214, %v214
  %v279 = vpack.c.bf16 %v215, %v215
  %v280 = vpack.c.bf16 %v216, %v216
  %v281 = vpack.c.bf16 %v217, %v217
  %v282 = vpack.c.bf16 %v218, %v218
  %v283 = vpack.c.bf16 %v219, %v219
  %v284 = vpack.c.bf16 %v220, %v220
  %v285 = vpack.c.bf16 %v221, %v221
  %v286 = vpack.c.bf16 %v222, %v222
  %v287 = vpack.c.bf16 %v223, %v223
  %v288 = vpack.c.bf16 %v224, %v224
  %v289 = vpack.c.bf16 %v225, %v225
  %v290 = vpack.c.bf16 %v226, %v226
  %v291 = vpack.c.bf16 %v227, %v227
  %v292 = vpack.c.bf16 %v228, %v228
  %v293 = vpack.c.bf16 %v229, %v229
  %v294 = vpack.c.bf16 %v230, %v230
  %v295 = vpack.c.bf16 %v231, %v231
  %v296 = vpack.c.bf16 %v232, %v232
  %v297 = vpack.c.bf16 %v233, %v233
  %v298 = vpack.c.bf16 %v234, %v234
  %v299 = vpack.c.bf16 %v235, %v235
  %v300 = vpack.c.bf16 %v236, %v236
  %v301 = vpack.c.bf16 %v237, %v237
  %v302 = vpack.c.bf16 %v238, %v238
  %v303 = vpack.c.bf16 %v239, %v239
  %v304 = vpack.c.bf16 %v240, %v240
  %v305 = vpack.c.bf16 %v241, %v241
  %v306 = vpack.c.bf16 %v242, %v242
  %v307 = vpack.c.bf16 %v243, %v243
  %v308 = vpack.c.bf16 %v244, %v244
  %v309 = vpack.c.bf16 %v245, %v245
  %v310 = vpack.c.bf16 %v246, %v246
  %v311 = vpack.c.bf16 %v247, %v247
  %v312 = vpack.c.bf16 %v248, %v248
  %v313 = vpack.c.bf16 %v249, %v249
  %v314 = vpack.c.bf16 %v250, %v250
  %v315 = vpack.c.bf16 %v251, %v251
  %v316 = vpack.c.bf16 %v252, %v252
  %v317 = vpack.c.bf16 %v253, %v253
  %v318 = vpack.c.bf16 %v254, %v254
  %v319 = vpack.c.bf16 %v255, %v255
  %v320 = vpack.c.bf16 %v256, %v256
  %v321 = vpack.c.bf16 %v257, %v257
  %v322 = vpack.c.bf16 %v258, %v258
  %v323 = vpack.c.bf16 %v259, %v259
  %v324 = vpack.c.bf16 %v260, %v260
  %v325 = vpack.c.bf16 %v261, %v261
  %v326 = vpack.c.bf16 %v262, %v262
  %v327 = vpack.c.bf16 %v263, %v263
  %v328 = vpack.c.bf16 %v264, %v264
  %v329 = vpack.c.bf16 %v265, %v265
  %v330 = vpack.c.bf16 %v266, %v266
  %v331 = vpack.c.bf16 %v267, %v267
  %v332 = vpack.c.bf16 %v268, %v268
  %v333 = vpack.c.bf16 %v269, %v269
  %v334 = vpack.c.bf16 %v270, %v270
  %v335 = vpack.c.bf16 %v271, %v271
  %v336 = vpack.c.bf16 %v272, %v272
  %v337 = vpack.c.bf16 %v273, %v273
  %v338 = vpack.c.bf16 %v274, %v274
  %v339 = vpack.c.bf16 %v275, %v275
  %v340 = vpack.c.bf16 %v276, %v276
  %v341 = vpack.c.bf16 %v277, %v277
  %342 = vst [vmem:[%s3] sm:$0xf] %v278
  %343 = vst [vmem:[%s3 + $0x4] sm:$0xf] %v279
  %344 = vst [vmem:[%s3 + $0x8] sm:$0xf] %v280
  %345 = vst [vmem:[%s3 + $0xc] sm:$0xf] %v281
  %346 = vst [vmem:[%s3 + $0x10] sm:$0xf] %v282
  %347 = vst [vmem:[%s3 + $0x14] sm:$0xf] %v283
  %348 = vst [vmem:[%s3 + $0x18] sm:$0xf] %v284
  %349 = vst [vmem:[%s3 + $0x1c] sm:$0xf] %v285
  %350 = vst [vmem:[%s3 + $0x20] sm:$0xf] %v286
  %351 = vst [vmem:[%s3 + $0x24] sm:$0xf] %v287
  %352 = vst [vmem:[%s3 + $0x28] sm:$0xf] %v288
  %353 = vst [vmem:[%s3 + $0x2c] sm:$0xf] %v289
  %354 = vst [vmem:[%s3 + $0x30] sm:$0xf] %v290
  %355 = vst [vmem:[%s3 + $0x34] sm:$0xf] %v291
  %356 = vst [vmem:[%s3 + $0x38] sm:$0xf] %v292
  %357 = vst [vmem:[%s3 + $0x3c] sm:$0xf] %v293
  %358 = vst [vmem:[%s3 + $0x40] sm:$0xf] %v294
  %359 = vst [vmem:[%s3 + $0x44] sm:$0xf] %v295
  %360 = vst [vmem:[%s3 + $0x48] sm:$0xf] %v296
  %361 = vst [vmem:[%s3 + $0x4c] sm:$0xf] %v297
  %362 = vst [vmem:[%s3 + $0x50] sm:$0xf] %v298
  %363 = vst [vmem:[%s3 + $0x54] sm:$0xf] %v299
  %364 = vst [vmem:[%s3 + $0x58] sm:$0xf] %v300
  %365 = vst [vmem:[%s3 + $0x5c] sm:$0xf] %v301
  %366 = vst [vmem:[%s3 + $0x60] sm:$0xf] %v302
  %367 = vst [vmem:[%s3 + $0x64] sm:$0xf] %v303
  %368 = vst [vmem:[%s3 + $0x68] sm:$0xf] %v304
  %369 = vst [vmem:[%s3 + $0x6c] sm:$0xf] %v305
  %370 = vst [vmem:[%s3 + $0x70] sm:$0xf] %v306
  %371 = vst [vmem:[%s3 + $0x74] sm:$0xf] %v307
  %372 = vst [vmem:[%s3 + $0x78] sm:$0xf] %v308
  %373 = vst [vmem:[%s3 + $0x7c] sm:$0xf] %v309
  %374 = vst [vmem:[%s3 + $0x80] sm:$0xf] %v310
  %375 = vst [vmem:[%s3 + $0x84] sm:$0xf] %v311
  %376 = vst [vmem:[%s3 + $0x88] sm:$0xf] %v312
  %377 = vst [vmem:[%s3 + $0x8c] sm:$0xf] %v313
  %378 = vst [vmem:[%s3 + $0x90] sm:$0xf] %v314
  %379 = vst [vmem:[%s3 + $0x94] sm:$0xf] %v315
  %380 = vst [vmem:[%s3 + $0x98] sm:$0xf] %v316
  %381 = vst [vmem:[%s3 + $0x9c] sm:$0xf] %v317
  %382 = vst [vmem:[%s3 + $0xa0] sm:$0xf] %v318
  %383 = vst [vmem:[%s3 + $0xa4] sm:$0xf] %v319
  %384 = vst [vmem:[%s3 + $0xa8] sm:$0xf] %v320
  %385 = vst [vmem:[%s3 + $0xac] sm:$0xf] %v321
  %386 = vst [vmem:[%s3 + $0xb0] sm:$0xf] %v322
  %387 = vst [vmem:[%s3 + $0xb4] sm:$0xf] %v323
  %388 = vst [vmem:[%s3 + $0xb8] sm:$0xf] %v324
  %389 = vst [vmem:[%s3 + $0xbc] sm:$0xf] %v325
  %390 = vst [vmem:[%s3 + $0xc0] sm:$0xf] %v326
  %391 = vst [vmem:[%s3 + $0xc4] sm:$0xf] %v327
  %392 = vst [vmem:[%s3 + $0xc8] sm:$0xf] %v328
  %393 = vst [vmem:[%s3 + $0xcc] sm:$0xf] %v329
  %394 = vst [vmem:[%s3 + $0xd0] sm:$0xf] %v330
  %395 = vst [vmem:[%s3 + $0xd4] sm:$0xf] %v331
  %396 = vst [vmem:[%s3 + $0xd8] sm:$0xf] %v332
  %397 = vst [vmem:[%s3 + $0xdc] sm:$0xf] %v333
  %398 = vst [vmem:[%s3 + $0xe0] sm:$0xf] %v334
  %399 = vst [vmem:[%s3 + $0xe4] sm:$0xf] %v335
  %400 = vst [vmem:[%s3 + $0xe8] sm:$0xf] %v336
  %401 = vst [vmem:[%s3 + $0xec] sm:$0xf] %v337
  %402 = vst [vmem:[%s3 + $0xf0] sm:$0xf] %v338
  %403 = vst [vmem:[%s3 + $0xf4] sm:$0xf] %v339
  %404 = vst [vmem:[%s3 + $0xf8] sm:$0xf] %v340
  %405 = vst [vmem:[%s3 + $0xfc] sm:$0xf] %v341
  // Predicated region
  $region14: #{_lambda_.14} parent=0 // pred_check
    _
  $region15: #{_lambda_.14} parent=0 // pred_check_branch
    %407 = sbr.rel (0) target = $region17
  $region16: #{_lambda_.14} parent=0 // pred_region
    _
  $region17: #{_lambda_.14} parent=0 // pred_fallthru
    _
  // Predicated region
  $region18: #{_lambda_.14} parent=0 // pred_check
    _
  $region19: #{_lambda_.14} parent=0 // pred_check_branch
    %409 = sbr.rel (0) target = $region21
  $region20: #{_lambda_.14} parent=0 // pred_region
    _
  $region21: #{_lambda_.14} parent=0 // pred_fallthru
    _

// kernel: _lambda_.15
$region0: #{_lambda_.15}
  #allocation0 [shape = 'u32[]', space=smem, size = 0x4, offset = 0x4, fixed_abs, tag = 'smem constant byte address 0x4 - core index']
  #allocation1 [shape = 'u32[72,128]{1,0:T(1,128)}', space=vmem, size = 0x9000, scoped, tag = 'internal scratch']
  %s0 = inlined_call_operand.vmem [shape: bf16[2048,72], index: 0, kind: input, shape index: {}]
  %s1 = inlined_call_operand.vmem [shape: bf16[72,128], index: 1, kind: input, shape index: {}]
  %s2 = inlined_call_operand.vmem [shape: f32[1,128], index: 2, kind: input, shape index: {}]
  %s3 = inlined_call_operand.vmem [shape: f32[2048,128], index: 3, kind: output, shape index: {}]
  %s4 = sld [smem:[#allocation0]]
  $region45: #{_lambda_.15} parent=0
    _
  %s6 = ssub.s32 1, %s4
  %s7 = scalar_select 0, %s6, %s4
  loop: start=0, step=1, limit=6
  $region2: #{_lambda_.15} parent=0 // loop_pre_header
    _
  $region3: #{_lambda_.15} parent=0 // loop_header
    %s9 = sphi 0, %s13
    %p10 = scmp.ge.s32.totalorder %s9, 6
    %s19 = sphi 0, %s21
    %s22 = sphi 0, %s19
    %s23 = sphi 0, %s22
    %s39 = sphi 0, %s23
    %s43 = sphi 0, %s43
    %s45 = sphi 0, %s43
    %s46 = sphi 0, %s45
    %s60 = sphi 0, %s46
    %s64 = sphi 0, %s64
    %s66 = sphi 0, %s64
    %s67 = sphi 0, %s66
    %s81 = sphi 0, %s67
    %s87 = sphi 0, %s89
    %s90 = sphi 0, %s87
    %s91 = sphi 0, %s90
    %s107 = sphi 0, %s91
  $region4: #{_lambda_.15} parent=0 // loop_header_branch
    %12 = sbr.rel (%p10) target = $region8
  $region5: #{_lambda_.15} parent=0 // loop_body
    %s14 = ssub.s32 %s9, 1
    %s15 = ssub.s32 %s9, 2
    %s16 = sadd.s32 %s9, 1
    %s17 = ssub.s32 %s9, %s16
    %p18 = scmp.eq.s32.totalorder %s17, 0
    %s20 = sadd.s32 %s19, 1
    %s21 = scalar_select %p18, %s19, %s20
    %p24 = pneg %p18
    %p25 = scmp.eq.s32.totalorder %s9, 3
    %p26 = por %p24, %p25
    %p27 = scmp.ne.s32.totalorder %s19, %s22
    %p28 = scmp.eq.s32.totalorder %s9, 0
    %p29 = por %p27, %p28
    %p30 = scmp.ne.s32.totalorder %s19, %s22
    %p31 = scmp.eq.s32.totalorder %s14, 3
    %p32 = por %p30, %p31
    %p33 = scmp.ne.s32.totalorder %s22, %s23
    %p34 = scmp.eq.s32.totalorder %s14, 0
    %p35 = por %p33, %p34
    %p36 = scmp.ne.s32.totalorder %s22, %s23
    %p37 = scmp.eq.s32.totalorder %s15, 3
    %p38 = por %p36, %p37
    %p40 = scmp.ne.s32.totalorder %s23, %s39
    %p41 = scmp.eq.s32.totalorder %s15, 0
    %p42 = por %p40, %p41
    %s44 = sadd.s32 %s43, 1
    %p47 = scmp.eq.s32.totalorder %s9, 3
    %p48 = scmp.ne.s32.totalorder %s43, %s45
    %p49 = scmp.eq.s32.totalorder %s9, 0
    %p50 = por %p48, %p49
    %p51 = scmp.ne.s32.totalorder %s43, %s45
    %p52 = scmp.eq.s32.totalorder %s14, 3
    %p53 = por %p51, %p52
    %p54 = scmp.ne.s32.totalorder %s45, %s46
    %p55 = scmp.eq.s32.totalorder %s14, 0
    %p56 = por %p54, %p55
    %p57 = scmp.ne.s32.totalorder %s45, %s46
    %p58 = scmp.eq.s32.totalorder %s15, 3
    %p59 = por %p57, %p58
    %p61 = scmp.ne.s32.totalorder %s46, %s60
    %p62 = scmp.eq.s32.totalorder %s15, 0
    %p63 = por %p61, %p62
    %s65 = sadd.s32 %s64, 1
    %p68 = scmp.eq.s32.totalorder %s9, 3
    %p69 = scmp.ne.s32.totalorder %s64, %s66
    %p70 = scmp.eq.s32.totalorder %s9, 0
    %p71 = por %p69, %p70
    %p72 = scmp.ne.s32.totalorder %s64, %s66
    %p73 = scmp.eq.s32.totalorder %s14, 3
    %p74 = por %p72, %p73
    %p75 = scmp.ne.s32.totalorder %s66, %s67
    %p76 = scmp.eq.s32.totalorder %s14, 0
    %p77 = por %p75, %p76
    %p78 = scmp.ne.s32.totalorder %s66, %s67
    %p79 = scmp.eq.s32.totalorder %s15, 3
    %p80 = por %p78, %p79
    %p82 = scmp.ne.s32.totalorder %s67, %s81
    %p83 = scmp.eq.s32.totalorder %s15, 0
    %p84 = por %p82, %p83
    %s85 = ssub.s32 %s9, %s16
    %p86 = scmp.eq.s32.totalorder %s85, 0
    %s88 = sadd.s32 %s87, 1
    %s89 = scalar_select %p86, %s87, %s88
    %p92 = pneg %p86
    %p93 = scmp.eq.s32.totalorder %s9, 3
    %p94 = por %p92, %p93
    %p95 = scmp.ne.s32.totalorder %s87, %s90
    %p96 = scmp.eq.s32.totalorder %s9, 0
    %p97 = por %p95, %p96
    %p98 = scmp.ne.s32.totalorder %s87, %s90
    %p99 = scmp.eq.s32.totalorder %s14, 3
    %p100 = por %p98, %p99
    %p101 = scmp.ne.s32.totalorder %s90, %s91
    %p102 = scmp.eq.s32.totalorder %s14, 0
    %p103 = por %p101, %p102
    %p104 = scmp.ne.s32.totalorder %s90, %s91
    %p105 = scmp.eq.s32.totalorder %s15, 3
    %p106 = por %p104, %p105
    %p108 = scmp.ne.s32.totalorder %s91, %s107
    %p109 = scmp.eq.s32.totalorder %s15, 0
    %p110 = por %p108, %p109
    %p111 = scmp.le.s32.totalorder 1, %s9
    %p112 = scmp.lt.s32.totalorder %s9, 5
    %p113 = pnand %p111, %p112
    %p114 = pneg %p113
    // Predicated region
    $region9: #{_lambda_.15} parent=5 // pred_check
      _
    $region10: #{_lambda_.15} parent=5 // pred_check_branch
      %116 = sbr.rel (%p113) target = $region12
    $region11: #{_lambda_.15} parent=5 // pred_region
      %s117 = ssub.s32 %s9, 1
      // Predicated region
      $region13: #{_lambda_.15} parent=11 // pred_check
        %p118 = pneg %p56
      $region14: #{_lambda_.15} parent=11 // pred_check_branch
        %120 = sbr.rel (%p118) target = $region16
      $region15: #{_lambda_.15} parent=11 // pred_region
        _
      $region16: #{_lambda_.15} parent=11 // pred_fallthru
        _
      // Predicated region
      $region17: #{_lambda_.15} parent=11 // pred_check
        %p121 = pneg %p77
      $region18: #{_lambda_.15} parent=11 // pred_check_branch
        %123 = sbr.rel (%p121) target = $region20
      $region19: #{_lambda_.15} parent=11 // pred_region
        _
      $region20: #{_lambda_.15} parent=11 // pred_fallthru
        _
    $region12: #{_lambda_.15} parent=5 // pred_fallthru
      _
    %p124 = scmp.lt.s32.totalorder %s9, 4
    // Predicated region
    $region21: #{_lambda_.15} parent=5 // pred_check
      %p125 = pneg %p124
    $region22: #{_lambda_.15} parent=5 // pred_check_branch
      %127 = sbr.rel (%p125) target = $region24
    $region23: #{_lambda_.15} parent=5 // pred_region
      // Predicated region
      $region25: #{_lambda_.15} parent=23 // pred_check
        %p128 = pneg %p29
      $region26: #{_lambda_.15} parent=23 // pred_check_branch
        %130 = sbr.rel (%p128) target = $region28
      $region27: #{_lambda_.15} parent=23 // pred_region
        %s131 = smul.u32 64, %s9
        %p132 = scmp.lt.s32.totalorder %s131, 255
        %s133 = scalar_select %p132, %s131, 255
        %s134 = smul.addr %s133, 4
        %s135 = scalar_lea.vmem %s0, %s134
        %s136 = smul.u32 64, %s9
      $region28: #{_lambda_.15} parent=23 // pred_fallthru
        _
    $region24: #{_lambda_.15} parent=5 // pred_fallthru
      _
    %p137 = scmp.le.s32.totalorder 1, %s9
    %p138 = scmp.lt.s32.totalorder %s9, 5
    %p139 = pnand %p137, %p138
    %p140 = pneg %p139
    // Predicated region
    $region29: #{_lambda_.15} parent=5 // pred_check
      _
    $region30: #{_lambda_.15} parent=5 // pred_check_branch
      %142 = sbr.rel (%p139) target = $region32
    $region31: #{_lambda_.15} parent=5 // pred_region
      %s143 = ssub.s32 %s9, 1
      %s144 = smul.u32 64, %s14
      %p145 = scmp.lt.s32.totalorder %s144, 255
      %s146 = scalar_select %p145, %s144, 255
      %s147 = smul.addr %s146, 4
      %s148 = scalar_lea.vmem %s0, %s147
      %p149 = pneg %p35
      %p150 = pneg %p32
      %p151 = pneg %p56
      %p152 = pneg %p53
      %p153 = pneg %p77
      %p154 = pneg %p74
      %p155 = pneg %p103
      %p156 = pneg %p100
      %s157 = smul.u32 64, %s14
      %p158 = scmp.lt.s32.totalorder %s157, 255
      %s159 = scalar_select %p158, %s157, 255
      %s160 = smul.addr %s159, 8
      %s161 = scalar_lea.vmem %s3, %s160
      %s162 = smul.u32 64, %s14
      %p163 = scmp.lt.s32.totalorder %s162, 255
      %s164 = scalar_select %p163, %s162, 255
      %s165 = smul.addr %s164, 4
      %s166 = scalar_lea.vmem %s0, %s165
      %s167 = smul.u32 64, %s14
      %s168 = smul.u32 64, %s14
      %p169 = scmp.lt.s32.totalorder %s168, 255
      %s170 = scalar_select %p169, %s168, 255
      %s171 = smul.addr %s170, 8
      %s172 = scalar_lea.vmem %s3, %s171
      %s173 = smul.u32 64, %s14
      %v175 = vld [vmem:[%s166] sm:$0xf]
      %v176 = vld [vmem:[%s166 + $0x4] sm:$0xf]
      %v177 = vld [vmem:[%s166 + $0x8] sm:$0xf]
      %v178 = vld [vmem:[%s166 + $0xc] sm:$0xf]
      %v179 = vld [vmem:[%s166 + $0x10] sm:$0xf]
      %v180 = vld [vmem:[%s166 + $0x14] sm:$0xf]
      %v181 = vld [vmem:[%s166 + $0x18] sm:$0xf]
      %v182 = vld [vmem:[%s166 + $0x1c] sm:$0xf]
      %v183 = vld [vmem:[%s166 + $0x20] sm:$0xf]
      %v184 = vld [vmem:[%s166 + $0x24] sm:$0xf]
      %v185 = vld [vmem:[%s166 + $0x28] sm:$0xf]
      %v186 = vld [vmem:[%s166 + $0x2c] sm:$0xf]
      %v187 = vld [vmem:[%s166 + $0x30] sm:$0xf]
      %v188 = vld [vmem:[%s166 + $0x34] sm:$0xf]
      %v189 = vld [vmem:[%s166 + $0x38] sm:$0xf]
      %v190 = vld [vmem:[%s166 + $0x3c] sm:$0xf]
      %v191 = vld [vmem:[%s166 + $0x40] sm:$0xf]
      %v192 = vld [vmem:[%s166 + $0x44] sm:$0xf]
      %v193 = vld [vmem:[%s166 + $0x48] sm:$0xf]
      %v194 = vld [vmem:[%s166 + $0x4c] sm:$0xf]
      %v195 = vld [vmem:[%s166 + $0x50] sm:$0xf]
      %v196 = vld [vmem:[%s166 + $0x54] sm:$0xf]
      %v197 = vld [vmem:[%s166 + $0x58] sm:$0xf]
      %v198 = vld [vmem:[%s166 + $0x5c] sm:$0xf]
      %v199 = vld [vmem:[%s166 + $0x60] sm:$0xf]
      %v200 = vld [vmem:[%s166 + $0x64] sm:$0xf]
      %v201 = vld [vmem:[%s166 + $0x68] sm:$0xf]
      %v202 = vld [vmem:[%s166 + $0x6c] sm:$0xf]
      %v203 = vld [vmem:[%s166 + $0x70] sm:$0xf]
      %v204 = vld [vmem:[%s166 + $0x74] sm:$0xf]
      %v205 = vld [vmem:[%s166 + $0x78] sm:$0xf]
      %v206 = vld [vmem:[%s166 + $0x7c] sm:$0xf]
      %v207 = vld [vmem:[%s166 + $0x80] sm:$0xf]
      %v208 = vld [vmem:[%s166 + $0x84] sm:$0xf]
      %v209 = vld [vmem:[%s166 + $0x88] sm:$0xf]
      %v210 = vld [vmem:[%s166 + $0x8c] sm:$0xf]
      %v211 = vld [vmem:[%s166 + $0x90] sm:$0xf]
      %v212 = vld [vmem:[%s166 + $0x94] sm:$0xf]
      %v213 = vld [vmem:[%s166 + $0x98] sm:$0xf]
      %v214 = vld [vmem:[%s166 + $0x9c] sm:$0xf]
      %v215 = vld [vmem:[%s166 + $0xa0] sm:$0xf]
      %v216 = vld [vmem:[%s166 + $0xa4] sm:$0xf]
      %v217 = vld [vmem:[%s166 + $0xa8] sm:$0xf]
      %v218 = vld [vmem:[%s166 + $0xac] sm:$0xf]
      %v219 = vld [vmem:[%s166 + $0xb0] sm:$0xf]
      %v220 = vld [vmem:[%s166 + $0xb4] sm:$0xf]
      %v221 = vld [vmem:[%s166 + $0xb8] sm:$0xf]
      %v222 = vld [vmem:[%s166 + $0xbc] sm:$0xf]
      %v223 = vld [vmem:[%s166 + $0xc0] sm:$0xf]
      %v224 = vld [vmem:[%s166 + $0xc4] sm:$0xf]
      %v225 = vld [vmem:[%s166 + $0xc8] sm:$0xf]
      %v226 = vld [vmem:[%s166 + $0xcc] sm:$0xf]
      %v227 = vld [vmem:[%s166 + $0xd0] sm:$0xf]
      %v228 = vld [vmem:[%s166 + $0xd4] sm:$0xf]
      %v229 = vld [vmem:[%s166 + $0xd8] sm:$0xf]
      %v230 = vld [vmem:[%s166 + $0xdc] sm:$0xf]
      %v231 = vld [vmem:[%s166 + $0xe0] sm:$0xf]
      %v232 = vld [vmem:[%s166 + $0xe4] sm:$0xf]
      %v233 = vld [vmem:[%s166 + $0xe8] sm:$0xf]
      %v234 = vld [vmem:[%s166 + $0xec] sm:$0xf]
      %v235 = vld [vmem:[%s166 + $0xf0] sm:$0xf]
      %v236 = vld [vmem:[%s166 + $0xf4] sm:$0xf]
      %v237 = vld [vmem:[%s166 + $0xf8] sm:$0xf]
      %v238 = vld [vmem:[%s166 + $0xfc] sm:$0xf]
      %v239 = vld [vmem:[%s1] sm:$0xf]
      %v240 = vld [vmem:[%s1 + $0x4] sm:$0xf]
      %v241 = vld [vmem:[%s1 + $0x8] sm:$0xf]
      %v242 = vld [vmem:[%s1 + $0xc] sm:$0xf]
      %v243 = vld [vmem:[%s1 + $0x10] sm:$0xf]
      %v244 = vld [vmem:[%s1 + $0x14] sm:$0xf]
      %v245 = vld [vmem:[%s1 + $0x18] sm:$0xf]
      %v246 = vld [vmem:[%s1 + $0x1c] sm:$0xf]
      %v247 = vld [vmem:[%s1 + $0x20] sm:$0xf]
      %v248 = vld [vmem:[%s2] sm:$0x1]
      %v250 = vperm.slane %v248, 0
      %v316 = vunpack.c.l.b16 %v175
      %v317 = vunpack.c.l.b16 %v176
      %v318 = vunpack.c.l.b16 %v177
      %v319 = vunpack.c.l.b16 %v178
      %v320 = vunpack.c.l.b16 %v179
      %v321 = vunpack.c.l.b16 %v180
      %v322 = vunpack.c.l.b16 %v181
      %v323 = vunpack.c.l.b16 %v182
      %v324 = vunpack.c.l.b16 %v183
      %v325 = vunpack.c.l.b16 %v184
      %v326 = vunpack.c.l.b16 %v185
      %v327 = vunpack.c.l.b16 %v186
      %v328 = vunpack.c.l.b16 %v187
      %v329 = vunpack.c.l.b16 %v188
      %v330 = vunpack.c.l.b16 %v189
      %v331 = vunpack.c.l.b16 %v190
      %v332 = vunpack.c.l.b16 %v191
      %v333 = vunpack.c.l.b16 %v192
      %v334 = vunpack.c.l.b16 %v193
      %v335 = vunpack.c.l.b16 %v194
      %v336 = vunpack.c.l.b16 %v195
      %v337 = vunpack.c.l.b16 %v196
      %v338 = vunpack.c.l.b16 %v197
      %v339 = vunpack.c.l.b16 %v198
      %v340 = vunpack.c.l.b16 %v199
      %v341 = vunpack.c.l.b16 %v200
      %v342 = vunpack.c.l.b16 %v201
      %v343 = vunpack.c.l.b16 %v202
      %v344 = vunpack.c.l.b16 %v203
      %v345 = vunpack.c.l.b16 %v204
      %v346 = vunpack.c.l.b16 %v205
      %v347 = vunpack.c.l.b16 %v206
      %v348 = vunpack.c.l.b16 %v207
      %v349 = vunpack.c.l.b16 %v208
      %v350 = vunpack.c.l.b16 %v209
      %v351 = vunpack.c.l.b16 %v210
      %v352 = vunpack.c.l.b16 %v211
      %v353 = vunpack.c.l.b16 %v212
      %v354 = vunpack.c.l.b16 %v213
      %v355 = vunpack.c.l.b16 %v214
      %v356 = vunpack.c.l.b16 %v215
      %v357 = vunpack.c.l.b16 %v216
      %v358 = vunpack.c.l.b16 %v217
      %v359 = vunpack.c.l.b16 %v218
      %v360 = vunpack.c.l.b16 %v219
      %v361 = vunpack.c.l.b16 %v220
      %v362 = vunpack.c.l.b16 %v221
      %v363 = vunpack.c.l.b16 %v222
      %v364 = vunpack.c.l.b16 %v223
      %v365 = vunpack.c.l.b16 %v224
      %v366 = vunpack.c.l.b16 %v225
      %v367 = vunpack.c.l.b16 %v226
      %v368 = vunpack.c.l.b16 %v227
      %v369 = vunpack.c.l.b16 %v228
      %v370 = vunpack.c.l.b16 %v229
      %v371 = vunpack.c.l.b16 %v230
      %v372 = vunpack.c.l.b16 %v231
      %v373 = vunpack.c.l.b16 %v232
      %v374 = vunpack.c.l.b16 %v233
      %v375 = vunpack.c.l.b16 %v234
      %v376 = vunpack.c.l.b16 %v235
      %v377 = vunpack.c.l.b16 %v236
      %v378 = vunpack.c.l.b16 %v237
      %v379 = vunpack.c.l.b16 %v238
      %v380 = vpack.c.b16 %v317, %v316
      %v381 = vpack.c.b16 %v319, %v318
      %v382 = vpack.c.b16 %v321, %v320
      %v383 = vpack.c.b16 %v323, %v322
      %v384 = vpack.c.b16 %v325, %v324
      %v385 = vpack.c.b16 %v327, %v326
      %v386 = vpack.c.b16 %v329, %v328
      %v387 = vpack.c.b16 %v331, %v330
      %v388 = vpack.c.b16 %v333, %v332
      %v389 = vpack.c.b16 %v335, %v334
      %v390 = vpack.c.b16 %v337, %v336
      %v391 = vpack.c.b16 %v339, %v338
      %v392 = vpack.c.b16 %v341, %v340
      %v393 = vpack.c.b16 %v343, %v342
      %v394 = vpack.c.b16 %v345, %v344
      %v395 = vpack.c.b16 %v347, %v346
      %v396 = vpack.c.b16 %v349, %v348
      %v397 = vpack.c.b16 %v351, %v350
      %v398 = vpack.c.b16 %v353, %v352
      %v399 = vpack.c.b16 %v355, %v354
      %v400 = vpack.c.b16 %v357, %v356
      %v401 = vpack.c.b16 %v359, %v358
      %v402 = vpack.c.b16 %v361, %v360
      %v403 = vpack.c.b16 %v363, %v362
      %v404 = vpack.c.b16 %v365, %v364
      %v405 = vpack.c.b16 %v367, %v366
      %v406 = vpack.c.b16 %v369, %v368
      %v407 = vpack.c.b16 %v371, %v370
      %v408 = vpack.c.b16 %v373, %v372
      %v409 = vpack.c.b16 %v375, %v374
      %v410 = vpack.c.b16 %v377, %v376
      %v411 = vpack.c.b16 %v379, %v378
      %v421 = vunpack.c.l.b16 %v239
      %v422 = vunpack.c.l.b16 %v240
      %v423 = vunpack.c.l.b16 %v241
      %v424 = vunpack.c.l.b16 %v242
      %v425 = vunpack.c.l.b16 %v243
      %v426 = vunpack.c.l.b16 %v244
      %v427 = vunpack.c.l.b16 %v245
      %v428 = vunpack.c.l.b16 %v246
      %v429 = vunpack.c.l.b16 %v247
      %v430 = vpack.c.b16 %v422, %v421
      %v431 = vpack.c.b16 %v424, %v423
      %v432 = vpack.c.b16 %v426, %v425
      %v433 = vpack.c.b16 %v428, %v427
      %v434 = vpack.c.b16 %v429, %v429
      %vm439 = vcmask 588800
      %v441 = vsel %vm439, %v380, 0
      %v444 = vsel %vm439, %v381, 0
      %v447 = vsel %vm439, %v382, 0
      %v450 = vsel %vm439, %v383, 0
      %v453 = vsel %vm439, %v384, 0
      %v456 = vsel %vm439, %v385, 0
      %v459 = vsel %vm439, %v386, 0
      %v462 = vsel %vm439, %v387, 0
      %v465 = vsel %vm439, %v388, 0
      %v468 = vsel %vm439, %v389, 0
      %v471 = vsel %vm439, %v390, 0
      %v474 = vsel %vm439, %v391, 0
      %v477 = vsel %vm439, %v392, 0
      %v480 = vsel %vm439, %v393, 0
      %v483 = vsel %vm439, %v394, 0
      %v486 = vsel %vm439, %v395, 0
      %v489 = vsel %vm439, %v396, 0
      %v492 = vsel %vm439, %v397, 0
      %v495 = vsel %vm439, %v398, 0
      %v498 = vsel %vm439, %v399, 0
      %v501 = vsel %vm439, %v400, 0
      %v504 = vsel %vm439, %v401, 0
      %v507 = vsel %vm439, %v402, 0
      %v510 = vsel %vm439, %v403, 0
      %v513 = vsel %vm439, %v404, 0
      %v516 = vsel %vm439, %v405, 0
      %v519 = vsel %vm439, %v406, 0
      %v522 = vsel %vm439, %v407, 0
      %v525 = vsel %vm439, %v408, 0
      %v528 = vsel %vm439, %v409, 0
      %v531 = vsel %vm439, %v410, 0
      %v534 = vsel %vm439, %v411, 0
      %vm536 = vcmask 1043456
      %v538 = vsel %vm536, %v434, 0
      %540 = vmatpush.bf16.msra.mxu0 0
      %541 = vmatpush.bf16.msra.mxu0 0
      %542 = vmatpush.bf16.msra.mxu0 0
      %543 = vmatpush.bf16.msra.mxu0 %v538
      %544 = vmatpush.bf16.msra.mxu0 %v433
      %545 = vmatpush.bf16.msra.mxu0 %v432
      %546 = vmatpush.bf16.msra.mxu0 %v431
      %547 = vmatpush.bf16.msra.mxu0 %v430
      %548 = vmatmul.bf16.gmra.mxu0 %v441
      %v549 = vpop.f32.mrf.mxu0
      %v550 = vadd.f32 %v250, %v549
      %v551 = vpop.f32.mrf.mxu0
      %v552 = vadd.f32 %v250, %v551
      %553 = vmatmul.bf16.gmra.mxu0 %v444
      %v554 = vpop.f32.mrf.mxu0
      %v555 = vadd.f32 %v250, %v554
      %v556 = vpop.f32.mrf.mxu0
      %v557 = vadd.f32 %v250, %v556
      %558 = vmatmul.bf16.gmra.mxu0 %v447
      %v559 = vpop.f32.mrf.mxu0
      %v560 = vadd.f32 %v250, %v559
      %v561 = vpop.f32.mrf.mxu0
      %v562 = vadd.f32 %v250, %v561
      %563 = vmatmul.bf16.gmra.mxu0 %v450
      %v564 = vpop.f32.mrf.mxu0
      %v565 = vadd.f32 %v250, %v564
      %v566 = vpop.f32.mrf.mxu0
      %v567 = vadd.f32 %v250, %v566
      %568 = vmatmul.bf16.gmra.mxu0 %v453
      %v569 = vpop.f32.mrf.mxu0
      %v570 = vadd.f32 %v250, %v569
      %v571 = vpop.f32.mrf.mxu0
      %v572 = vadd.f32 %v250, %v571
      %573 = vmatmul.bf16.gmra.mxu0 %v456
      %v574 = vpop.f32.mrf.mxu0
      %v575 = vadd.f32 %v250, %v574
      %v576 = vpop.f32.mrf.mxu0
      %v577 = vadd.f32 %v250, %v576
      %578 = vmatmul.bf16.gmra.mxu0 %v459
      %v579 = vpop.f32.mrf.mxu0
      %v580 = vadd.f32 %v250, %v579
      %v581 = vpop.f32.mrf.mxu0
      %v582 = vadd.f32 %v250, %v581
      %583 = vmatmul.bf16.gmra.mxu0 %v462
      %v584 = vpop.f32.mrf.mxu0
      %v585 = vadd.f32 %v250, %v584
      %v586 = vpop.f32.mrf.mxu0
      %v587 = vadd.f32 %v250, %v586
      %588 = vmatmul.bf16.gmra.mxu0 %v465
      %v589 = vpop.f32.mrf.mxu0
      %v590 = vadd.f32 %v250, %v589
      %v591 = vpop.f32.mrf.mxu0
      %v592 = vadd.f32 %v250, %v591
      %593 = vmatmul.bf16.gmra.mxu0 %v468
      %v594 = vpop.f32.mrf.mxu0
      %v595 = vadd.f32 %v250, %v594
      %v596 = vpop.f32.mrf.mxu0
      %v597 = vadd.f32 %v250, %v596
      %598 = vmatmul.bf16.gmra.mxu0 %v471
      %v599 = vpop.f32.mrf.mxu0
      %v600 = vadd.f32 %v250, %v599
      %v601 = vpop.f32.mrf.mxu0
      %v602 = vadd.f32 %v250, %v601
      %603 = vmatmul.bf16.gmra.mxu0 %v474
      %v604 = vpop.f32.mrf.mxu0
      %v605 = vadd.f32 %v250, %v604
      %v606 = vpop.f32.mrf.mxu0
      %v607 = vadd.f32 %v250, %v606
      %608 = vmatmul.bf16.gmra.mxu0 %v477
      %v609 = vpop.f32.mrf.mxu0
      %v610 = vadd.f32 %v250, %v609
      %v611 = vpop.f32.mrf.mxu0
      %v612 = vadd.f32 %v250, %v611
      %613 = vmatmul.bf16.gmra.mxu0 %v480
      %v614 = vpop.f32.mrf.mxu0
      %v615 = vadd.f32 %v250, %v614
      %v616 = vpop.f32.mrf.mxu0
      %v617 = vadd.f32 %v250, %v616
      %618 = vmatmul.bf16.gmra.mxu0 %v483
      %v619 = vpop.f32.mrf.mxu0
      %v620 = vadd.f32 %v250, %v619
      %v621 = vpop.f32.mrf.mxu0
      %v622 = vadd.f32 %v250, %v621
      %623 = vmatmul.bf16.gmra.mxu0 %v486
      %v624 = vpop.f32.mrf.mxu0
      %v625 = vadd.f32 %v250, %v624
      %v626 = vpop.f32.mrf.mxu0
      %v627 = vadd.f32 %v250, %v626
      %628 = vmatmul.bf16.gmra.mxu0 %v489
      %v629 = vpop.f32.mrf.mxu0
      %v630 = vadd.f32 %v250, %v629
      %v631 = vpop.f32.mrf.mxu0
      %v632 = vadd.f32 %v250, %v631
      %633 = vmatmul.bf16.gmra.mxu0 %v492
      %v634 = vpop.f32.mrf.mxu0
      %v635 = vadd.f32 %v250, %v634
      %v636 = vpop.f32.mrf.mxu0
      %v637 = vadd.f32 %v250, %v636
      %638 = vmatmul.bf16.gmra.mxu0 %v495
      %v639 = vpop.f32.mrf.mxu0
      %v640 = vadd.f32 %v250, %v639
      %v641 = vpop.f32.mrf.mxu0
      %v642 = vadd.f32 %v250, %v641
      %643 = vmatmul.bf16.gmra.mxu0 %v498
      %v644 = vpop.f32.mrf.mxu0
      %v645 = vadd.f32 %v250, %v644
      %v646 = vpop.f32.mrf.mxu0
      %v647 = vadd.f32 %v250, %v646
      %648 = vmatmul.bf16.gmra.mxu0 %v501
      %v649 = vpop.f32.mrf.mxu0
      %v650 = vadd.f32 %v250, %v649
      %v651 = vpop.f32.mrf.mxu0
      %v652 = vadd.f32 %v250, %v651
      %653 = vmatmul.bf16.gmra.mxu0 %v504
      %v654 = vpop.f32.mrf.mxu0
      %v655 = vadd.f32 %v250, %v654
      %v656 = vpop.f32.mrf.mxu0
      %v657 = vadd.f32 %v250, %v656
      %658 = vmatmul.bf16.gmra.mxu0 %v507
      %v659 = vpop.f32.mrf.mxu0
      %v660 = vadd.f32 %v250, %v659
      %v661 = vpop.f32.mrf.mxu0
      %v662 = vadd.f32 %v250, %v661
      %663 = vmatmul.bf16.gmra.mxu0 %v510
      %v664 = vpop.f32.mrf.mxu0
      %v665 = vadd.f32 %v250, %v664
      %v666 = vpop.f32.mrf.mxu0
      %v667 = vadd.f32 %v250, %v666
      %668 = vmatmul.bf16.gmra.mxu0 %v513
      %v669 = vpop.f32.mrf.mxu0
      %v670 = vadd.f32 %v250, %v669
      %v671 = vpop.f32.mrf.mxu0
      %v672 = vadd.f32 %v250, %v671
      %673 = vmatmul.bf16.gmra.mxu0 %v516
      %v674 = vpop.f32.mrf.mxu0
      %v675 = vadd.f32 %v250, %v674
      %v676 = vpop.f32.mrf.mxu0
      %v677 = vadd.f32 %v250, %v676
      %678 = vmatmul.bf16.gmra.mxu0 %v519
      %v679 = vpop.f32.mrf.mxu0
      %v680 = vadd.f32 %v250, %v679
      %v681 = vpop.f32.mrf.mxu0
      %v682 = vadd.f32 %v250, %v681
      %683 = vmatmul.bf16.gmra.mxu0 %v522
      %v684 = vpop.f32.mrf.mxu0
      %v685 = vadd.f32 %v250, %v684
      %v686 = vpop.f32.mrf.mxu0
      %v687 = vadd.f32 %v250, %v686
      %688 = vmatmul.bf16.gmra.mxu0 %v525
      %v689 = vpop.f32.mrf.mxu0
      %v690 = vadd.f32 %v250, %v689
      %v691 = vpop.f32.mrf.mxu0
      %v692 = vadd.f32 %v250, %v691
      %693 = vmatmul.bf16.gmra.mxu0 %v528
      %v694 = vpop.f32.mrf.mxu0
      %v695 = vadd.f32 %v250, %v694
      %v696 = vpop.f32.mrf.mxu0
      %v697 = vadd.f32 %v250, %v696
      %698 = vmatmul.bf16.gmra.mxu0 %v531
      %v699 = vpop.f32.mrf.mxu0
      %v700 = vadd.f32 %v250, %v699
      %v701 = vpop.f32.mrf.mxu0
      %v702 = vadd.f32 %v250, %v701
      %703 = vmatmul.bf16.gmra.mxu0 %v534
      %v704 = vpop.f32.mrf.mxu0
      %v705 = vadd.f32 %v250, %v704
      %v706 = vpop.f32.mrf.mxu0
      %v707 = vadd.f32 %v250, %v706
      %708 = vdwg.mxu0
      %v709 = vtanh.pop %v550
      %v710 = vtanh.pop %v552
      %v711 = vtanh.pop %v555
      %v712 = vtanh.pop %v557
      %v713 = vtanh.pop %v560
      %v714 = vtanh.pop %v562
      %v715 = vtanh.pop %v565
      %v716 = vtanh.pop %v567
      %v717 = vtanh.pop %v570
      %v718 = vtanh.pop %v572
      %v719 = vtanh.pop %v575
      %v720 = vtanh.pop %v577
      %v721 = vtanh.pop %v580
      %v722 = vtanh.pop %v582
      %v723 = vtanh.pop %v585
      %v724 = vtanh.pop %v587
      %v725 = vtanh.pop %v590
      %v726 = vtanh.pop %v592
      %v727 = vtanh.pop %v595
      %v728 = vtanh.pop %v597
      %v729 = vtanh.pop %v600
      %v730 = vtanh.pop %v602
      %v731 = vtanh.pop %v605
      %v732 = vtanh.pop %v607
      %v733 = vtanh.pop %v610
      %v734 = vtanh.pop %v612
      %v735 = vtanh.pop %v615
      %v736 = vtanh.pop %v617
      %v737 = vtanh.pop %v620
      %v738 = vtanh.pop %v622
      %v739 = vtanh.pop %v625
      %v740 = vtanh.pop %v627
      %v741 = vtanh.pop %v630
      %v742 = vtanh.pop %v632
      %v743 = vtanh.pop %v635
      %v744 = vtanh.pop %v637
      %v745 = vtanh.pop %v640
      %v746 = vtanh.pop %v642
      %v747 = vtanh.pop %v645
      %v748 = vtanh.pop %v647
      %v749 = vtanh.pop %v650
      %v750 = vtanh.pop %v652
      %v751 = vtanh.pop %v655
      %v752 = vtanh.pop %v657
      %v753 = vtanh.pop %v660
      %v754 = vtanh.pop %v662
      %v755 = vtanh.pop %v665
      %v756 = vtanh.pop %v667
      %v757 = vtanh.pop %v670
      %v758 = vtanh.pop %v672
      %v759 = vtanh.pop %v675
      %v760 = vtanh.pop %v677
      %v761 = vtanh.pop %v680
      %v762 = vtanh.pop %v682
      %v763 = vtanh.pop %v685
      %v764 = vtanh.pop %v687
      %v765 = vtanh.pop %v690
      %v766 = vtanh.pop %v692
      %v767 = vtanh.pop %v695
      %v768 = vtanh.pop %v697
      %v769 = vtanh.pop %v700
      %v770 = vtanh.pop %v702
      %v771 = vtanh.pop %v705
      %v772 = vtanh.pop %v707
      %773 = vst [vmem:[%s172] sm:$0xff] %v709
      %774 = vst [vmem:[%s172 + $0x8] sm:$0xff] %v710
      %775 = vst [vmem:[%s172 + $0x10] sm:$0xff] %v711
      %776 = vst [vmem:[%s172 + $0x18] sm:$0xff] %v712
      %777 = vst [vmem:[%s172 + $0x20] sm:$0xff] %v713
      %778 = vst [vmem:[%s172 + $0x28] sm:$0xff] %v714
      %779 = vst [vmem:[%s172 + $0x30] sm:$0xff] %v715
      %780 = vst [vmem:[%s172 + $0x38] sm:$0xff] %v716
      %781 = vst [vmem:[%s172 + $0x40] sm:$0xff] %v717
      %782 = vst [vmem:[%s172 + $0x48] sm:$0xff] %v718
      %783 = vst [vmem:[%s172 + $0x50] sm:$0xff] %v719
      %784 = vst [vmem:[%s172 + $0x58] sm:$0xff] %v720
      %785 = vst [vmem:[%s172 + $0x60] sm:$0xff] %v721
      %786 = vst [vmem:[%s172 + $0x68] sm:$0xff] %v722
      %787 = vst [vmem:[%s172 + $0x70] sm:$0xff] %v723
      %788 = vst [vmem:[%s172 + $0x78] sm:$0xff] %v724
      %789 = vst [vmem:[%s172 + $0x80] sm:$0xff] %v725
      %790 = vst [vmem:[%s172 + $0x88] sm:$0xff] %v726
      %791 = vst [vmem:[%s172 + $0x90] sm:$0xff] %v727
      %792 = vst [vmem:[%s172 + $0x98] sm:$0xff] %v728
      %793 = vst [vmem:[%s172 + $0xa0] sm:$0xff] %v729
      %794 = vst [vmem:[%s172 + $0xa8] sm:$0xff] %v730
      %795 = vst [vmem:[%s172 + $0xb0] sm:$0xff] %v731
      %796 = vst [vmem:[%s172 + $0xb8] sm:$0xff] %v732
      %797 = vst [vmem:[%s172 + $0xc0] sm:$0xff] %v733
      %798 = vst [vmem:[%s172 + $0xc8] sm:$0xff] %v734
      %799 = vst [vmem:[%s172 + $0xd0] sm:$0xff] %v735
      %800 = vst [vmem:[%s172 + $0xd8] sm:$0xff] %v736
      %801 = vst [vmem:[%s172 + $0xe0] sm:$0xff] %v737
      %802 = vst [vmem:[%s172 + $0xe8] sm:$0xff] %v738
      %803 = vst [vmem:[%s172 + $0xf0] sm:$0xff] %v739
      %804 = vst [vmem:[%s172 + $0xf8] sm:$0xff] %v740
      %805 = vst [vmem:[%s172 + $0x100] sm:$0xff] %v741
      %806 = vst [vmem:[%s172 + $0x108] sm:$0xff] %v742
      %807 = vst [vmem:[%s172 + $0x110] sm:$0xff] %v743
      %808 = vst [vmem:[%s172 + $0x118] sm:$0xff] %v744
      %809 = vst [vmem:[%s172 + $0x120] sm:$0xff] %v745
      %810 = vst [vmem:[%s172 + $0x128] sm:$0xff] %v746
      %811 = vst [vmem:[%s172 + $0x130] sm:$0xff] %v747
      %812 = vst [vmem:[%s172 + $0x138] sm:$0xff] %v748
      %813 = vst [vmem:[%s172 + $0x140] sm:$0xff] %v749
      %814 = vst [vmem:[%s172 + $0x148] sm:$0xff] %v750
      %815 = vst [vmem:[%s172 + $0x150] sm:$0xff] %v751
      %816 = vst [vmem:[%s172 + $0x158] sm:$0xff] %v752
      %817 = vst [vmem:[%s172 + $0x160] sm:$0xff] %v753
      %818 = vst [vmem:[%s172 + $0x168] sm:$0xff] %v754
      %819 = vst [vmem:[%s172 + $0x170] sm:$0xff] %v755
      %820 = vst [vmem:[%s172 + $0x178] sm:$0xff] %v756
      %821 = vst [vmem:[%s172 + $0x180] sm:$0xff] %v757
      %822 = vst [vmem:[%s172 + $0x188] sm:$0xff] %v758
      %823 = vst [vmem:[%s172 + $0x190] sm:$0xff] %v759
      %824 = vst [vmem:[%s172 + $0x198] sm:$0xff] %v760
      %825 = vst [vmem:[%s172 + $0x1a0] sm:$0xff] %v761
      %826 = vst [vmem:[%s172 + $0x1a8] sm:$0xff] %v762
      %827 = vst [vmem:[%s172 + $0x1b0] sm:$0xff] %v763
      %828 = vst [vmem:[%s172 + $0x1b8] sm:$0xff] %v764
      %829 = vst [vmem:[%s172 + $0x1c0] sm:$0xff] %v765
      %830 = vst [vmem:[%s172 + $0x1c8] sm:$0xff] %v766
      %831 = vst [vmem:[%s172 + $0x1d0] sm:$0xff] %v767
      %832 = vst [vmem:[%s172 + $0x1d8] sm:$0xff] %v768
      %833 = vst [vmem:[%s172 + $0x1e0] sm:$0xff] %v769
      %834 = vst [vmem:[%s172 + $0x1e8] sm:$0xff] %v770
      %835 = vst [vmem:[%s172 + $0x1f0] sm:$0xff] %v771
      %836 = vst [vmem:[%s172 + $0x1f8] sm:$0xff] %v772
      %s837 = smul.u32 64, %s14
      %p838 = scmp.lt.s32.totalorder %s837, 255
      %s839 = scalar_select %p838, %s837, 255
      %s840 = smul.addr %s839, 8
      %s841 = scalar_lea.vmem %s3, %s840
      // Predicated region
      $region33: #{_lambda_.15} parent=31 // pred_check
        %p842 = pneg %p100
      $region34: #{_lambda_.15} parent=31 // pred_check_branch
        %844 = sbr.rel (%p842) target = $region36
      $region35: #{_lambda_.15} parent=31 // pred_region
        %s845 = smul.u32 64, %s14
      $region36: #{_lambda_.15} parent=31 // pred_fallthru
        _
    $region32: #{_lambda_.15} parent=5 // pred_fallthru
      _
    %p846 = scmp.le.s32.totalorder 2, %s9
    // Predicated region
    $region37: #{_lambda_.15} parent=5 // pred_check
      %p847 = pneg %p846
    $region38: #{_lambda_.15} parent=5 // pred_check_branch
      %849 = sbr.rel (%p847) target = $region40
    $region39: #{_lambda_.15} parent=5 // pred_region
      %s850 = ssub.s32 %s9, 2
      // Predicated region
      $region41: #{_lambda_.15} parent=39 // pred_check
        %p851 = pneg %p106
      $region42: #{_lambda_.15} parent=39 // pred_check_branch
        %853 = sbr.rel (%p851) target = $region44
      $region43: #{_lambda_.15} parent=39 // pred_region
        %s854 = smul.u32 64, %s15
        %p855 = scmp.lt.s32.totalorder %s854, 255
        %s856 = scalar_select %p855, %s854, 255
        %s857 = smul.addr %s856, 8
        %s858 = scalar_lea.vmem %s3, %s857
      $region44: #{_lambda_.15} parent=39 // pred_fallthru
        _
    $region40: #{_lambda_.15} parent=5 // pred_fallthru
      _
  $region6: #{_lambda_.15} parent=0 // loop_footer
    %s13 = sadd.s32 1, %s9
  $region7: #{_lambda_.15} parent=0 // loop_footer_branch
    %8 = sbr.rel target = $region3
  $region8: #{_lambda_.15} parent=0 // loop_exit
    _

</llo_original>
